<compile_context>
chip_gen: v7x
topology: tpu7x:2x2x1
jax: 0.10.0
libtpu: 0.0.40
codegen_flags: <defaults>
</compile_context>

<pallas_src>
import functools

import numpy as np
import jax
import jax.numpy as jnp
from jax.experimental import pallas as pl
from jax.experimental.pallas import tpu as pltpu

LEAKY_SLOPE = 0.01  # nn.LeakyReLU default negative_slope


def _pick_batch_tile(batch, target=8):
    """Largest divisor of `batch` <= target that still leaves >= 2 grid steps
    (so both TensorCores get work on v7x).  Falls back to 1."""
    best = 1
    for cand in range(1, min(batch, target) + 1):
        if batch % cand == 0 and (batch // cand >= 2 or batch < 2):
            best = cand
    return best


# ----------------------------------------------------------------------------
# Kernel: whole decoder for `bt` images per grid step
# ----------------------------------------------------------------------------
def _decoder_kernel(*refs, layer_cfgs, bt):
    """refs = (x_ref, w0, b0, w1, b1, ..., out_ref, pad0, ..., padL-1)."""
    n_layers = len(layer_cfgs)
    x_ref = refs[0]
    out_ref = refs[1 + 2 * n_layers]
    pad_refs = refs[2 + 2 * n_layers:]

    act = x_ref[...]  # (bt, H, W, Cin) float32, stays in VMEM/vregs

    for li, (h, w, cin, cout, stride, leaky) in enumerate(layer_cfgs):
        w_ref = refs[1 + 2 * li]   # (9*cin, cout) bf16, VMEM-resident
        b_ref = refs[2 + 2 * li]   # (1, cout)     f32,  VMEM-resident
        pad = pad_refs[li]         # (bt, h+2, w+2, cin) f32 scratch

        # conv padding=1: zero the 1-px border, write the activation interior.
        pad[:, 0:1, :, :] = jnp.zeros((bt, 1, w + 2, cin), jnp.float32)
        pad[:, h + 1:h + 2, :, :] = jnp.zeros((bt, 1, w + 2, cin), jnp.float32)
        pad[:, :, 0:1, :] = jnp.zeros((bt, h + 2, 1, cin), jnp.float32)
        pad[:, :, w + 1:w + 2, :] = jnp.zeros((bt, h + 2, 1, cin), jnp.float32)
        pad[:, 1:h + 1, 1:w + 1, :] = act

        oh = (h - 1) // stride + 1
        ow = (w - 1) // stride + 1

        # im2col by shifted (and stride-subsampled) reads of the padded
        # scratch -- no selector matrices, no gather matmuls.  The 9 taps are
        # concatenated along channels so the layer is one fused K=9*cin dot.
        taps = []
        for kh in range(3):
            for kw in range(3):
                if stride == 1:
                    taps.append(pad[:, kh:kh + oh, kw:kw + ow, :])
                else:
                    taps.append(pad[:, pl.ds(kh, oh, stride=stride),
                                    pl.ds(kw, ow, stride=stride), :])
        patches = jnp.concatenate(taps, axis=-1)                # (bt, oh, ow, 9*cin)
        patches = patches.reshape(bt * oh * ow, 9 * cin).astype(jnp.bfloat16)

        acc = jnp.dot(patches, w_ref[...],
                      preferred_element_type=jnp.float32)        # (M, cout) f32
        acc = acc + b_ref[...]
        if leaky:
            acc = jnp.where(acc >= 0.0, acc, LEAKY_SLOPE * acc)

        if li + 1 < n_layers:
            act = acc.reshape(bt, oh, ow, cout)   # feed next layer (VMEM only)
        else:
            out_ref[0] = acc                      # (bt*oh*ow, 1); final cout == 1


# ----------------------------------------------------------------------------
# Wrapper: single pallas_call for the whole decoder
# ----------------------------------------------------------------------------
def decoder_forward(params, message_image_nchw, *, batch_tile=8):
    """params: list of (w_hwio (3,3,cin,cout) f32, b (cout,) f32, stride, leaky)."""
    x = jnp.transpose(message_image_nchw, (0, 2, 3, 1)).astype(jnp.float32)  # NHWC
    B, H, W, Cin = x.shape
    bt = _pick_batch_tile(B, batch_tile)
    n_steps = B // bt

    layer_cfgs = []
    flat_params = []
    in_specs = [pl.BlockSpec((bt, H, W, Cin), lambda i: (i, 0, 0, 0))]
    scratch_shapes = []
    h, w, cin = H, W, Cin
    for wt, bias, stride, leaky in params:
        cout = wt.shape[-1]
        layer_cfgs.append((h, w, cin, cout, stride, leaky))
        # HWIO (3,3,cin,cout) -> (9*cin, cout): row (kh*3+kw)*cin + ci matches
        # the in-kernel tap/channel concatenation order.
        flat_params.append(wt.reshape(9 * cin, cout).astype(jnp.bfloat16))
        flat_params.append(bias.reshape(1, cout).astype(jnp.float32))
        in_specs.append(pl.BlockSpec((9 * cin, cout), lambda i: (0, 0)))
        in_specs.append(pl.BlockSpec((1, cout), lambda i: (0, 0)))
        scratch_shapes.append(pltpu.VMEM((bt, h + 2, w + 2, cin), jnp.float32))
        h = (h - 1) // stride + 1
        w = (w - 1) // stride + 1
        cin = cout
    msg = h * w  # final cout == 1 -> message_length

    kernel = functools.partial(_decoder_kernel,
                               layer_cfgs=tuple(layer_cfgs), bt=bt)

    out = pl.pallas_call(
        kernel,
        out_shape=jax.ShapeDtypeStruct((n_steps, bt * msg, 1), jnp.float32),
        grid_spec=pltpu.PrefetchScalarGridSpec(
            num_scalar_prefetch=0,
            grid=(n_steps,),
            in_specs=in_specs,
            out_specs=pl.BlockSpec((1, bt * msg, 1), lambda i: (i, 0, 0)),
            scratch_shapes=scratch_shapes,
        ),
        compiler_params=pltpu.CompilerParams(
            dimension_semantics=("parallel",),
        ),
    )(x, *flat_params)

    # final channel count == 1, so this equals torch's NCHW .view(B, -1)
    return out.reshape(B, msg)


# ----------------------------------------------------------------------------
# Plain-JAX reference (for correctness check) and parameter init
# ----------------------------------------------------------------------------
def decoder_reference(params, message_image_nchw):
    x = jnp.transpose(message_image_nchw, (0, 2, 3, 1))
    for wt, bias, stride, leaky in params:
        x = jax.lax.conv_general_dilated(
            x, wt, window_strides=(stride, stride), padding=((1, 1), (1, 1)),
            dimension_numbers=("NHWC", "HWIO", "NHWC"))
        x = x + bias.reshape(1, 1, 1, -1)
        if leaky:
            x = jnp.where(x >= 0.0, x, LEAKY_SLOPE * x)
    B = x.shape[0]
    return jnp.transpose(x, (0, 3, 1, 2)).reshape(B, -1)


def init_decoder_params(key, latent_channels, channels, stride_blocks):
    # nn.Conv2d default init: U(-1/sqrt(fan_in), 1/sqrt(fan_in)) for w and b.
    # (init_zero=True in the reference only removes the LeakyReLU.)
    cfgs = [(latent_channels, channels, 1, True)]
    for _ in range(stride_blocks):
        cfgs.append((channels, channels, 2, True))
    cfgs.append((channels, 1, 1, False))

    params = []
    for cin, cout, stride, leaky in cfgs:
        key, k_w, k_b = jax.random.split(key, 3)
        limit = 1.0 / float(np.sqrt(9 * cin))
        wt = jax.random.uniform(k_w, (3, 3, cin, cout), jnp.float32, -limit, limit)
        b = jax.random.uniform(k_b, (cout,), jnp.float32, -limit, limit)
        params.append((wt, b, stride, leaky))
    return params


if __name__ == "__main__":
    # Small shapes consistent with the module: H=16, message_length=16
    # -> stride_blocks = log2(16 / 4) = 2, final map (B, 1, 4, 4) -> (B, 16).
    H = 16
    message_length = 16
    latent_channels = 4
    channels = 8
    batch = 2
    stride_blocks = int(np.log2(H // int(np.sqrt(message_length))))  # == 2

    key = jax.random.PRNGKey(0)
    k_x, k_p = jax.random.split(key)
    message_image = jax.random.normal(
        k_x, (batch, latent_channels, H, H), jnp.float32)
    params = init_decoder_params(k_p, latent_channels, channels, stride_blocks)

    out = decoder_forward(params, message_image)
    out = jax.block_until_ready(out)
    assert out.shape == (batch, message_length), out.shape
    assert bool(jnp.all(jnp.isfinite(out)))

    # Correctness vs pure-JAX reference (bf16 MXU inputs -> loose tolerance).
    ref = decoder_reference(params, message_image)
    err = float(jnp.max(jnp.abs(out - ref)))
    assert np.isfinite(err) and err < 5e-2, f"max abs err {err}"

    print("KERNEL_OK")
</pallas_src>

<mosaic_0001>
module attributes {stable_mosaic.version = 11 : i64} {
  func.func @_decoder_kernel(%arg0: i32, %arg1: memref<1x16x16x4xf32, #tpu.memory_space<vmem>>, %arg2: memref<36x8xbf16, #tpu.memory_space<vmem>>, %arg3: memref<1x8xf32, #tpu.memory_space<vmem>>, %arg4: memref<72x8xbf16, #tpu.memory_space<vmem>>, %arg5: memref<1x8xf32, #tpu.memory_space<vmem>>, %arg6: memref<72x8xbf16, #tpu.memory_space<vmem>>, %arg7: memref<1x8xf32, #tpu.memory_space<vmem>>, %arg8: memref<72x1xbf16, #tpu.memory_space<vmem>>, %arg9: memref<1x1xf32, #tpu.memory_space<vmem>>, %arg10: memref<1x16x1xf32, #tpu.memory_space<vmem>>, %arg11: memref<1x18x18x4xf32, #tpu.memory_space<vmem>>, %arg12: memref<1x18x18x8xf32, #tpu.memory_space<vmem>>, %arg13: memref<1x10x10x8xf32, #tpu.memory_space<vmem>>, %arg14: memref<1x6x6x8xf32, #tpu.memory_space<vmem>>) attributes {dimension_semantics = [#tpu.dimension_semantics<parallel>], iteration_bounds = array<i64: 2>, scalar_prefetch = 0 : i64, scratch_operands = 4 : i64, tpu.core_type = #tpu.core_type<tc>, window_params = [{transform_indices = @transform_0, window_bounds = array<i64: 1, 16, 16, 4>}, {pipeline_mode = #tpu.pipeline_mode<synchronous>, transform_indices = @transform_1, window_bounds = array<i64: 36, 8>}, {pipeline_mode = #tpu.pipeline_mode<synchronous>, transform_indices = @transform_2, window_bounds = array<i64: 1, 8>}, {pipeline_mode = #tpu.pipeline_mode<synchronous>, transform_indices = @transform_3, window_bounds = array<i64: 72, 8>}, {pipeline_mode = #tpu.pipeline_mode<synchronous>, transform_indices = @transform_4, window_bounds = array<i64: 1, 8>}, {pipeline_mode = #tpu.pipeline_mode<synchronous>, transform_indices = @transform_5, window_bounds = array<i64: 72, 8>}, {pipeline_mode = #tpu.pipeline_mode<synchronous>, transform_indices = @transform_6, window_bounds = array<i64: 1, 8>}, {pipeline_mode = #tpu.pipeline_mode<synchronous>, transform_indices = @transform_7, window_bounds = array<i64: 72, 1>}, {pipeline_mode = #tpu.pipeline_mode<synchronous>, transform_indices = @transform_8, window_bounds = array<i64: 1, 1>}, {transform_indices = @transform_9, window_bounds = array<i64: 1, 16, 1>}]} {
    %c0 = arith.constant 0 : index
    %c0_0 = arith.constant 0 : index
    %c0_1 = arith.constant 0 : index
    %c0_2 = arith.constant 0 : index
    %0 = vector.load %arg1[%c0, %c0_0, %c0_1, %c0_2] : memref<1x16x16x4xf32, #tpu.memory_space<vmem>>, vector<1x16x16x4xf32>
    %cst = arith.constant 0.000000e+00 : f32
    %1 = vector.broadcast %cst : f32 to vector<1x1x18x4xf32>
    %c0_3 = arith.constant 0 : index
    %c0_4 = arith.constant 0 : index
    %c0_5 = arith.constant 0 : index
    %c0_6 = arith.constant 0 : index
    %2 = vector.load %arg11[%c0_3, %c0_4, %c0_5, %c0_6] : memref<1x18x18x4xf32, #tpu.memory_space<vmem>>, vector<1x1x18x4xf32>
    tpu.vector_store %arg11[%c0_3, %c0_4, %c0_5, %c0_6], %1 {strides = array<i32>} : memref<1x18x18x4xf32, #tpu.memory_space<vmem>>, vector<1x1x18x4xf32>,
    %cst_7 = arith.constant 0.000000e+00 : f32
    %3 = vector.broadcast %cst_7 : f32 to vector<1x1x18x4xf32>
    %c0_8 = arith.constant 0 : index
    %c17 = arith.constant 17 : index
    %c0_9 = arith.constant 0 : index
    %c0_10 = arith.constant 0 : index
    %4 = vector.load %arg11[%c0_8, %c17, %c0_9, %c0_10] : memref<1x18x18x4xf32, #tpu.memory_space<vmem>>, vector<1x1x18x4xf32>
    tpu.vector_store %arg11[%c0_8, %c17, %c0_9, %c0_10], %3 {strides = array<i32>} : memref<1x18x18x4xf32, #tpu.memory_space<vmem>>, vector<1x1x18x4xf32>,
    %cst_11 = arith.constant 0.000000e+00 : f32
    %5 = vector.broadcast %cst_11 : f32 to vector<1x18x1x4xf32>
    %c0_12 = arith.constant 0 : index
    %c0_13 = arith.constant 0 : index
    %c0_14 = arith.constant 0 : index
    %c0_15 = arith.constant 0 : index
    %6 = vector.load %arg11[%c0_12, %c0_13, %c0_14, %c0_15] : memref<1x18x18x4xf32, #tpu.memory_space<vmem>>, vector<1x18x1x4xf32>
    tpu.vector_store %arg11[%c0_12, %c0_13, %c0_14, %c0_15], %5 {strides = array<i32>} : memref<1x18x18x4xf32, #tpu.memory_space<vmem>>, vector<1x18x1x4xf32>,
    %cst_16 = arith.constant 0.000000e+00 : f32
    %7 = vector.broadcast %cst_16 : f32 to vector<1x18x1x4xf32>
    %c0_17 = arith.constant 0 : index
    %c0_18 = arith.constant 0 : index
    %c17_19 = arith.constant 17 : index
    %c0_20 = arith.constant 0 : index
    %8 = vector.load %arg11[%c0_17, %c0_18, %c17_19, %c0_20] : memref<1x18x18x4xf32, #tpu.memory_space<vmem>>, vector<1x18x1x4xf32>
    tpu.vector_store %arg11[%c0_17, %c0_18, %c17_19, %c0_20], %7 {strides = array<i32>} : memref<1x18x18x4xf32, #tpu.memory_space<vmem>>, vector<1x18x1x4xf32>,
    %c0_21 = arith.constant 0 : index
    %c1 = arith.constant 1 : index
    %c1_22 = arith.constant 1 : index
    %c0_23 = arith.constant 0 : index
    %9 = vector.load %arg11[%c0_21, %c1, %c1_22, %c0_23] : memref<1x18x18x4xf32, #tpu.memory_space<vmem>>, vector<1x16x16x4xf32>
    tpu.vector_store %arg11[%c0_21, %c1, %c1_22, %c0_23], %0 {strides = array<i32>} : memref<1x18x18x4xf32, #tpu.memory_space<vmem>>, vector<1x16x16x4xf32>,
    %c0_24 = arith.constant 0 : index
    %c0_25 = arith.constant 0 : index
    %c0_26 = arith.constant 0 : index
    %c0_27 = arith.constant 0 : index
    %10 = vector.load %arg11[%c0_24, %c0_25, %c0_26, %c0_27] : memref<1x18x18x4xf32, #tpu.memory_space<vmem>>, vector<1x16x16x4xf32>
    %c0_28 = arith.constant 0 : index
    %c0_29 = arith.constant 0 : index
    %c1_30 = arith.constant 1 : index
    %c0_31 = arith.constant 0 : index
    %11 = vector.load %arg11[%c0_28, %c0_29, %c1_30, %c0_31] : memref<1x18x18x4xf32, #tpu.memory_space<vmem>>, vector<1x16x16x4xf32>
    %c0_32 = arith.constant 0 : index
    %c0_33 = arith.constant 0 : index
    %c2 = arith.constant 2 : index
    %c0_34 = arith.constant 0 : index
    %12 = vector.load %arg11[%c0_32, %c0_33, %c2, %c0_34] : memref<1x18x18x4xf32, #tpu.memory_space<vmem>>, vector<1x16x16x4xf32>
    %c0_35 = arith.constant 0 : index
    %c1_36 = arith.constant 1 : index
    %c0_37 = arith.constant 0 : index
    %c0_38 = arith.constant 0 : index
    %13 = vector.load %arg11[%c0_35, %c1_36, %c0_37, %c0_38] : memref<1x18x18x4xf32, #tpu.memory_space<vmem>>, vector<1x16x16x4xf32>
    %c0_39 = arith.constant 0 : index
    %c1_40 = arith.constant 1 : index
    %c1_41 = arith.constant 1 : index
    %c0_42 = arith.constant 0 : index
    %14 = vector.load %arg11[%c0_39, %c1_40, %c1_41, %c0_42] : memref<1x18x18x4xf32, #tpu.memory_space<vmem>>, vector<1x16x16x4xf32>
    %c0_43 = arith.constant 0 : index
    %c1_44 = arith.constant 1 : index
    %c2_45 = arith.constant 2 : index
    %c0_46 = arith.constant 0 : index
    %15 = vector.load %arg11[%c0_43, %c1_44, %c2_45, %c0_46] : memref<1x18x18x4xf32, #tpu.memory_space<vmem>>, vector<1x16x16x4xf32>
    %c0_47 = arith.constant 0 : index
    %c2_48 = arith.constant 2 : index
    %c0_49 = arith.constant 0 : index
    %c0_50 = arith.constant 0 : index
    %16 = vector.load %arg11[%c0_47, %c2_48, %c0_49, %c0_50] : memref<1x18x18x4xf32, #tpu.memory_space<vmem>>, vector<1x16x16x4xf32>
    %c0_51 = arith.constant 0 : index
    %c2_52 = arith.constant 2 : index
    %c1_53 = arith.constant 1 : index
    %c0_54 = arith.constant 0 : index
    %17 = vector.load %arg11[%c0_51, %c2_52, %c1_53, %c0_54] : memref<1x18x18x4xf32, #tpu.memory_space<vmem>>, vector<1x16x16x4xf32>
    %c0_55 = arith.constant 0 : index
    %c2_56 = arith.constant 2 : index
    %c2_57 = arith.constant 2 : index
    %c0_58 = arith.constant 0 : index
    %18 = vector.load %arg11[%c0_55, %c2_56, %c2_57, %c0_58] : memref<1x18x18x4xf32, #tpu.memory_space<vmem>>, vector<1x16x16x4xf32>
    %19 = tpu.concatenate %10, %11, %12, %13, %14, %15, %16, %17, %18 in 3 : vector<1x16x16x4xf32>, vector<1x16x16x4xf32>, vector<1x16x16x4xf32>, vector<1x16x16x4xf32>, vector<1x16x16x4xf32>, vector<1x16x16x4xf32>, vector<1x16x16x4xf32>, vector<1x16x16x4xf32>, vector<1x16x16x4xf32> -> vector<1x16x16x36xf32>
    %20 = vector.shape_cast %19 : vector<1x16x16x36xf32> to vector<256x36xf32>
    %21 = arith.truncf %20 : vector<256x36xf32> to vector<256x36xbf16>
    %c0_59 = arith.constant 0 : index
    %c0_60 = arith.constant 0 : index
    %22 = vector.load %arg2[%c0_59, %c0_60] : memref<36x8xbf16, #tpu.memory_space<vmem>>, vector<36x8xbf16>
    %cst_61 = arith.constant dense<0.000000e+00> : vector<256x8xf32>
    %23 = tpu.matmul %21, %22, %cst_61 {dimension_numbers = #tpu.dot_dimension_numbers<[1], [0], [0], [1], [0, 0, 1, 1], [], []>} : vector<256x36xbf16>, vector<36x8xbf16>, vector<256x8xf32> -> vector<256x8xf32>
    %c0_62 = arith.constant 0 : index
    %c0_63 = arith.constant 0 : index
    %24 = vector.load %arg3[%c0_62, %c0_63] : memref<1x8xf32, #tpu.memory_space<vmem>>, vector<1x8xf32>
    %25 = vector.broadcast %24 : vector<1x8xf32> to vector<256x8xf32>
    %26 = arith.addf %23, %25 : vector<256x8xf32>
    %cst_64 = arith.constant 0.000000e+00 : f32
    %27 = vector.broadcast %cst_64 : f32 to vector<256x8xf32>
    %28 = arith.cmpf oge, %26, %27 : vector<256x8xf32>
    %cst_65 = arith.constant 0.00999999977 : f32
    %29 = vector.broadcast %cst_65 : f32 to vector<256x8xf32>
    %30 = arith.mulf %29, %26 : vector<256x8xf32>
    %31 = arith.select %28, %26, %30 : vector<256x8xi1>, vector<256x8xf32>
    %32 = vector.shape_cast %31 : vector<256x8xf32> to vector<1x16x16x8xf32>
    %cst_66 = arith.constant 0.000000e+00 : f32
    %33 = vector.broadcast %cst_66 : f32 to vector<1x1x18x8xf32>
    %c0_67 = arith.constant 0 : index
    %c0_68 = arith.constant 0 : index
    %c0_69 = arith.constant 0 : index
    %c0_70 = arith.constant 0 : index
    %34 = vector.load %arg12[%c0_67, %c0_68, %c0_69, %c0_70] : memref<1x18x18x8xf32, #tpu.memory_space<vmem>>, vector<1x1x18x8xf32>
    tpu.vector_store %arg12[%c0_67, %c0_68, %c0_69, %c0_70], %33 {strides = array<i32>} : memref<1x18x18x8xf32, #tpu.memory_space<vmem>>, vector<1x1x18x8xf32>,
    %cst_71 = arith.constant 0.000000e+00 : f32
    %35 = vector.broadcast %cst_71 : f32 to vector<1x1x18x8xf32>
    %c0_72 = arith.constant 0 : index
    %c17_73 = arith.constant 17 : index
    %c0_74 = arith.constant 0 : index
    %c0_75 = arith.constant 0 : index
    %36 = vector.load %arg12[%c0_72, %c17_73, %c0_74, %c0_75] : memref<1x18x18x8xf32, #tpu.memory_space<vmem>>, vector<1x1x18x8xf32>
    tpu.vector_store %arg12[%c0_72, %c17_73, %c0_74, %c0_75], %35 {strides = array<i32>} : memref<1x18x18x8xf32, #tpu.memory_space<vmem>>, vector<1x1x18x8xf32>,
    %cst_76 = arith.constant 0.000000e+00 : f32
    %37 = vector.broadcast %cst_76 : f32 to vector<1x18x1x8xf32>
    %c0_77 = arith.constant 0 : index
    %c0_78 = arith.constant 0 : index
    %c0_79 = arith.constant 0 : index
    %c0_80 = arith.constant 0 : index
    %38 = vector.load %arg12[%c0_77, %c0_78, %c0_79, %c0_80] : memref<1x18x18x8xf32, #tpu.memory_space<vmem>>, vector<1x18x1x8xf32>
    tpu.vector_store %arg12[%c0_77, %c0_78, %c0_79, %c0_80], %37 {strides = array<i32>} : memref<1x18x18x8xf32, #tpu.memory_space<vmem>>, vector<1x18x1x8xf32>,
    %cst_81 = arith.constant 0.000000e+00 : f32
    %39 = vector.broadcast %cst_81 : f32 to vector<1x18x1x8xf32>
    %c0_82 = arith.constant 0 : index
    %c0_83 = arith.constant 0 : index
    %c17_84 = arith.constant 17 : index
    %c0_85 = arith.constant 0 : index
    %40 = vector.load %arg12[%c0_82, %c0_83, %c17_84, %c0_85] : memref<1x18x18x8xf32, #tpu.memory_space<vmem>>, vector<1x18x1x8xf32>
    tpu.vector_store %arg12[%c0_82, %c0_83, %c17_84, %c0_85], %39 {strides = array<i32>} : memref<1x18x18x8xf32, #tpu.memory_space<vmem>>, vector<1x18x1x8xf32>,
    %c0_86 = arith.constant 0 : index
    %c1_87 = arith.constant 1 : index
    %c1_88 = arith.constant 1 : index
    %c0_89 = arith.constant 0 : index
    %41 = vector.load %arg12[%c0_86, %c1_87, %c1_88, %c0_89] : memref<1x18x18x8xf32, #tpu.memory_space<vmem>>, vector<1x16x16x8xf32>
    tpu.vector_store %arg12[%c0_86, %c1_87, %c1_88, %c0_89], %32 {strides = array<i32>} : memref<1x18x18x8xf32, #tpu.memory_space<vmem>>, vector<1x16x16x8xf32>,
    %c0_90 = arith.constant 0 : index
    %c0_91 = arith.constant 0 : index
    %c0_92 = arith.constant 0 : index
    %c0_93 = arith.constant 0 : index
    %42 = tpu.strided_load %arg12[%c0_90, %c0_91, %c0_92, %c0_93] {strides = array<i32: 1, 2, 2, 1>} : memref<1x18x18x8xf32, #tpu.memory_space<vmem>>, vector<1x8x8x8xf32>
    %c0_94 = arith.constant 0 : index
    %c0_95 = arith.constant 0 : index
    %c1_96 = arith.constant 1 : index
    %c0_97 = arith.constant 0 : index
    %43 = tpu.strided_load %arg12[%c0_94, %c0_95, %c1_96, %c0_97] {strides = array<i32: 1, 2, 2, 1>} : memref<1x18x18x8xf32, #tpu.memory_space<vmem>>, vector<1x8x8x8xf32>
    %c0_98 = arith.constant 0 : index
    %c0_99 = arith.constant 0 : index
    %c2_100 = arith.constant 2 : index
    %c0_101 = arith.constant 0 : index
    %44 = tpu.strided_load %arg12[%c0_98, %c0_99, %c2_100, %c0_101] {strides = array<i32: 1, 2, 2, 1>} : memref<1x18x18x8xf32, #tpu.memory_space<vmem>>, vector<1x8x8x8xf32>
    %c0_102 = arith.constant 0 : index
    %c1_103 = arith.constant 1 : index
    %c0_104 = arith.constant 0 : index
    %c0_105 = arith.constant 0 : index
    %45 = tpu.strided_load %arg12[%c0_102, %c1_103, %c0_104, %c0_105] {strides = array<i32: 1, 2, 2, 1>} : memref<1x18x18x8xf32, #tpu.memory_space<vmem>>, vector<1x8x8x8xf32>
    %c0_106 = arith.constant 0 : index
    %c1_107 = arith.constant 1 : index
    %c1_108 = arith.constant 1 : index
    %c0_109 = arith.constant 0 : index
    %46 = tpu.strided_load %arg12[%c0_106, %c1_107, %c1_108, %c0_109] {strides = array<i32: 1, 2, 2, 1>} : memref<1x18x18x8xf32, #tpu.memory_space<vmem>>, vector<1x8x8x8xf32>
    %c0_110 = arith.constant 0 : index
    %c1_111 = arith.constant 1 : index
    %c2_112 = arith.constant 2 : index
    %c0_113 = arith.constant 0 : index
    %47 = tpu.strided_load %arg12[%c0_110, %c1_111, %c2_112, %c0_113] {strides = array<i32: 1, 2, 2, 1>} : memref<1x18x18x8xf32, #tpu.memory_space<vmem>>, vector<1x8x8x8xf32>
    %c0_114 = arith.constant 0 : index
    %c2_115 = arith.constant 2 : index
    %c0_116 = arith.constant 0 : index
    %c0_117 = arith.constant 0 : index
    %48 = tpu.strided_load %arg12[%c0_114, %c2_115, %c0_116, %c0_117] {strides = array<i32: 1, 2, 2, 1>} : memref<1x18x18x8xf32, #tpu.memory_space<vmem>>, vector<1x8x8x8xf32>
    %c0_118 = arith.constant 0 : index
    %c2_119 = arith.constant 2 : index
    %c1_120 = arith.constant 1 : index
    %c0_121 = arith.constant 0 : index
    %49 = tpu.strided_load %arg12[%c0_118, %c2_119, %c1_120, %c0_121] {strides = array<i32: 1, 2, 2, 1>} : memref<1x18x18x8xf32, #tpu.memory_space<vmem>>, vector<1x8x8x8xf32>
    %c0_122 = arith.constant 0 : index
    %c2_123 = arith.constant 2 : index
    %c2_124 = arith.constant 2 : index
    %c0_125 = arith.constant 0 : index
    %50 = tpu.strided_load %arg12[%c0_122, %c2_123, %c2_124, %c0_125] {strides = array<i32: 1, 2, 2, 1>} : memref<1x18x18x8xf32, #tpu.memory_space<vmem>>, vector<1x8x8x8xf32>
    %51 = tpu.concatenate %42, %43, %44, %45, %46, %47, %48, %49, %50 in 3 : vector<1x8x8x8xf32>, vector<1x8x8x8xf32>, vector<1x8x8x8xf32>, vector<1x8x8x8xf32>, vector<1x8x8x8xf32>, vector<1x8x8x8xf32>, vector<1x8x8x8xf32>, vector<1x8x8x8xf32>, vector<1x8x8x8xf32> -> vector<1x8x8x72xf32>
    %52 = vector.shape_cast %51 : vector<1x8x8x72xf32> to vector<64x72xf32>
    %53 = arith.truncf %52 : vector<64x72xf32> to vector<64x72xbf16>
    %c0_126 = arith.constant 0 : index
    %c0_127 = arith.constant 0 : index
    %54 = vector.load %arg4[%c0_126, %c0_127] : memref<72x8xbf16, #tpu.memory_space<vmem>>, vector<72x8xbf16>
    %cst_128 = arith.constant dense<0.000000e+00> : vector<64x8xf32>
    %55 = tpu.matmul %53, %54, %cst_128 {dimension_numbers = #tpu.dot_dimension_numbers<[1], [0], [0], [1], [0, 0, 1, 1], [], []>} : vector<64x72xbf16>, vector<72x8xbf16>, vector<64x8xf32> -> vector<64x8xf32>
    %c0_129 = arith.constant 0 : index
    %c0_130 = arith.constant 0 : index
    %56 = vector.load %arg5[%c0_129, %c0_130] : memref<1x8xf32, #tpu.memory_space<vmem>>, vector<1x8xf32>
    %57 = vector.broadcast %56 : vector<1x8xf32> to vector<64x8xf32>
    %58 = arith.addf %55, %57 : vector<64x8xf32>
    %cst_131 = arith.constant 0.000000e+00 : f32
    %59 = vector.broadcast %cst_131 : f32 to vector<64x8xf32>
    %60 = arith.cmpf oge, %58, %59 : vector<64x8xf32>
    %cst_132 = arith.constant 0.00999999977 : f32
    %61 = vector.broadcast %cst_132 : f32 to vector<64x8xf32>
    %62 = arith.mulf %61, %58 : vector<64x8xf32>
    %63 = arith.select %60, %58, %62 : vector<64x8xi1>, vector<64x8xf32>
    %64 = vector.shape_cast %63 : vector<64x8xf32> to vector<1x8x8x8xf32>
    %cst_133 = arith.constant 0.000000e+00 : f32
    %65 = vector.broadcast %cst_133 : f32 to vector<1x1x10x8xf32>
    %c0_134 = arith.constant 0 : index
    %c0_135 = arith.constant 0 : index
    %c0_136 = arith.constant 0 : index
    %c0_137 = arith.constant 0 : index
    %66 = vector.load %arg13[%c0_134, %c0_135, %c0_136, %c0_137] : memref<1x10x10x8xf32, #tpu.memory_space<vmem>>, vector<1x1x10x8xf32>
    tpu.vector_store %arg13[%c0_134, %c0_135, %c0_136, %c0_137], %65 {strides = array<i32>} : memref<1x10x10x8xf32, #tpu.memory_space<vmem>>, vector<1x1x10x8xf32>,
    %cst_138 = arith.constant 0.000000e+00 : f32
    %67 = vector.broadcast %cst_138 : f32 to vector<1x1x10x8xf32>
    %c0_139 = arith.constant 0 : index
    %c9 = arith.constant 9 : index
    %c0_140 = arith.constant 0 : index
    %c0_141 = arith.constant 0 : index
    %68 = vector.load %arg13[%c0_139, %c9, %c0_140, %c0_141] : memref<1x10x10x8xf32, #tpu.memory_space<vmem>>, vector<1x1x10x8xf32>
    tpu.vector_store %arg13[%c0_139, %c9, %c0_140, %c0_141], %67 {strides = array<i32>} : memref<1x10x10x8xf32, #tpu.memory_space<vmem>>, vector<1x1x10x8xf32>,
    %cst_142 = arith.constant 0.000000e+00 : f32
    %69 = vector.broadcast %cst_142 : f32 to vector<1x10x1x8xf32>
    %c0_143 = arith.constant 0 : index
    %c0_144 = arith.constant 0 : index
    %c0_145 = arith.constant 0 : index
    %c0_146 = arith.constant 0 : index
    %70 = vector.load %arg13[%c0_143, %c0_144, %c0_145, %c0_146] : memref<1x10x10x8xf32, #tpu.memory_space<vmem>>, vector<1x10x1x8xf32>
    tpu.vector_store %arg13[%c0_143, %c0_144, %c0_145, %c0_146], %69 {strides = array<i32>} : memref<1x10x10x8xf32, #tpu.memory_space<vmem>>, vector<1x10x1x8xf32>,
    %cst_147 = arith.constant 0.000000e+00 : f32
    %71 = vector.broadcast %cst_147 : f32 to vector<1x10x1x8xf32>
    %c0_148 = arith.constant 0 : index
    %c0_149 = arith.constant 0 : index
    %c9_150 = arith.constant 9 : index
    %c0_151 = arith.constant 0 : index
    %72 = vector.load %arg13[%c0_148, %c0_149, %c9_150, %c0_151] : memref<1x10x10x8xf32, #tpu.memory_space<vmem>>, vector<1x10x1x8xf32>
    tpu.vector_store %arg13[%c0_148, %c0_149, %c9_150, %c0_151], %71 {strides = array<i32>} : memref<1x10x10x8xf32, #tpu.memory_space<vmem>>, vector<1x10x1x8xf32>,
    %c0_152 = arith.constant 0 : index
    %c1_153 = arith.constant 1 : index
    %c1_154 = arith.constant 1 : index
    %c0_155 = arith.constant 0 : index
    %73 = vector.load %arg13[%c0_152, %c1_153, %c1_154, %c0_155] : memref<1x10x10x8xf32, #tpu.memory_space<vmem>>, vector<1x8x8x8xf32>
    tpu.vector_store %arg13[%c0_152, %c1_153, %c1_154, %c0_155], %64 {strides = array<i32>} : memref<1x10x10x8xf32, #tpu.memory_space<vmem>>, vector<1x8x8x8xf32>,
    %c0_156 = arith.constant 0 : index
    %c0_157 = arith.constant 0 : index
    %c0_158 = arith.constant 0 : index
    %c0_159 = arith.constant 0 : index
    %74 = tpu.strided_load %arg13[%c0_156, %c0_157, %c0_158, %c0_159] {strides = array<i32: 1, 2, 2, 1>} : memref<1x10x10x8xf32, #tpu.memory_space<vmem>>, vector<1x4x4x8xf32>
    %c0_160 = arith.constant 0 : index
    %c0_161 = arith.constant 0 : index
    %c1_162 = arith.constant 1 : index
    %c0_163 = arith.constant 0 : index
    %75 = tpu.strided_load %arg13[%c0_160, %c0_161, %c1_162, %c0_163] {strides = array<i32: 1, 2, 2, 1>} : memref<1x10x10x8xf32, #tpu.memory_space<vmem>>, vector<1x4x4x8xf32>
    %c0_164 = arith.constant 0 : index
    %c0_165 = arith.constant 0 : index
    %c2_166 = arith.constant 2 : index
    %c0_167 = arith.constant 0 : index
    %76 = tpu.strided_load %arg13[%c0_164, %c0_165, %c2_166, %c0_167] {strides = array<i32: 1, 2, 2, 1>} : memref<1x10x10x8xf32, #tpu.memory_space<vmem>>, vector<1x4x4x8xf32>
    %c0_168 = arith.constant 0 : index
    %c1_169 = arith.constant 1 : index
    %c0_170 = arith.constant 0 : index
    %c0_171 = arith.constant 0 : index
    %77 = tpu.strided_load %arg13[%c0_168, %c1_169, %c0_170, %c0_171] {strides = array<i32: 1, 2, 2, 1>} : memref<1x10x10x8xf32, #tpu.memory_space<vmem>>, vector<1x4x4x8xf32>
    %c0_172 = arith.constant 0 : index
    %c1_173 = arith.constant 1 : index
    %c1_174 = arith.constant 1 : index
    %c0_175 = arith.constant 0 : index
    %78 = tpu.strided_load %arg13[%c0_172, %c1_173, %c1_174, %c0_175] {strides = array<i32: 1, 2, 2, 1>} : memref<1x10x10x8xf32, #tpu.memory_space<vmem>>, vector<1x4x4x8xf32>
    %c0_176 = arith.constant 0 : index
    %c1_177 = arith.constant 1 : index
    %c2_178 = arith.constant 2 : index
    %c0_179 = arith.constant 0 : index
    %79 = tpu.strided_load %arg13[%c0_176, %c1_177, %c2_178, %c0_179] {strides = array<i32: 1, 2, 2, 1>} : memref<1x10x10x8xf32, #tpu.memory_space<vmem>>, vector<1x4x4x8xf32>
    %c0_180 = arith.constant 0 : index
    %c2_181 = arith.constant 2 : index
    %c0_182 = arith.constant 0 : index
    %c0_183 = arith.constant 0 : index
    %80 = tpu.strided_load %arg13[%c0_180, %c2_181, %c0_182, %c0_183] {strides = array<i32: 1, 2, 2, 1>} : memref<1x10x10x8xf32, #tpu.memory_space<vmem>>, vector<1x4x4x8xf32>
    %c0_184 = arith.constant 0 : index
    %c2_185 = arith.constant 2 : index
    %c1_186 = arith.constant 1 : index
    %c0_187 = arith.constant 0 : index
    %81 = tpu.strided_load %arg13[%c0_184, %c2_185, %c1_186, %c0_187] {strides = array<i32: 1, 2, 2, 1>} : memref<1x10x10x8xf32, #tpu.memory_space<vmem>>, vector<1x4x4x8xf32>
    %c0_188 = arith.constant 0 : index
    %c2_189 = arith.constant 2 : index
    %c2_190 = arith.constant 2 : index
    %c0_191 = arith.constant 0 : index
    %82 = tpu.strided_load %arg13[%c0_188, %c2_189, %c2_190, %c0_191] {strides = array<i32: 1, 2, 2, 1>} : memref<1x10x10x8xf32, #tpu.memory_space<vmem>>, vector<1x4x4x8xf32>
    %83 = tpu.concatenate %74, %75, %76, %77, %78, %79, %80, %81, %82 in 3 : vector<1x4x4x8xf32>, vector<1x4x4x8xf32>, vector<1x4x4x8xf32>, vector<1x4x4x8xf32>, vector<1x4x4x8xf32>, vector<1x4x4x8xf32>, vector<1x4x4x8xf32>, vector<1x4x4x8xf32>, vector<1x4x4x8xf32> -> vector<1x4x4x72xf32>
    %84 = vector.shape_cast %83 : vector<1x4x4x72xf32> to vector<16x72xf32>
    %85 = arith.truncf %84 : vector<16x72xf32> to vector<16x72xbf16>
    %c0_192 = arith.constant 0 : index
    %c0_193 = arith.constant 0 : index
    %86 = vector.load %arg6[%c0_192, %c0_193] : memref<72x8xbf16, #tpu.memory_space<vmem>>, vector<72x8xbf16>
    %cst_194 = arith.constant dense<0.000000e+00> : vector<16x8xf32>
    %87 = tpu.matmul %85, %86, %cst_194 {dimension_numbers = #tpu.dot_dimension_numbers<[1], [0], [0], [1], [0, 0, 1, 1], [], []>} : vector<16x72xbf16>, vector<72x8xbf16>, vector<16x8xf32> -> vector<16x8xf32>
    %c0_195 = arith.constant 0 : index
    %c0_196 = arith.constant 0 : index
    %88 = vector.load %arg7[%c0_195, %c0_196] : memref<1x8xf32, #tpu.memory_space<vmem>>, vector<1x8xf32>
    %89 = vector.broadcast %88 : vector<1x8xf32> to vector<16x8xf32>
    %90 = arith.addf %87, %89 : vector<16x8xf32>
    %cst_197 = arith.constant 0.000000e+00 : f32
    %91 = vector.broadcast %cst_197 : f32 to vector<16x8xf32>
    %92 = arith.cmpf oge, %90, %91 : vector<16x8xf32>
    %cst_198 = arith.constant 0.00999999977 : f32
    %93 = vector.broadcast %cst_198 : f32 to vector<16x8xf32>
    %94 = arith.mulf %93, %90 : vector<16x8xf32>
    %95 = arith.select %92, %90, %94 : vector<16x8xi1>, vector<16x8xf32>
    %96 = vector.shape_cast %95 : vector<16x8xf32> to vector<1x4x4x8xf32>
    %cst_199 = arith.constant 0.000000e+00 : f32
    %97 = vector.broadcast %cst_199 : f32 to vector<1x1x6x8xf32>
    %c0_200 = arith.constant 0 : index
    %c0_201 = arith.constant 0 : index
    %c0_202 = arith.constant 0 : index
    %c0_203 = arith.constant 0 : index
    %98 = vector.load %arg14[%c0_200, %c0_201, %c0_202, %c0_203] : memref<1x6x6x8xf32, #tpu.memory_space<vmem>>, vector<1x1x6x8xf32>
    tpu.vector_store %arg14[%c0_200, %c0_201, %c0_202, %c0_203], %97 {strides = array<i32>} : memref<1x6x6x8xf32, #tpu.memory_space<vmem>>, vector<1x1x6x8xf32>,
    %cst_204 = arith.constant 0.000000e+00 : f32
    %99 = vector.broadcast %cst_204 : f32 to vector<1x1x6x8xf32>
    %c0_205 = arith.constant 0 : index
    %c5 = arith.constant 5 : index
    %c0_206 = arith.constant 0 : index
    %c0_207 = arith.constant 0 : index
    %100 = vector.load %arg14[%c0_205, %c5, %c0_206, %c0_207] : memref<1x6x6x8xf32, #tpu.memory_space<vmem>>, vector<1x1x6x8xf32>
    tpu.vector_store %arg14[%c0_205, %c5, %c0_206, %c0_207], %99 {strides = array<i32>} : memref<1x6x6x8xf32, #tpu.memory_space<vmem>>, vector<1x1x6x8xf32>,
    %cst_208 = arith.constant 0.000000e+00 : f32
    %101 = vector.broadcast %cst_208 : f32 to vector<1x6x1x8xf32>
    %c0_209 = arith.constant 0 : index
    %c0_210 = arith.constant 0 : index
    %c0_211 = arith.constant 0 : index
    %c0_212 = arith.constant 0 : index
    %102 = vector.load %arg14[%c0_209, %c0_210, %c0_211, %c0_212] : memref<1x6x6x8xf32, #tpu.memory_space<vmem>>, vector<1x6x1x8xf32>
    tpu.vector_store %arg14[%c0_209, %c0_210, %c0_211, %c0_212], %101 {strides = array<i32>} : memref<1x6x6x8xf32, #tpu.memory_space<vmem>>, vector<1x6x1x8xf32>,
    %cst_213 = arith.constant 0.000000e+00 : f32
    %103 = vector.broadcast %cst_213 : f32 to vector<1x6x1x8xf32>
    %c0_214 = arith.constant 0 : index
    %c0_215 = arith.constant 0 : index
    %c5_216 = arith.constant 5 : index
    %c0_217 = arith.constant 0 : index
    %104 = vector.load %arg14[%c0_214, %c0_215, %c5_216, %c0_217] : memref<1x6x6x8xf32, #tpu.memory_space<vmem>>, vector<1x6x1x8xf32>
    tpu.vector_store %arg14[%c0_214, %c0_215, %c5_216, %c0_217], %103 {strides = array<i32>} : memref<1x6x6x8xf32, #tpu.memory_space<vmem>>, vector<1x6x1x8xf32>,
    %c0_218 = arith.constant 0 : index
    %c1_219 = arith.constant 1 : index
    %c1_220 = arith.constant 1 : index
    %c0_221 = arith.constant 0 : index
    %105 = vector.load %arg14[%c0_218, %c1_219, %c1_220, %c0_221] : memref<1x6x6x8xf32, #tpu.memory_space<vmem>>, vector<1x4x4x8xf32>
    tpu.vector_store %arg14[%c0_218, %c1_219, %c1_220, %c0_221], %96 {strides = array<i32>} : memref<1x6x6x8xf32, #tpu.memory_space<vmem>>, vector<1x4x4x8xf32>,
    %c0_222 = arith.constant 0 : index
    %c0_223 = arith.constant 0 : index
    %c0_224 = arith.constant 0 : index
    %c0_225 = arith.constant 0 : index
    %106 = vector.load %arg14[%c0_222, %c0_223, %c0_224, %c0_225] : memref<1x6x6x8xf32, #tpu.memory_space<vmem>>, vector<1x4x4x8xf32>
    %c0_226 = arith.constant 0 : index
    %c0_227 = arith.constant 0 : index
    %c1_228 = arith.constant 1 : index
    %c0_229 = arith.constant 0 : index
    %107 = vector.load %arg14[%c0_226, %c0_227, %c1_228, %c0_229] : memref<1x6x6x8xf32, #tpu.memory_space<vmem>>, vector<1x4x4x8xf32>
    %c0_230 = arith.constant 0 : index
    %c0_231 = arith.constant 0 : index
    %c2_232 = arith.constant 2 : index
    %c0_233 = arith.constant 0 : index
    %108 = vector.load %arg14[%c0_230, %c0_231, %c2_232, %c0_233] : memref<1x6x6x8xf32, #tpu.memory_space<vmem>>, vector<1x4x4x8xf32>
    %c0_234 = arith.constant 0 : index
    %c1_235 = arith.constant 1 : index
    %c0_236 = arith.constant 0 : index
    %c0_237 = arith.constant 0 : index
    %109 = vector.load %arg14[%c0_234, %c1_235, %c0_236, %c0_237] : memref<1x6x6x8xf32, #tpu.memory_space<vmem>>, vector<1x4x4x8xf32>
    %c0_238 = arith.constant 0 : index
    %c1_239 = arith.constant 1 : index
    %c1_240 = arith.constant 1 : index
    %c0_241 = arith.constant 0 : index
    %110 = vector.load %arg14[%c0_238, %c1_239, %c1_240, %c0_241] : memref<1x6x6x8xf32, #tpu.memory_space<vmem>>, vector<1x4x4x8xf32>
    %c0_242 = arith.constant 0 : index
    %c1_243 = arith.constant 1 : index
    %c2_244 = arith.constant 2 : index
    %c0_245 = arith.constant 0 : index
    %111 = vector.load %arg14[%c0_242, %c1_243, %c2_244, %c0_245] : memref<1x6x6x8xf32, #tpu.memory_space<vmem>>, vector<1x4x4x8xf32>
    %c0_246 = arith.constant 0 : index
    %c2_247 = arith.constant 2 : index
    %c0_248 = arith.constant 0 : index
    %c0_249 = arith.constant 0 : index
    %112 = vector.load %arg14[%c0_246, %c2_247, %c0_248, %c0_249] : memref<1x6x6x8xf32, #tpu.memory_space<vmem>>, vector<1x4x4x8xf32>
    %c0_250 = arith.constant 0 : index
    %c2_251 = arith.constant 2 : index
    %c1_252 = arith.constant 1 : index
    %c0_253 = arith.constant 0 : index
    %113 = vector.load %arg14[%c0_250, %c2_251, %c1_252, %c0_253] : memref<1x6x6x8xf32, #tpu.memory_space<vmem>>, vector<1x4x4x8xf32>
    %c0_254 = arith.constant 0 : index
    %c2_255 = arith.constant 2 : index
    %c2_256 = arith.constant 2 : index
    %c0_257 = arith.constant 0 : index
    %114 = vector.load %arg14[%c0_254, %c2_255, %c2_256, %c0_257] : memref<1x6x6x8xf32, #tpu.memory_space<vmem>>, vector<1x4x4x8xf32>
    %115 = tpu.concatenate %106, %107, %108, %109, %110, %111, %112, %113, %114 in 3 : vector<1x4x4x8xf32>, vector<1x4x4x8xf32>, vector<1x4x4x8xf32>, vector<1x4x4x8xf32>, vector<1x4x4x8xf32>, vector<1x4x4x8xf32>, vector<1x4x4x8xf32>, vector<1x4x4x8xf32>, vector<1x4x4x8xf32> -> vector<1x4x4x72xf32>
    %116 = vector.shape_cast %115 : vector<1x4x4x72xf32> to vector<16x72xf32>
    %117 = arith.truncf %116 : vector<16x72xf32> to vector<16x72xbf16>
    %c0_258 = arith.constant 0 : index
    %c0_259 = arith.constant 0 : index
    %118 = vector.load %arg8[%c0_258, %c0_259] : memref<72x1xbf16, #tpu.memory_space<vmem>>, vector<72x1xbf16>
    %cst_260 = arith.constant dense<0.000000e+00> : vector<16x1xf32>
    %119 = tpu.matmul %117, %118, %cst_260 {dimension_numbers = #tpu.dot_dimension_numbers<[1], [0], [0], [1], [0, 0, 1, 1], [], []>} : vector<16x72xbf16>, vector<72x1xbf16>, vector<16x1xf32> -> vector<16x1xf32>
    %c0_261 = arith.constant 0 : index
    %c0_262 = arith.constant 0 : index
    %120 = vector.load %arg9[%c0_261, %c0_262] : memref<1x1xf32, #tpu.memory_space<vmem>>, vector<1x1xf32>
    %121 = vector.broadcast %120 : vector<1x1xf32> to vector<16x1xf32>
    %122 = arith.addf %119, %121 : vector<16x1xf32>
    %c0_263 = arith.constant 0 : index
    %c0_264 = arith.constant 0 : index
    %c0_265 = arith.constant 0 : index
    %123 = vector.load %arg10[%c0_263, %c0_264, %c0_265] : memref<1x16x1xf32, #tpu.memory_space<vmem>>, vector<1x16x1xf32>
    %124 = vector.shape_cast %123 : vector<1x16x1xf32> to vector<16x1xf32>
    %125 = vector.shape_cast %122 : vector<16x1xf32> to vector<1x16x1xf32>
    tpu.vector_store %arg10[%c0_263, %c0_264, %c0_265], %125 {strides = array<i32>} : memref<1x16x1xf32, #tpu.memory_space<vmem>>, vector<1x16x1xf32>,
    return
  }
  func.func @transform_0(%arg0: i32) -> (i32, i32, i32, i32) {
    %c0_i32 = arith.constant 0 : i32
    %c0_i32_0 = arith.constant 0 : i32
    %c0_i32_1 = arith.constant 0 : i32
    %c0_i32_2 = arith.constant 0 : i32
    return %arg0, %c0_i32, %c0_i32_0, %c0_i32_1 : i32, i32, i32, i32
  }
  func.func @transform_1(%arg0: i32) -> (i32, i32) {
    %c0_i32 = arith.constant 0 : i32
    %c0_i32_0 = arith.constant 0 : i32
    %c0_i32_1 = arith.constant 0 : i32
    return %c0_i32, %c0_i32_0 : i32, i32
  }
  func.func @transform_2(%arg0: i32) -> (i32, i32) {
    %c0_i32 = arith.constant 0 : i32
    %c0_i32_0 = arith.constant 0 : i32
    %c0_i32_1 = arith.constant 0 : i32
    return %c0_i32, %c0_i32_0 : i32, i32
  }
  func.func @transform_3(%arg0: i32) -> (i32, i32) {
    %c0_i32 = arith.constant 0 : i32
    %c0_i32_0 = arith.constant 0 : i32
    %c0_i32_1 = arith.constant 0 : i32
    return %c0_i32, %c0_i32_0 : i32, i32
  }
  func.func @transform_4(%arg0: i32) -> (i32, i32) {
    %c0_i32 = arith.constant 0 : i32
    %c0_i32_0 = arith.constant 0 : i32
    %c0_i32_1 = arith.constant 0 : i32
    return %c0_i32, %c0_i32_0 : i32, i32
  }
  func.func @transform_5(%arg0: i32) -> (i32, i32) {
    %c0_i32 = arith.constant 0 : i32
    %c0_i32_0 = arith.constant 0 : i32
    %c0_i32_1 = arith.constant 0 : i32
    return %c0_i32, %c0_i32_0 : i32, i32
  }
  func.func @transform_6(%arg0: i32) -> (i32, i32) {
    %c0_i32 = arith.constant 0 : i32
    %c0_i32_0 = arith.constant 0 : i32
    %c0_i32_1 = arith.constant 0 : i32
    return %c0_i32, %c0_i32_0 : i32, i32
  }
  func.func @transform_7(%arg0: i32) -> (i32, i32) {
    %c0_i32 = arith.constant 0 : i32
    %c0_i32_0 = arith.constant 0 : i32
    %c0_i32_1 = arith.constant 0 : i32
    return %c0_i32, %c0_i32_0 : i32, i32
  }
  func.func @transform_8(%arg0: i32) -> (i32, i32) {
    %c0_i32 = arith.constant 0 : i32
    %c0_i32_0 = arith.constant 0 : i32
    %c0_i32_1 = arith.constant 0 : i32
    return %c0_i32, %c0_i32_0 : i32, i32
  }
  func.func @transform_9(%arg0: i32) -> (i32, i32, i32) {
    %c0_i32 = arith.constant 0 : i32
    %c0_i32_0 = arith.constant 0 : i32
    %c0_i32_1 = arith.constant 0 : i32
    return %arg0, %c0_i32, %c0_i32_0 : i32, i32, i32
  }
}

</mosaic_0001>

<llo_original>
// kernel: tpu_custom_call.1
$region0: #{tpu_custom_call.1}
  #allocation0 [shape = 'u32[]', space=smem, size = 0x4, offset = 0x4, fixed_abs, tag = 'smem constant byte address 0x4 - core index']
  #allocation1 [shape = 'u32[144,128]{1,0:T(1,128)}', space=vmem, size = 0x12000, scoped, tag = 'internal scratch']
  #allocation2 [shape = 'f32[1,18,18,4]{3,2,1,0:T(8,128)}', space=vmem, size = 0x36000, scoped, tag = 'scratch operand']
  #allocation3 [shape = 'f32[1,18,18,8]{3,2,1,0:T(8,128)}', space=vmem, size = 0x36000, scoped, tag = 'scratch operand']
  #allocation4 [shape = 'f32[1,10,10,8]{3,2,1,0:T(8,128)}', space=vmem, size = 0x14000, scoped, tag = 'scratch operand']
  #allocation5 [shape = 'f32[1,6,6,8]{3,2,1,0:T(8,128)}', space=vmem, size = 0x6000, scoped, tag = 'scratch operand']
  #allocation6 [shape = 'f32[1,1]{1,0:T(1,128)S(1)}', space=vmem, size = 0x200, scoped, tag = 'scoped memory for tpu_custom_call.1']
  %s0 = inlined_call_operand.vmem [shape: f32[2,16,16,4], index: 0, kind: input, shape index: {}]
  %s1 = inlined_call_operand.vmem [shape: bf16[36,8], index: 1, kind: input, shape index: {}]
  %s2 = inlined_call_operand.vmem [shape: f32[1,8], index: 2, kind: input, shape index: {}]
  %s3 = inlined_call_operand.vmem [shape: bf16[72,8], index: 3, kind: input, shape index: {}]
  %s4 = inlined_call_operand.vmem [shape: f32[1,8], index: 4, kind: input, shape index: {}]
  %s5 = inlined_call_operand.vmem [shape: bf16[72,8], index: 5, kind: input, shape index: {}]
  %s6 = inlined_call_operand.vmem [shape: f32[1,8], index: 6, kind: input, shape index: {}]
  %s7 = inlined_call_operand.vmem [shape: bf16[72,1], index: 7, kind: input, shape index: {}]
  %s8 = inlined_call_operand.<no memory space> [shape: f32[1,1], index: 8, kind: input, shape index: {}]
  %s9 = inlined_call_operand.vmem [shape: f32[2,16,1], index: 9, kind: output, shape index: {}]
  %s10 = sld [smem:[#allocation0]]
  $region69: #{tpu_custom_call.1} parent=0
    _
  %s12 = ssub.s32 1, %s10
  %s13 = scalar_select 0, %s12, %s10
  %v14 = vstv %s8
  %15 = vst [vmem:[#allocation6] sm:$0x1] %v14
  loop: start=0, step=1, limit=4
  $region2: #{tpu_custom_call.1} parent=0 // loop_pre_header
    _
  $region3: #{tpu_custom_call.1} parent=0 // loop_header
    %s17 = sphi 0, %s21
    %p18 = scmp.ge.s32.totalorder %s17, 4
    %s27 = sphi 0, %s29
    %s30 = sphi 0, %s27
    %s31 = sphi 0, %s30
    %s47 = sphi 0, %s31
    %s51 = sphi 0, %s51
    %s53 = sphi 0, %s51
    %s54 = sphi 0, %s53
    %s68 = sphi 0, %s54
    %s72 = sphi 0, %s72
    %s74 = sphi 0, %s72
    %s75 = sphi 0, %s74
    %s89 = sphi 0, %s75
    %s93 = sphi 0, %s93
    %s95 = sphi 0, %s93
    %s96 = sphi 0, %s95
    %s110 = sphi 0, %s96
    %s114 = sphi 0, %s114
    %s116 = sphi 0, %s114
    %s117 = sphi 0, %s116
    %s131 = sphi 0, %s117
    %s135 = sphi 0, %s135
    %s137 = sphi 0, %s135
    %s138 = sphi 0, %s137
    %s152 = sphi 0, %s138
    %s156 = sphi 0, %s156
    %s158 = sphi 0, %s156
    %s159 = sphi 0, %s158
    %s173 = sphi 0, %s159
    %s177 = sphi 0, %s177
    %s179 = sphi 0, %s177
    %s180 = sphi 0, %s179
    %s194 = sphi 0, %s180
    %s198 = sphi 0, %s198
    %s200 = sphi 0, %s198
    %s201 = sphi 0, %s200
    %s215 = sphi 0, %s201
    %s221 = sphi 0, %s223
    %s224 = sphi 0, %s221
    %s225 = sphi 0, %s224
    %s241 = sphi 0, %s225
  $region4: #{tpu_custom_call.1} parent=0 // loop_header_branch
    %20 = sbr.rel (%p18) target = $region8
  $region5: #{tpu_custom_call.1} parent=0 // loop_body
    %s22 = ssub.s32 %s17, 1
    %s23 = ssub.s32 %s17, 2
    %s24 = sadd.s32 %s17, 1
    %s25 = ssub.s32 %s17, %s24
    %p26 = scmp.eq.s32.totalorder %s25, 0
    %s28 = sadd.s32 %s27, 1
    %s29 = scalar_select %p26, %s27, %s28
    %p32 = pneg %p26
    %p33 = scmp.eq.s32.totalorder %s17, 1
    %p34 = por %p32, %p33
    %p35 = scmp.ne.s32.totalorder %s27, %s30
    %p36 = scmp.eq.s32.totalorder %s17, 0
    %p37 = por %p35, %p36
    %p38 = scmp.ne.s32.totalorder %s27, %s30
    %p39 = scmp.eq.s32.totalorder %s22, 1
    %p40 = por %p38, %p39
    %p41 = scmp.ne.s32.totalorder %s30, %s31
    %p42 = scmp.eq.s32.totalorder %s22, 0
    %p43 = por %p41, %p42
    %p44 = scmp.ne.s32.totalorder %s30, %s31
    %p45 = scmp.eq.s32.totalorder %s23, 1
    %p46 = por %p44, %p45
    %p48 = scmp.ne.s32.totalorder %s31, %s47
    %p49 = scmp.eq.s32.totalorder %s23, 0
    %p50 = por %p48, %p49
    %s52 = sadd.s32 %s51, 1
    %p55 = scmp.eq.s32.totalorder %s17, 1
    %p56 = scmp.ne.s32.totalorder %s51, %s53
    %p57 = scmp.eq.s32.totalorder %s17, 0
    %p58 = por %p56, %p57
    %p59 = scmp.ne.s32.totalorder %s51, %s53
    %p60 = scmp.eq.s32.totalorder %s22, 1
    %p61 = por %p59, %p60
    %p62 = scmp.ne.s32.totalorder %s53, %s54
    %p63 = scmp.eq.s32.totalorder %s22, 0
    %p64 = por %p62, %p63
    %p65 = scmp.ne.s32.totalorder %s53, %s54
    %p66 = scmp.eq.s32.totalorder %s23, 1
    %p67 = por %p65, %p66
    %p69 = scmp.ne.s32.totalorder %s54, %s68
    %p70 = scmp.eq.s32.totalorder %s23, 0
    %p71 = por %p69, %p70
    %s73 = sadd.s32 %s72, 1
    %p76 = scmp.eq.s32.totalorder %s17, 1
    %p77 = scmp.ne.s32.totalorder %s72, %s74
    %p78 = scmp.eq.s32.totalorder %s17, 0
    %p79 = por %p77, %p78
    %p80 = scmp.ne.s32.totalorder %s72, %s74
    %p81 = scmp.eq.s32.totalorder %s22, 1
    %p82 = por %p80, %p81
    %p83 = scmp.ne.s32.totalorder %s74, %s75
    %p84 = scmp.eq.s32.totalorder %s22, 0
    %p85 = por %p83, %p84
    %p86 = scmp.ne.s32.totalorder %s74, %s75
    %p87 = scmp.eq.s32.totalorder %s23, 1
    %p88 = por %p86, %p87
    %p90 = scmp.ne.s32.totalorder %s75, %s89
    %p91 = scmp.eq.s32.totalorder %s23, 0
    %p92 = por %p90, %p91
    %s94 = sadd.s32 %s93, 1
    %p97 = scmp.eq.s32.totalorder %s17, 1
    %p98 = scmp.ne.s32.totalorder %s93, %s95
    %p99 = scmp.eq.s32.totalorder %s17, 0
    %p100 = por %p98, %p99
    %p101 = scmp.ne.s32.totalorder %s93, %s95
    %p102 = scmp.eq.s32.totalorder %s22, 1
    %p103 = por %p101, %p102
    %p104 = scmp.ne.s32.totalorder %s95, %s96
    %p105 = scmp.eq.s32.totalorder %s22, 0
    %p106 = por %p104, %p105
    %p107 = scmp.ne.s32.totalorder %s95, %s96
    %p108 = scmp.eq.s32.totalorder %s23, 1
    %p109 = por %p107, %p108
    %p111 = scmp.ne.s32.totalorder %s96, %s110
    %p112 = scmp.eq.s32.totalorder %s23, 0
    %p113 = por %p111, %p112
    %s115 = sadd.s32 %s114, 1
    %p118 = scmp.eq.s32.totalorder %s17, 1
    %p119 = scmp.ne.s32.totalorder %s114, %s116
    %p120 = scmp.eq.s32.totalorder %s17, 0
    %p121 = por %p119, %p120
    %p122 = scmp.ne.s32.totalorder %s114, %s116
    %p123 = scmp.eq.s32.totalorder %s22, 1
    %p124 = por %p122, %p123
    %p125 = scmp.ne.s32.totalorder %s116, %s117
    %p126 = scmp.eq.s32.totalorder %s22, 0
    %p127 = por %p125, %p126
    %p128 = scmp.ne.s32.totalorder %s116, %s117
    %p129 = scmp.eq.s32.totalorder %s23, 1
    %p130 = por %p128, %p129
    %p132 = scmp.ne.s32.totalorder %s117, %s131
    %p133 = scmp.eq.s32.totalorder %s23, 0
    %p134 = por %p132, %p133
    %s136 = sadd.s32 %s135, 1
    %p139 = scmp.eq.s32.totalorder %s17, 1
    %p140 = scmp.ne.s32.totalorder %s135, %s137
    %p141 = scmp.eq.s32.totalorder %s17, 0
    %p142 = por %p140, %p141
    %p143 = scmp.ne.s32.totalorder %s135, %s137
    %p144 = scmp.eq.s32.totalorder %s22, 1
    %p145 = por %p143, %p144
    %p146 = scmp.ne.s32.totalorder %s137, %s138
    %p147 = scmp.eq.s32.totalorder %s22, 0
    %p148 = por %p146, %p147
    %p149 = scmp.ne.s32.totalorder %s137, %s138
    %p150 = scmp.eq.s32.totalorder %s23, 1
    %p151 = por %p149, %p150
    %p153 = scmp.ne.s32.totalorder %s138, %s152
    %p154 = scmp.eq.s32.totalorder %s23, 0
    %p155 = por %p153, %p154
    %s157 = sadd.s32 %s156, 1
    %p160 = scmp.eq.s32.totalorder %s17, 1
    %p161 = scmp.ne.s32.totalorder %s156, %s158
    %p162 = scmp.eq.s32.totalorder %s17, 0
    %p163 = por %p161, %p162
    %p164 = scmp.ne.s32.totalorder %s156, %s158
    %p165 = scmp.eq.s32.totalorder %s22, 1
    %p166 = por %p164, %p165
    %p167 = scmp.ne.s32.totalorder %s158, %s159
    %p168 = scmp.eq.s32.totalorder %s22, 0
    %p169 = por %p167, %p168
    %p170 = scmp.ne.s32.totalorder %s158, %s159
    %p171 = scmp.eq.s32.totalorder %s23, 1
    %p172 = por %p170, %p171
    %p174 = scmp.ne.s32.totalorder %s159, %s173
    %p175 = scmp.eq.s32.totalorder %s23, 0
    %p176 = por %p174, %p175
    %s178 = sadd.s32 %s177, 1
    %p181 = scmp.eq.s32.totalorder %s17, 1
    %p182 = scmp.ne.s32.totalorder %s177, %s179
    %p183 = scmp.eq.s32.totalorder %s17, 0
    %p184 = por %p182, %p183
    %p185 = scmp.ne.s32.totalorder %s177, %s179
    %p186 = scmp.eq.s32.totalorder %s22, 1
    %p187 = por %p185, %p186
    %p188 = scmp.ne.s32.totalorder %s179, %s180
    %p189 = scmp.eq.s32.totalorder %s22, 0
    %p190 = por %p188, %p189
    %p191 = scmp.ne.s32.totalorder %s179, %s180
    %p192 = scmp.eq.s32.totalorder %s23, 1
    %p193 = por %p191, %p192
    %p195 = scmp.ne.s32.totalorder %s180, %s194
    %p196 = scmp.eq.s32.totalorder %s23, 0
    %p197 = por %p195, %p196
    %s199 = sadd.s32 %s198, 1
    %p202 = scmp.eq.s32.totalorder %s17, 1
    %p203 = scmp.ne.s32.totalorder %s198, %s200
    %p204 = scmp.eq.s32.totalorder %s17, 0
    %p205 = por %p203, %p204
    %p206 = scmp.ne.s32.totalorder %s198, %s200
    %p207 = scmp.eq.s32.totalorder %s22, 1
    %p208 = por %p206, %p207
    %p209 = scmp.ne.s32.totalorder %s200, %s201
    %p210 = scmp.eq.s32.totalorder %s22, 0
    %p211 = por %p209, %p210
    %p212 = scmp.ne.s32.totalorder %s200, %s201
    %p213 = scmp.eq.s32.totalorder %s23, 1
    %p214 = por %p212, %p213
    %p216 = scmp.ne.s32.totalorder %s201, %s215
    %p217 = scmp.eq.s32.totalorder %s23, 0
    %p218 = por %p216, %p217
    %s219 = ssub.s32 %s17, %s24
    %p220 = scmp.eq.s32.totalorder %s219, 0
    %s222 = sadd.s32 %s221, 1
    %s223 = scalar_select %p220, %s221, %s222
    %p226 = pneg %p220
    %p227 = scmp.eq.s32.totalorder %s17, 1
    %p228 = por %p226, %p227
    %p229 = scmp.ne.s32.totalorder %s221, %s224
    %p230 = scmp.eq.s32.totalorder %s17, 0
    %p231 = por %p229, %p230
    %p232 = scmp.ne.s32.totalorder %s221, %s224
    %p233 = scmp.eq.s32.totalorder %s22, 1
    %p234 = por %p232, %p233
    %p235 = scmp.ne.s32.totalorder %s224, %s225
    %p236 = scmp.eq.s32.totalorder %s22, 0
    %p237 = por %p235, %p236
    %p238 = scmp.ne.s32.totalorder %s224, %s225
    %p239 = scmp.eq.s32.totalorder %s23, 1
    %p240 = por %p238, %p239
    %p242 = scmp.ne.s32.totalorder %s225, %s241
    %p243 = scmp.eq.s32.totalorder %s23, 0
    %p244 = por %p242, %p243
    %p245 = scmp.le.s32.totalorder 1, %s17
    %p246 = scmp.lt.s32.totalorder %s17, 3
    %p247 = pnand %p245, %p246
    %p248 = pneg %p247
    // Predicated region
    $region9: #{tpu_custom_call.1} parent=5 // pred_check
      _
    $region10: #{tpu_custom_call.1} parent=5 // pred_check_branch
      %250 = sbr.rel (%p247) target = $region12
    $region11: #{tpu_custom_call.1} parent=5 // pred_region
      %s251 = ssub.s32 %s17, 1
      // Predicated region
      $region13: #{tpu_custom_call.1} parent=11 // pred_check
        %p252 = pneg %p64
      $region14: #{tpu_custom_call.1} parent=11 // pred_check_branch
        %254 = sbr.rel (%p252) target = $region16
      $region15: #{tpu_custom_call.1} parent=11 // pred_region
        _
      $region16: #{tpu_custom_call.1} parent=11 // pred_fallthru
        _
      // Predicated region
      $region17: #{tpu_custom_call.1} parent=11 // pred_check
        %p255 = pneg %p85
      $region18: #{tpu_custom_call.1} parent=11 // pred_check_branch
        %257 = sbr.rel (%p255) target = $region20
      $region19: #{tpu_custom_call.1} parent=11 // pred_region
        _
      $region20: #{tpu_custom_call.1} parent=11 // pred_fallthru
        _
      // Predicated region
      $region21: #{tpu_custom_call.1} parent=11 // pred_check
        %p258 = pneg %p106
      $region22: #{tpu_custom_call.1} parent=11 // pred_check_branch
        %260 = sbr.rel (%p258) target = $region24
      $region23: #{tpu_custom_call.1} parent=11 // pred_region
        _
      $region24: #{tpu_custom_call.1} parent=11 // pred_fallthru
        _
      // Predicated region
      $region25: #{tpu_custom_call.1} parent=11 // pred_check
        %p261 = pneg %p127
      $region26: #{tpu_custom_call.1} parent=11 // pred_check_branch
        %263 = sbr.rel (%p261) target = $region28
      $region27: #{tpu_custom_call.1} parent=11 // pred_region
        _
      $region28: #{tpu_custom_call.1} parent=11 // pred_fallthru
        _
      // Predicated region
      $region29: #{tpu_custom_call.1} parent=11 // pred_check
        %p264 = pneg %p148
      $region30: #{tpu_custom_call.1} parent=11 // pred_check_branch
        %266 = sbr.rel (%p264) target = $region32
      $region31: #{tpu_custom_call.1} parent=11 // pred_region
        _
      $region32: #{tpu_custom_call.1} parent=11 // pred_fallthru
        _
      // Predicated region
      $region33: #{tpu_custom_call.1} parent=11 // pred_check
        %p267 = pneg %p169
      $region34: #{tpu_custom_call.1} parent=11 // pred_check_branch
        %269 = sbr.rel (%p267) target = $region36
      $region35: #{tpu_custom_call.1} parent=11 // pred_region
        _
      $region36: #{tpu_custom_call.1} parent=11 // pred_fallthru
        _
      // Predicated region
      $region37: #{tpu_custom_call.1} parent=11 // pred_check
        %p270 = pneg %p190
      $region38: #{tpu_custom_call.1} parent=11 // pred_check_branch
        %272 = sbr.rel (%p270) target = $region40
      $region39: #{tpu_custom_call.1} parent=11 // pred_region
        _
      $region40: #{tpu_custom_call.1} parent=11 // pred_fallthru
        _
      // Predicated region
      $region41: #{tpu_custom_call.1} parent=11 // pred_check
        %p273 = pneg %p211
      $region42: #{tpu_custom_call.1} parent=11 // pred_check_branch
        %275 = sbr.rel (%p273) target = $region44
      $region43: #{tpu_custom_call.1} parent=11 // pred_region
        _
      $region44: #{tpu_custom_call.1} parent=11 // pred_fallthru
        _
    $region12: #{tpu_custom_call.1} parent=5 // pred_fallthru
      _
    %p276 = scmp.lt.s32.totalorder %s17, 2
    // Predicated region
    $region45: #{tpu_custom_call.1} parent=5 // pred_check
      %p277 = pneg %p276
    $region46: #{tpu_custom_call.1} parent=5 // pred_check_branch
      %279 = sbr.rel (%p277) target = $region48
    $region47: #{tpu_custom_call.1} parent=5 // pred_region
      // Predicated region
      $region49: #{tpu_custom_call.1} parent=47 // pred_check
        %p280 = pneg %p37
      $region50: #{tpu_custom_call.1} parent=47 // pred_check_branch
        %282 = sbr.rel (%p280) target = $region52
      $region51: #{tpu_custom_call.1} parent=47 // pred_region
        %p283 = scmp.lt.s32.totalorder %s17, 1
        %s284 = scalar_select %p283, %s17, 1
        %s285 = smul.addr %s284, 32
        %s286 = smul.addr %s285, 8
        %s287 = scalar_lea.vmem %s0, %s286
      $region52: #{tpu_custom_call.1} parent=47 // pred_fallthru
        _
    $region48: #{tpu_custom_call.1} parent=5 // pred_fallthru
      _
    %p288 = scmp.le.s32.totalorder 1, %s17
    %p289 = scmp.lt.s32.totalorder %s17, 3
    %p290 = pnand %p288, %p289
    %p291 = pneg %p290
    // Predicated region
    $region53: #{tpu_custom_call.1} parent=5 // pred_check
      _
    $region54: #{tpu_custom_call.1} parent=5 // pred_check_branch
      %293 = sbr.rel (%p290) target = $region56
    $region55: #{tpu_custom_call.1} parent=5 // pred_region
      %s294 = ssub.s32 %s17, 1
      %p295 = scmp.lt.s32.totalorder %s22, 1
      %s296 = scalar_select %p295, %s22, 1
      %s297 = smul.addr %s296, 32
      %s298 = smul.addr %s297, 8
      %s299 = scalar_lea.vmem %s0, %s298
      %p300 = pneg %p43
      %p301 = pneg %p40
      %p302 = pneg %p64
      %p303 = pneg %p61
      %p304 = pneg %p85
      %p305 = pneg %p82
      %p306 = pneg %p106
      %p307 = pneg %p103
      %p308 = pneg %p127
      %p309 = pneg %p124
      %p310 = pneg %p148
      %p311 = pneg %p145
      %p312 = pneg %p169
      %p313 = pneg %p166
      %p314 = pneg %p190
      %p315 = pneg %p187
      %p316 = pneg %p211
      %p317 = pneg %p208
      %p318 = pneg %p237
      %p319 = pneg %p234
      %p320 = scmp.lt.s32.totalorder %s22, 1
      %s321 = scalar_select %p320, %s22, 1
      %s322 = smul.addr %s321, 2
      %s323 = smul.addr %s322, 8
      %s324 = scalar_lea.vmem %s9, %s323
      %p325 = scmp.lt.s32.totalorder %s22, 1
      %s326 = scalar_select %p325, %s22, 1
      %s327 = smul.addr %s326, 32
      %s328 = smul.addr %s327, 8
      %s329 = scalar_lea.vmem %s0, %s328
      %p330 = scmp.lt.s32.totalorder %s22, 1
      %s331 = scalar_select %p330, %s22, 1
      %s332 = smul.addr %s331, 2
      %s333 = smul.addr %s332, 8
      %s334 = scalar_lea.vmem %s9, %s333
      %v336 = vld [vmem:[%s329] sm:$0xff]
      %v337 = vld [vmem:[%s329 + $0x8] sm:$0xff]
      %v338 = vld [vmem:[%s329 + $0x10] sm:$0xff]
      %v339 = vld [vmem:[%s329 + $0x18] sm:$0xff]
      %v340 = vld [vmem:[%s329 + $0x20] sm:$0xff]
      %v341 = vld [vmem:[%s329 + $0x28] sm:$0xff]
      %v342 = vld [vmem:[%s329 + $0x30] sm:$0xff]
      %v343 = vld [vmem:[%s329 + $0x38] sm:$0xff]
      %v344 = vld [vmem:[%s329 + $0x40] sm:$0xff]
      %v345 = vld [vmem:[%s329 + $0x48] sm:$0xff]
      %v346 = vld [vmem:[%s329 + $0x50] sm:$0xff]
      %v347 = vld [vmem:[%s329 + $0x58] sm:$0xff]
      %v348 = vld [vmem:[%s329 + $0x60] sm:$0xff]
      %v349 = vld [vmem:[%s329 + $0x68] sm:$0xff]
      %v350 = vld [vmem:[%s329 + $0x70] sm:$0xff]
      %v351 = vld [vmem:[%s329 + $0x78] sm:$0xff]
      %v352 = vld [vmem:[%s329 + $0x80] sm:$0xff]
      %v353 = vld [vmem:[%s329 + $0x88] sm:$0xff]
      %v354 = vld [vmem:[%s329 + $0x90] sm:$0xff]
      %v355 = vld [vmem:[%s329 + $0x98] sm:$0xff]
      %v356 = vld [vmem:[%s329 + $0xa0] sm:$0xff]
      %v357 = vld [vmem:[%s329 + $0xa8] sm:$0xff]
      %v358 = vld [vmem:[%s329 + $0xb0] sm:$0xff]
      %v359 = vld [vmem:[%s329 + $0xb8] sm:$0xff]
      %v360 = vld [vmem:[%s329 + $0xc0] sm:$0xff]
      %v361 = vld [vmem:[%s329 + $0xc8] sm:$0xff]
      %v362 = vld [vmem:[%s329 + $0xd0] sm:$0xff]
      %v363 = vld [vmem:[%s329 + $0xd8] sm:$0xff]
      %v364 = vld [vmem:[%s329 + $0xe0] sm:$0xff]
      %v365 = vld [vmem:[%s329 + $0xe8] sm:$0xff]
      %v366 = vld [vmem:[%s329 + $0xf0] sm:$0xff]
      %v367 = vld [vmem:[%s329 + $0xf8] sm:$0xff]
      %vm368 = vcmask 31744
      %369 = vst.msk [vmem:[#allocation2] sm:$0xff] %vm368, 0.0
      %370 = vst.msk [vmem:[#allocation2 + $0x8] sm:$0xff] %vm368, 0.0
      %vm371 = vcmask 25600
      %372 = vst.msk [vmem:[#allocation2 + $0x10] sm:$0x3] %vm371, 0.0
      %s373 = scalar_lea.vmem [#allocation2], 408
      %374 = vst.msk [vmem:[%s373] sm:$0xff] %vm368, 0.0
      %375 = vst.msk [vmem:[%s373 + $0x8] sm:$0xff] %vm368, 0.0
      %376 = vst.msk [vmem:[%s373 + $0x10] sm:$0x3] %vm371, 0.0
      %vm377 = vcmask 24576
      %378 = vst.msk [vmem:[#allocation2] sm:$0x1] %vm377, 0.0
      %379 = vst.msk [vmem:[#allocation2 + $0x18] sm:$0x1] %vm377, 0.0
      %380 = vst.msk [vmem:[#allocation2 + $0x30] sm:$0x1] %vm377, 0.0
      %381 = vst.msk [vmem:[#allocation2 + $0x48] sm:$0x1] %vm377, 0.0
      %382 = vst.msk [vmem:[#allocation2 + $0x60] sm:$0x1] %vm377, 0.0
      %383 = vst.msk [vmem:[#allocation2 + $0x78] sm:$0x1] %vm377, 0.0
      %384 = vst.msk [vmem:[#allocation2 + $0x90] sm:$0x1] %vm377, 0.0
      %385 = vst.msk [vmem:[#allocation2 + $0xa8] sm:$0x1] %vm377, 0.0
      %386 = vst.msk [vmem:[#allocation2 + $0xc0] sm:$0x1] %vm377, 0.0
      %387 = vst.msk [vmem:[#allocation2 + $0xd8] sm:$0x1] %vm377, 0.0
      %388 = vst.msk [vmem:[#allocation2 + $0xf0] sm:$0x1] %vm377, 0.0
      %389 = vst.msk [vmem:[#allocation2 + $0x108] sm:$0x1] %vm377, 0.0
      %390 = vst.msk [vmem:[#allocation2 + $0x120] sm:$0x1] %vm377, 0.0
      %391 = vst.msk [vmem:[#allocation2 + $0x138] sm:$0x1] %vm377, 0.0
      %392 = vst.msk [vmem:[#allocation2 + $0x150] sm:$0x1] %vm377, 0.0
      %393 = vst.msk [vmem:[#allocation2 + $0x168] sm:$0x1] %vm377, 0.0
      %394 = vst.msk [vmem:[#allocation2 + $0x180] sm:$0x1] %vm377, 0.0
      %395 = vst.msk [vmem:[#allocation2 + $0x198] sm:$0x1] %vm377, 0.0
      %396 = vst.msk [vmem:[#allocation2 + $0x11] sm:$0x1] %vm377, 0.0
      %397 = vst.msk [vmem:[#allocation2 + $0x29] sm:$0x1] %vm377, 0.0
      %398 = vst.msk [vmem:[#allocation2 + $0x41] sm:$0x1] %vm377, 0.0
      %399 = vst.msk [vmem:[#allocation2 + $0x59] sm:$0x1] %vm377, 0.0
      %400 = vst.msk [vmem:[#allocation2 + $0x71] sm:$0x1] %vm377, 0.0
      %401 = vst.msk [vmem:[#allocation2 + $0x89] sm:$0x1] %vm377, 0.0
      %402 = vst.msk [vmem:[#allocation2 + $0xa1] sm:$0x1] %vm377, 0.0
      %403 = vst.msk [vmem:[#allocation2 + $0xb9] sm:$0x1] %vm377, 0.0
      %404 = vst.msk [vmem:[#allocation2 + $0xd1] sm:$0x1] %vm377, 0.0
      %405 = vst.msk [vmem:[#allocation2 + $0xe9] sm:$0x1] %vm377, 0.0
      %406 = vst.msk [vmem:[#allocation2 + $0x101] sm:$0x1] %vm377, 0.0
      %407 = vst.msk [vmem:[#allocation2 + $0x119] sm:$0x1] %vm377, 0.0
      %408 = vst.msk [vmem:[#allocation2 + $0x131] sm:$0x1] %vm377, 0.0
      %409 = vst.msk [vmem:[#allocation2 + $0x149] sm:$0x1] %vm377, 0.0
      %410 = vst.msk [vmem:[#allocation2 + $0x161] sm:$0x1] %vm377, 0.0
      %411 = vst.msk [vmem:[#allocation2 + $0x179] sm:$0x1] %vm377, 0.0
      %412 = vst.msk [vmem:[#allocation2 + $0x191] sm:$0x1] %vm377, 0.0
      %413 = vst.msk [vmem:[#allocation2 + $0x1a9] sm:$0x1] %vm377, 0.0
      %s414 = scalar_lea.vmem [#allocation2], 24
      %415 = vst.msk [vmem:[%s414 + $0x1] sm:$0xff] %vm368, %v336
      %416 = vst.msk [vmem:[%s414 + $0x9] sm:$0xff] %vm368, %v337
      %417 = vst.msk [vmem:[%s414 + $0x19] sm:$0xff] %vm368, %v338
      %418 = vst.msk [vmem:[%s414 + $0x21] sm:$0xff] %vm368, %v339
      %419 = vst.msk [vmem:[%s414 + $0x31] sm:$0xff] %vm368, %v340
      %420 = vst.msk [vmem:[%s414 + $0x39] sm:$0xff] %vm368, %v341
      %421 = vst.msk [vmem:[%s414 + $0x49] sm:$0xff] %vm368, %v342
      %422 = vst.msk [vmem:[%s414 + $0x51] sm:$0xff] %vm368, %v343
      %423 = vst.msk [vmem:[%s414 + $0x61] sm:$0xff] %vm368, %v344
      %424 = vst.msk [vmem:[%s414 + $0x69] sm:$0xff] %vm368, %v345
      %425 = vst.msk [vmem:[%s414 + $0x79] sm:$0xff] %vm368, %v346
      %426 = vst.msk [vmem:[%s414 + $0x81] sm:$0xff] %vm368, %v347
      %427 = vst.msk [vmem:[%s414 + $0x91] sm:$0xff] %vm368, %v348
      %428 = vst.msk [vmem:[%s414 + $0x99] sm:$0xff] %vm368, %v349
      %429 = vst.msk [vmem:[%s414 + $0xa9] sm:$0xff] %vm368, %v350
      %430 = vst.msk [vmem:[%s414 + $0xb1] sm:$0xff] %vm368, %v351
      %431 = vst.msk [vmem:[%s414 + $0xc1] sm:$0xff] %vm368, %v352
      %432 = vst.msk [vmem:[%s414 + $0xc9] sm:$0xff] %vm368, %v353
      %433 = vst.msk [vmem:[%s414 + $0xd9] sm:$0xff] %vm368, %v354
      %434 = vst.msk [vmem:[%s414 + $0xe1] sm:$0xff] %vm368, %v355
      %435 = vst.msk [vmem:[%s414 + $0xf1] sm:$0xff] %vm368, %v356
      %436 = vst.msk [vmem:[%s414 + $0xf9] sm:$0xff] %vm368, %v357
      %437 = vst.msk [vmem:[%s414 + $0x109] sm:$0xff] %vm368, %v358
      %438 = vst.msk [vmem:[%s414 + $0x111] sm:$0xff] %vm368, %v359
      %439 = vst.msk [vmem:[%s414 + $0x121] sm:$0xff] %vm368, %v360
      %440 = vst.msk [vmem:[%s414 + $0x129] sm:$0xff] %vm368, %v361
      %441 = vst.msk [vmem:[%s414 + $0x139] sm:$0xff] %vm368, %v362
      %442 = vst.msk [vmem:[%s414 + $0x141] sm:$0xff] %vm368, %v363
      %443 = vst.msk [vmem:[%s414 + $0x151] sm:$0xff] %vm368, %v364
      %444 = vst.msk [vmem:[%s414 + $0x159] sm:$0xff] %vm368, %v365
      %445 = vst.msk [vmem:[%s414 + $0x169] sm:$0xff] %vm368, %v366
      %446 = vst.msk [vmem:[%s414 + $0x171] sm:$0xff] %vm368, %v367
      %v447 = vld [vmem:[#allocation2] sm:$0xff]
      %v448 = vld [vmem:[#allocation2 + $0x8] sm:$0xff]
      %v449 = vld [vmem:[#allocation2 + $0x18] sm:$0xff]
      %v450 = vld [vmem:[#allocation2 + $0x20] sm:$0xff]
      %v451 = vld [vmem:[#allocation2 + $0x30] sm:$0xff]
      %v452 = vld [vmem:[#allocation2 + $0x38] sm:$0xff]
      %v453 = vld [vmem:[#allocation2 + $0x48] sm:$0xff]
      %v454 = vld [vmem:[#allocation2 + $0x50] sm:$0xff]
      %v455 = vld [vmem:[#allocation2 + $0x60] sm:$0xff]
      %v456 = vld [vmem:[#allocation2 + $0x68] sm:$0xff]
      %v457 = vld [vmem:[#allocation2 + $0x78] sm:$0xff]
      %v458 = vld [vmem:[#allocation2 + $0x80] sm:$0xff]
      %v459 = vld [vmem:[#allocation2 + $0x90] sm:$0xff]
      %v460 = vld [vmem:[#allocation2 + $0x98] sm:$0xff]
      %v461 = vld [vmem:[#allocation2 + $0xa8] sm:$0xff]
      %v462 = vld [vmem:[#allocation2 + $0xb0] sm:$0xff]
      %v463 = vld [vmem:[#allocation2 + $0xc0] sm:$0xff]
      %v464 = vld [vmem:[#allocation2 + $0xc8] sm:$0xff]
      %v465 = vld [vmem:[#allocation2 + $0xd8] sm:$0xff]
      %v466 = vld [vmem:[#allocation2 + $0xe0] sm:$0xff]
      %v467 = vld [vmem:[#allocation2 + $0xf0] sm:$0xff]
      %v468 = vld [vmem:[#allocation2 + $0xf8] sm:$0xff]
      %v469 = vld [vmem:[#allocation2 + $0x108] sm:$0xff]
      %v470 = vld [vmem:[#allocation2 + $0x110] sm:$0xff]
      %v471 = vld [vmem:[#allocation2 + $0x120] sm:$0xff]
      %v472 = vld [vmem:[#allocation2 + $0x128] sm:$0xff]
      %v473 = vld [vmem:[#allocation2 + $0x138] sm:$0xff]
      %v474 = vld [vmem:[#allocation2 + $0x140] sm:$0xff]
      %v475 = vld [vmem:[#allocation2 + $0x150] sm:$0xff]
      %v476 = vld [vmem:[#allocation2 + $0x158] sm:$0xff]
      %v477 = vld [vmem:[#allocation2 + $0x168] sm:$0xff]
      %v478 = vld [vmem:[#allocation2 + $0x170] sm:$0xff]
      %v479 = vld [vmem:[#allocation2 + $0x1] sm:$0xff]
      %v480 = vld [vmem:[#allocation2 + $0x9] sm:$0xff]
      %v481 = vld [vmem:[#allocation2 + $0x19] sm:$0xff]
      %v482 = vld [vmem:[#allocation2 + $0x21] sm:$0xff]
      %v483 = vld [vmem:[#allocation2 + $0x31] sm:$0xff]
      %v484 = vld [vmem:[#allocation2 + $0x39] sm:$0xff]
      %v485 = vld [vmem:[#allocation2 + $0x49] sm:$0xff]
      %v486 = vld [vmem:[#allocation2 + $0x51] sm:$0xff]
      %v487 = vld [vmem:[#allocation2 + $0x61] sm:$0xff]
      %v488 = vld [vmem:[#allocation2 + $0x69] sm:$0xff]
      %v489 = vld [vmem:[#allocation2 + $0x79] sm:$0xff]
      %v490 = vld [vmem:[#allocation2 + $0x81] sm:$0xff]
      %v491 = vld [vmem:[#allocation2 + $0x91] sm:$0xff]
      %v492 = vld [vmem:[#allocation2 + $0x99] sm:$0xff]
      %v493 = vld [vmem:[#allocation2 + $0xa9] sm:$0xff]
      %v494 = vld [vmem:[#allocation2 + $0xb1] sm:$0xff]
      %v495 = vld [vmem:[#allocation2 + $0xc1] sm:$0xff]
      %v496 = vld [vmem:[#allocation2 + $0xc9] sm:$0xff]
      %v497 = vld [vmem:[#allocation2 + $0xd9] sm:$0xff]
      %v498 = vld [vmem:[#allocation2 + $0xe1] sm:$0xff]
      %v499 = vld [vmem:[#allocation2 + $0xf1] sm:$0xff]
      %v500 = vld [vmem:[#allocation2 + $0xf9] sm:$0xff]
      %v501 = vld [vmem:[#allocation2 + $0x109] sm:$0xff]
      %v502 = vld [vmem:[#allocation2 + $0x111] sm:$0xff]
      %v503 = vld [vmem:[#allocation2 + $0x121] sm:$0xff]
      %v504 = vld [vmem:[#allocation2 + $0x129] sm:$0xff]
      %v505 = vld [vmem:[#allocation2 + $0x139] sm:$0xff]
      %v506 = vld [vmem:[#allocation2 + $0x141] sm:$0xff]
      %v507 = vld [vmem:[#allocation2 + $0x151] sm:$0xff]
      %v508 = vld [vmem:[#allocation2 + $0x159] sm:$0xff]
      %v509 = vld [vmem:[#allocation2 + $0x169] sm:$0xff]
      %v510 = vld [vmem:[#allocation2 + $0x171] sm:$0xff]
      %v511 = vld [vmem:[#allocation2 + $0x2] sm:$0xff]
      %v512 = vld [vmem:[#allocation2 + $0xa] sm:$0xff]
      %v513 = vld [vmem:[#allocation2 + $0x1a] sm:$0xff]
      %v514 = vld [vmem:[#allocation2 + $0x22] sm:$0xff]
      %v515 = vld [vmem:[#allocation2 + $0x32] sm:$0xff]
      %v516 = vld [vmem:[#allocation2 + $0x3a] sm:$0xff]
      %v517 = vld [vmem:[#allocation2 + $0x4a] sm:$0xff]
      %v518 = vld [vmem:[#allocation2 + $0x52] sm:$0xff]
      %v519 = vld [vmem:[#allocation2 + $0x62] sm:$0xff]
      %v520 = vld [vmem:[#allocation2 + $0x6a] sm:$0xff]
      %v521 = vld [vmem:[#allocation2 + $0x7a] sm:$0xff]
      %v522 = vld [vmem:[#allocation2 + $0x82] sm:$0xff]
      %v523 = vld [vmem:[#allocation2 + $0x92] sm:$0xff]
      %v524 = vld [vmem:[#allocation2 + $0x9a] sm:$0xff]
      %v525 = vld [vmem:[#allocation2 + $0xaa] sm:$0xff]
      %v526 = vld [vmem:[#allocation2 + $0xb2] sm:$0xff]
      %v527 = vld [vmem:[#allocation2 + $0xc2] sm:$0xff]
      %v528 = vld [vmem:[#allocation2 + $0xca] sm:$0xff]
      %v529 = vld [vmem:[#allocation2 + $0xda] sm:$0xff]
      %v530 = vld [vmem:[#allocation2 + $0xe2] sm:$0xff]
      %v531 = vld [vmem:[#allocation2 + $0xf2] sm:$0xff]
      %v532 = vld [vmem:[#allocation2 + $0xfa] sm:$0xff]
      %v533 = vld [vmem:[#allocation2 + $0x10a] sm:$0xff]
      %v534 = vld [vmem:[#allocation2 + $0x112] sm:$0xff]
      %v535 = vld [vmem:[#allocation2 + $0x122] sm:$0xff]
      %v536 = vld [vmem:[#allocation2 + $0x12a] sm:$0xff]
      %v537 = vld [vmem:[#allocation2 + $0x13a] sm:$0xff]
      %v538 = vld [vmem:[#allocation2 + $0x142] sm:$0xff]
      %v539 = vld [vmem:[#allocation2 + $0x152] sm:$0xff]
      %v540 = vld [vmem:[#allocation2 + $0x15a] sm:$0xff]
      %v541 = vld [vmem:[#allocation2 + $0x16a] sm:$0xff]
      %v542 = vld [vmem:[#allocation2 + $0x172] sm:$0xff]
      %v543 = vld [vmem:[%s414] sm:$0xff]
      %v544 = vld [vmem:[%s414 + $0x8] sm:$0xff]
      %v545 = vld [vmem:[%s414 + $0x18] sm:$0xff]
      %v546 = vld [vmem:[%s414 + $0x20] sm:$0xff]
      %v547 = vld [vmem:[%s414 + $0x30] sm:$0xff]
      %v548 = vld [vmem:[%s414 + $0x38] sm:$0xff]
      %v549 = vld [vmem:[%s414 + $0x48] sm:$0xff]
      %v550 = vld [vmem:[%s414 + $0x50] sm:$0xff]
      %v551 = vld [vmem:[%s414 + $0x60] sm:$0xff]
      %v552 = vld [vmem:[%s414 + $0x68] sm:$0xff]
      %v553 = vld [vmem:[%s414 + $0x78] sm:$0xff]
      %v554 = vld [vmem:[%s414 + $0x80] sm:$0xff]
      %v555 = vld [vmem:[%s414 + $0x90] sm:$0xff]
      %v556 = vld [vmem:[%s414 + $0x98] sm:$0xff]
      %v557 = vld [vmem:[%s414 + $0xa8] sm:$0xff]
      %v558 = vld [vmem:[%s414 + $0xb0] sm:$0xff]
      %v559 = vld [vmem:[%s414 + $0xc0] sm:$0xff]
      %v560 = vld [vmem:[%s414 + $0xc8] sm:$0xff]
      %v561 = vld [vmem:[%s414 + $0xd8] sm:$0xff]
      %v562 = vld [vmem:[%s414 + $0xe0] sm:$0xff]
      %v563 = vld [vmem:[%s414 + $0xf0] sm:$0xff]
      %v564 = vld [vmem:[%s414 + $0xf8] sm:$0xff]
      %v565 = vld [vmem:[%s414 + $0x108] sm:$0xff]
      %v566 = vld [vmem:[%s414 + $0x110] sm:$0xff]
      %v567 = vld [vmem:[%s414 + $0x120] sm:$0xff]
      %v568 = vld [vmem:[%s414 + $0x128] sm:$0xff]
      %v569 = vld [vmem:[%s414 + $0x138] sm:$0xff]
      %v570 = vld [vmem:[%s414 + $0x140] sm:$0xff]
      %v571 = vld [vmem:[%s414 + $0x150] sm:$0xff]
      %v572 = vld [vmem:[%s414 + $0x158] sm:$0xff]
      %v573 = vld [vmem:[%s414 + $0x168] sm:$0xff]
      %v574 = vld [vmem:[%s414 + $0x170] sm:$0xff]
      %v575 = vld [vmem:[%s414 + $0x1] sm:$0xff]
      %v576 = vld [vmem:[%s414 + $0x9] sm:$0xff]
      %v577 = vld [vmem:[%s414 + $0x19] sm:$0xff]
      %v578 = vld [vmem:[%s414 + $0x21] sm:$0xff]
      %v579 = vld [vmem:[%s414 + $0x31] sm:$0xff]
      %v580 = vld [vmem:[%s414 + $0x39] sm:$0xff]
      %v581 = vld [vmem:[%s414 + $0x49] sm:$0xff]
      %v582 = vld [vmem:[%s414 + $0x51] sm:$0xff]
      %v583 = vld [vmem:[%s414 + $0x61] sm:$0xff]
      %v584 = vld [vmem:[%s414 + $0x69] sm:$0xff]
      %v585 = vld [vmem:[%s414 + $0x79] sm:$0xff]
      %v586 = vld [vmem:[%s414 + $0x81] sm:$0xff]
      %v587 = vld [vmem:[%s414 + $0x91] sm:$0xff]
      %v588 = vld [vmem:[%s414 + $0x99] sm:$0xff]
      %v589 = vld [vmem:[%s414 + $0xa9] sm:$0xff]
      %v590 = vld [vmem:[%s414 + $0xb1] sm:$0xff]
      %v591 = vld [vmem:[%s414 + $0xc1] sm:$0xff]
      %v592 = vld [vmem:[%s414 + $0xc9] sm:$0xff]
      %v593 = vld [vmem:[%s414 + $0xd9] sm:$0xff]
      %v594 = vld [vmem:[%s414 + $0xe1] sm:$0xff]
      %v595 = vld [vmem:[%s414 + $0xf1] sm:$0xff]
      %v596 = vld [vmem:[%s414 + $0xf9] sm:$0xff]
      %v597 = vld [vmem:[%s414 + $0x109] sm:$0xff]
      %v598 = vld [vmem:[%s414 + $0x111] sm:$0xff]
      %v599 = vld [vmem:[%s414 + $0x121] sm:$0xff]
      %v600 = vld [vmem:[%s414 + $0x129] sm:$0xff]
      %v601 = vld [vmem:[%s414 + $0x139] sm:$0xff]
      %v602 = vld [vmem:[%s414 + $0x141] sm:$0xff]
      %v603 = vld [vmem:[%s414 + $0x151] sm:$0xff]
      %v604 = vld [vmem:[%s414 + $0x159] sm:$0xff]
      %v605 = vld [vmem:[%s414 + $0x169] sm:$0xff]
      %v606 = vld [vmem:[%s414 + $0x171] sm:$0xff]
      %v607 = vld [vmem:[%s414 + $0x2] sm:$0xff]
      %v608 = vld [vmem:[%s414 + $0xa] sm:$0xff]
      %v609 = vld [vmem:[%s414 + $0x1a] sm:$0xff]
      %v610 = vld [vmem:[%s414 + $0x22] sm:$0xff]
      %v611 = vld [vmem:[%s414 + $0x32] sm:$0xff]
      %v612 = vld [vmem:[%s414 + $0x3a] sm:$0xff]
      %v613 = vld [vmem:[%s414 + $0x4a] sm:$0xff]
      %v614 = vld [vmem:[%s414 + $0x52] sm:$0xff]
      %v615 = vld [vmem:[%s414 + $0x62] sm:$0xff]
      %v616 = vld [vmem:[%s414 + $0x6a] sm:$0xff]
      %v617 = vld [vmem:[%s414 + $0x7a] sm:$0xff]
      %v618 = vld [vmem:[%s414 + $0x82] sm:$0xff]
      %v619 = vld [vmem:[%s414 + $0x92] sm:$0xff]
      %v620 = vld [vmem:[%s414 + $0x9a] sm:$0xff]
      %v621 = vld [vmem:[%s414 + $0xaa] sm:$0xff]
      %v622 = vld [vmem:[%s414 + $0xb2] sm:$0xff]
      %v623 = vld [vmem:[%s414 + $0xc2] sm:$0xff]
      %v624 = vld [vmem:[%s414 + $0xca] sm:$0xff]
      %v625 = vld [vmem:[%s414 + $0xda] sm:$0xff]
      %v626 = vld [vmem:[%s414 + $0xe2] sm:$0xff]
      %v627 = vld [vmem:[%s414 + $0xf2] sm:$0xff]
      %v628 = vld [vmem:[%s414 + $0xfa] sm:$0xff]
      %v629 = vld [vmem:[%s414 + $0x10a] sm:$0xff]
      %v630 = vld [vmem:[%s414 + $0x112] sm:$0xff]
      %v631 = vld [vmem:[%s414 + $0x122] sm:$0xff]
      %v632 = vld [vmem:[%s414 + $0x12a] sm:$0xff]
      %v633 = vld [vmem:[%s414 + $0x13a] sm:$0xff]
      %v634 = vld [vmem:[%s414 + $0x142] sm:$0xff]
      %v635 = vld [vmem:[%s414 + $0x152] sm:$0xff]
      %v636 = vld [vmem:[%s414 + $0x15a] sm:$0xff]
      %v637 = vld [vmem:[%s414 + $0x16a] sm:$0xff]
      %v638 = vld [vmem:[%s414 + $0x172] sm:$0xff]
      %s639 = scalar_lea.vmem [#allocation2], 48
      %v640 = vld [vmem:[%s639] sm:$0xff]
      %v641 = vld [vmem:[%s639 + $0x8] sm:$0xff]
      %v642 = vld [vmem:[%s639 + $0x18] sm:$0xff]
      %v643 = vld [vmem:[%s639 + $0x20] sm:$0xff]
      %v644 = vld [vmem:[%s639 + $0x30] sm:$0xff]
      %v645 = vld [vmem:[%s639 + $0x38] sm:$0xff]
      %v646 = vld [vmem:[%s639 + $0x48] sm:$0xff]
      %v647 = vld [vmem:[%s639 + $0x50] sm:$0xff]
      %v648 = vld [vmem:[%s639 + $0x60] sm:$0xff]
      %v649 = vld [vmem:[%s639 + $0x68] sm:$0xff]
      %v650 = vld [vmem:[%s639 + $0x78] sm:$0xff]
      %v651 = vld [vmem:[%s639 + $0x80] sm:$0xff]
      %v652 = vld [vmem:[%s639 + $0x90] sm:$0xff]
      %v653 = vld [vmem:[%s639 + $0x98] sm:$0xff]
      %v654 = vld [vmem:[%s639 + $0xa8] sm:$0xff]
      %v655 = vld [vmem:[%s639 + $0xb0] sm:$0xff]
      %v656 = vld [vmem:[%s639 + $0xc0] sm:$0xff]
      %v657 = vld [vmem:[%s639 + $0xc8] sm:$0xff]
      %v658 = vld [vmem:[%s639 + $0xd8] sm:$0xff]
      %v659 = vld [vmem:[%s639 + $0xe0] sm:$0xff]
      %v660 = vld [vmem:[%s639 + $0xf0] sm:$0xff]
      %v661 = vld [vmem:[%s639 + $0xf8] sm:$0xff]
      %v662 = vld [vmem:[%s639 + $0x108] sm:$0xff]
      %v663 = vld [vmem:[%s639 + $0x110] sm:$0xff]
      %v664 = vld [vmem:[%s639 + $0x120] sm:$0xff]
      %v665 = vld [vmem:[%s639 + $0x128] sm:$0xff]
      %v666 = vld [vmem:[%s639 + $0x138] sm:$0xff]
      %v667 = vld [vmem:[%s639 + $0x140] sm:$0xff]
      %v668 = vld [vmem:[%s639 + $0x150] sm:$0xff]
      %v669 = vld [vmem:[%s639 + $0x158] sm:$0xff]
      %v670 = vld [vmem:[%s639 + $0x168] sm:$0xff]
      %v671 = vld [vmem:[%s639 + $0x170] sm:$0xff]
      %v672 = vld [vmem:[%s639 + $0x1] sm:$0xff]
      %v673 = vld [vmem:[%s639 + $0x9] sm:$0xff]
      %v674 = vld [vmem:[%s639 + $0x19] sm:$0xff]
      %v675 = vld [vmem:[%s639 + $0x21] sm:$0xff]
      %v676 = vld [vmem:[%s639 + $0x31] sm:$0xff]
      %v677 = vld [vmem:[%s639 + $0x39] sm:$0xff]
      %v678 = vld [vmem:[%s639 + $0x49] sm:$0xff]
      %v679 = vld [vmem:[%s639 + $0x51] sm:$0xff]
      %v680 = vld [vmem:[%s639 + $0x61] sm:$0xff]
      %v681 = vld [vmem:[%s639 + $0x69] sm:$0xff]
      %v682 = vld [vmem:[%s639 + $0x79] sm:$0xff]
      %v683 = vld [vmem:[%s639 + $0x81] sm:$0xff]
      %v684 = vld [vmem:[%s639 + $0x91] sm:$0xff]
      %v685 = vld [vmem:[%s639 + $0x99] sm:$0xff]
      %v686 = vld [vmem:[%s639 + $0xa9] sm:$0xff]
      %v687 = vld [vmem:[%s639 + $0xb1] sm:$0xff]
      %v688 = vld [vmem:[%s639 + $0xc1] sm:$0xff]
      %v689 = vld [vmem:[%s639 + $0xc9] sm:$0xff]
      %v690 = vld [vmem:[%s639 + $0xd9] sm:$0xff]
      %v691 = vld [vmem:[%s639 + $0xe1] sm:$0xff]
      %v692 = vld [vmem:[%s639 + $0xf1] sm:$0xff]
      %v693 = vld [vmem:[%s639 + $0xf9] sm:$0xff]
      %v694 = vld [vmem:[%s639 + $0x109] sm:$0xff]
      %v695 = vld [vmem:[%s639 + $0x111] sm:$0xff]
      %v696 = vld [vmem:[%s639 + $0x121] sm:$0xff]
      %v697 = vld [vmem:[%s639 + $0x129] sm:$0xff]
      %v698 = vld [vmem:[%s639 + $0x139] sm:$0xff]
      %v699 = vld [vmem:[%s639 + $0x141] sm:$0xff]
      %v700 = vld [vmem:[%s639 + $0x151] sm:$0xff]
      %v701 = vld [vmem:[%s639 + $0x159] sm:$0xff]
      %v702 = vld [vmem:[%s639 + $0x169] sm:$0xff]
      %v703 = vld [vmem:[%s639 + $0x171] sm:$0xff]
      %v704 = vld [vmem:[%s639 + $0x2] sm:$0xff]
      %v705 = vld [vmem:[%s639 + $0xa] sm:$0xff]
      %v706 = vld [vmem:[%s639 + $0x1a] sm:$0xff]
      %v707 = vld [vmem:[%s639 + $0x22] sm:$0xff]
      %v708 = vld [vmem:[%s639 + $0x32] sm:$0xff]
      %v709 = vld [vmem:[%s639 + $0x3a] sm:$0xff]
      %v710 = vld [vmem:[%s639 + $0x4a] sm:$0xff]
      %v711 = vld [vmem:[%s639 + $0x52] sm:$0xff]
      %v712 = vld [vmem:[%s639 + $0x62] sm:$0xff]
      %v713 = vld [vmem:[%s639 + $0x6a] sm:$0xff]
      %v714 = vld [vmem:[%s639 + $0x7a] sm:$0xff]
      %v715 = vld [vmem:[%s639 + $0x82] sm:$0xff]
      %v716 = vld [vmem:[%s639 + $0x92] sm:$0xff]
      %v717 = vld [vmem:[%s639 + $0x9a] sm:$0xff]
      %v718 = vld [vmem:[%s639 + $0xaa] sm:$0xff]
      %v719 = vld [vmem:[%s639 + $0xb2] sm:$0xff]
      %v720 = vld [vmem:[%s639 + $0xc2] sm:$0xff]
      %v721 = vld [vmem:[%s639 + $0xca] sm:$0xff]
      %v722 = vld [vmem:[%s639 + $0xda] sm:$0xff]
      %v723 = vld [vmem:[%s639 + $0xe2] sm:$0xff]
      %v724 = vld [vmem:[%s639 + $0xf2] sm:$0xff]
      %v725 = vld [vmem:[%s639 + $0xfa] sm:$0xff]
      %v726 = vld [vmem:[%s639 + $0x10a] sm:$0xff]
      %v727 = vld [vmem:[%s639 + $0x112] sm:$0xff]
      %v728 = vld [vmem:[%s639 + $0x122] sm:$0xff]
      %v729 = vld [vmem:[%s639 + $0x12a] sm:$0xff]
      %v730 = vld [vmem:[%s639 + $0x13a] sm:$0xff]
      %v731 = vld [vmem:[%s639 + $0x142] sm:$0xff]
      %v732 = vld [vmem:[%s639 + $0x152] sm:$0xff]
      %v733 = vld [vmem:[%s639 + $0x15a] sm:$0xff]
      %v734 = vld [vmem:[%s639 + $0x16a] sm:$0xff]
      %v735 = vld [vmem:[%s639 + $0x172] sm:$0xff]
      %768 = vrot.lane.b32.xlu0 %v479, 4
      %v769 = vpop.permute.xlu0 %768
      %770 = vrot.lane.b32.xlu0 %v480, 4
      %v771 = vpop.permute.xlu0 %770
      %772 = vrot.lane.b32.xlu0 %v481, 4
      %v773 = vpop.permute.xlu0 %772
      %774 = vrot.lane.b32.xlu0 %v482, 4
      %v775 = vpop.permute.xlu0 %774
      %776 = vrot.lane.b32.xlu0 %v483, 4
      %v777 = vpop.permute.xlu0 %776
      %778 = vrot.lane.b32.xlu0 %v484, 4
      %v779 = vpop.permute.xlu0 %778
      %780 = vrot.lane.b32.xlu0 %v485, 4
      %v781 = vpop.permute.xlu0 %780
      %782 = vrot.lane.b32.xlu0 %v486, 4
      %v783 = vpop.permute.xlu0 %782
      %784 = vrot.lane.b32.xlu0 %v487, 4
      %v785 = vpop.permute.xlu0 %784
      %786 = vrot.lane.b32.xlu0 %v488, 4
      %v787 = vpop.permute.xlu0 %786
      %788 = vrot.lane.b32.xlu0 %v489, 4
      %v789 = vpop.permute.xlu0 %788
      %790 = vrot.lane.b32.xlu0 %v490, 4
      %v791 = vpop.permute.xlu0 %790
      %792 = vrot.lane.b32.xlu0 %v491, 4
      %v793 = vpop.permute.xlu0 %792
      %794 = vrot.lane.b32.xlu0 %v492, 4
      %v795 = vpop.permute.xlu0 %794
      %796 = vrot.lane.b32.xlu0 %v493, 4
      %v797 = vpop.permute.xlu0 %796
      %798 = vrot.lane.b32.xlu0 %v494, 4
      %v799 = vpop.permute.xlu0 %798
      %800 = vrot.lane.b32.xlu0 %v495, 4
      %v801 = vpop.permute.xlu0 %800
      %802 = vrot.lane.b32.xlu0 %v496, 4
      %v803 = vpop.permute.xlu0 %802
      %804 = vrot.lane.b32.xlu0 %v497, 4
      %v805 = vpop.permute.xlu0 %804
      %806 = vrot.lane.b32.xlu0 %v498, 4
      %v807 = vpop.permute.xlu0 %806
      %808 = vrot.lane.b32.xlu0 %v499, 4
      %v809 = vpop.permute.xlu0 %808
      %810 = vrot.lane.b32.xlu0 %v500, 4
      %v811 = vpop.permute.xlu0 %810
      %812 = vrot.lane.b32.xlu0 %v501, 4
      %v813 = vpop.permute.xlu0 %812
      %814 = vrot.lane.b32.xlu0 %v502, 4
      %v815 = vpop.permute.xlu0 %814
      %816 = vrot.lane.b32.xlu0 %v503, 4
      %v817 = vpop.permute.xlu0 %816
      %818 = vrot.lane.b32.xlu0 %v504, 4
      %v819 = vpop.permute.xlu0 %818
      %820 = vrot.lane.b32.xlu0 %v505, 4
      %v821 = vpop.permute.xlu0 %820
      %822 = vrot.lane.b32.xlu0 %v506, 4
      %v823 = vpop.permute.xlu0 %822
      %824 = vrot.lane.b32.xlu0 %v507, 4
      %v825 = vpop.permute.xlu0 %824
      %826 = vrot.lane.b32.xlu0 %v508, 4
      %v827 = vpop.permute.xlu0 %826
      %828 = vrot.lane.b32.xlu0 %v509, 4
      %v829 = vpop.permute.xlu0 %828
      %830 = vrot.lane.b32.xlu0 %v510, 4
      %v831 = vpop.permute.xlu0 %830
      %896 = vrot.lane.b32.xlu0 %v511, 8
      %v897 = vpop.permute.xlu0 %896
      %898 = vrot.lane.b32.xlu0 %v512, 8
      %v899 = vpop.permute.xlu0 %898
      %900 = vrot.lane.b32.xlu0 %v513, 8
      %v901 = vpop.permute.xlu0 %900
      %902 = vrot.lane.b32.xlu0 %v514, 8
      %v903 = vpop.permute.xlu0 %902
      %904 = vrot.lane.b32.xlu0 %v515, 8
      %v905 = vpop.permute.xlu0 %904
      %906 = vrot.lane.b32.xlu0 %v516, 8
      %v907 = vpop.permute.xlu0 %906
      %908 = vrot.lane.b32.xlu0 %v517, 8
      %v909 = vpop.permute.xlu0 %908
      %910 = vrot.lane.b32.xlu0 %v518, 8
      %v911 = vpop.permute.xlu0 %910
      %912 = vrot.lane.b32.xlu0 %v519, 8
      %v913 = vpop.permute.xlu0 %912
      %914 = vrot.lane.b32.xlu0 %v520, 8
      %v915 = vpop.permute.xlu0 %914
      %916 = vrot.lane.b32.xlu0 %v521, 8
      %v917 = vpop.permute.xlu0 %916
      %918 = vrot.lane.b32.xlu0 %v522, 8
      %v919 = vpop.permute.xlu0 %918
      %920 = vrot.lane.b32.xlu0 %v523, 8
      %v921 = vpop.permute.xlu0 %920
      %922 = vrot.lane.b32.xlu0 %v524, 8
      %v923 = vpop.permute.xlu0 %922
      %924 = vrot.lane.b32.xlu0 %v525, 8
      %v925 = vpop.permute.xlu0 %924
      %926 = vrot.lane.b32.xlu0 %v526, 8
      %v927 = vpop.permute.xlu0 %926
      %928 = vrot.lane.b32.xlu0 %v527, 8
      %v929 = vpop.permute.xlu0 %928
      %930 = vrot.lane.b32.xlu0 %v528, 8
      %v931 = vpop.permute.xlu0 %930
      %932 = vrot.lane.b32.xlu0 %v529, 8
      %v933 = vpop.permute.xlu0 %932
      %934 = vrot.lane.b32.xlu0 %v530, 8
      %v935 = vpop.permute.xlu0 %934
      %936 = vrot.lane.b32.xlu0 %v531, 8
      %v937 = vpop.permute.xlu0 %936
      %938 = vrot.lane.b32.xlu0 %v532, 8
      %v939 = vpop.permute.xlu0 %938
      %940 = vrot.lane.b32.xlu0 %v533, 8
      %v941 = vpop.permute.xlu0 %940
      %942 = vrot.lane.b32.xlu0 %v534, 8
      %v943 = vpop.permute.xlu0 %942
      %944 = vrot.lane.b32.xlu0 %v535, 8
      %v945 = vpop.permute.xlu0 %944
      %946 = vrot.lane.b32.xlu0 %v536, 8
      %v947 = vpop.permute.xlu0 %946
      %948 = vrot.lane.b32.xlu0 %v537, 8
      %v949 = vpop.permute.xlu0 %948
      %950 = vrot.lane.b32.xlu0 %v538, 8
      %v951 = vpop.permute.xlu0 %950
      %952 = vrot.lane.b32.xlu0 %v539, 8
      %v953 = vpop.permute.xlu0 %952
      %954 = vrot.lane.b32.xlu0 %v540, 8
      %v955 = vpop.permute.xlu0 %954
      %956 = vrot.lane.b32.xlu0 %v541, 8
      %v957 = vpop.permute.xlu0 %956
      %958 = vrot.lane.b32.xlu0 %v542, 8
      %v959 = vpop.permute.xlu0 %958
      %1024 = vrot.lane.b32.xlu0 %v543, 12
      %v1025 = vpop.permute.xlu0 %1024
      %1026 = vrot.lane.b32.xlu0 %v544, 12
      %v1027 = vpop.permute.xlu0 %1026
      %1028 = vrot.lane.b32.xlu0 %v545, 12
      %v1029 = vpop.permute.xlu0 %1028
      %1030 = vrot.lane.b32.xlu0 %v546, 12
      %v1031 = vpop.permute.xlu0 %1030
      %1032 = vrot.lane.b32.xlu0 %v547, 12
      %v1033 = vpop.permute.xlu0 %1032
      %1034 = vrot.lane.b32.xlu0 %v548, 12
      %v1035 = vpop.permute.xlu0 %1034
      %1036 = vrot.lane.b32.xlu0 %v549, 12
      %v1037 = vpop.permute.xlu0 %1036
      %1038 = vrot.lane.b32.xlu0 %v550, 12
      %v1039 = vpop.permute.xlu0 %1038
      %1040 = vrot.lane.b32.xlu0 %v551, 12
      %v1041 = vpop.permute.xlu0 %1040
      %1042 = vrot.lane.b32.xlu0 %v552, 12
      %v1043 = vpop.permute.xlu0 %1042
      %1044 = vrot.lane.b32.xlu0 %v553, 12
      %v1045 = vpop.permute.xlu0 %1044
      %1046 = vrot.lane.b32.xlu0 %v554, 12
      %v1047 = vpop.permute.xlu0 %1046
      %1048 = vrot.lane.b32.xlu0 %v555, 12
      %v1049 = vpop.permute.xlu0 %1048
      %1050 = vrot.lane.b32.xlu0 %v556, 12
      %v1051 = vpop.permute.xlu0 %1050
      %1052 = vrot.lane.b32.xlu0 %v557, 12
      %v1053 = vpop.permute.xlu0 %1052
      %1054 = vrot.lane.b32.xlu0 %v558, 12
      %v1055 = vpop.permute.xlu0 %1054
      %1056 = vrot.lane.b32.xlu0 %v559, 12
      %v1057 = vpop.permute.xlu0 %1056
      %1058 = vrot.lane.b32.xlu0 %v560, 12
      %v1059 = vpop.permute.xlu0 %1058
      %1060 = vrot.lane.b32.xlu0 %v561, 12
      %v1061 = vpop.permute.xlu0 %1060
      %1062 = vrot.lane.b32.xlu0 %v562, 12
      %v1063 = vpop.permute.xlu0 %1062
      %1064 = vrot.lane.b32.xlu0 %v563, 12
      %v1065 = vpop.permute.xlu0 %1064
      %1066 = vrot.lane.b32.xlu0 %v564, 12
      %v1067 = vpop.permute.xlu0 %1066
      %1068 = vrot.lane.b32.xlu0 %v565, 12
      %v1069 = vpop.permute.xlu0 %1068
      %1070 = vrot.lane.b32.xlu0 %v566, 12
      %v1071 = vpop.permute.xlu0 %1070
      %1072 = vrot.lane.b32.xlu0 %v567, 12
      %v1073 = vpop.permute.xlu0 %1072
      %1074 = vrot.lane.b32.xlu0 %v568, 12
      %v1075 = vpop.permute.xlu0 %1074
      %1076 = vrot.lane.b32.xlu0 %v569, 12
      %v1077 = vpop.permute.xlu0 %1076
      %1078 = vrot.lane.b32.xlu0 %v570, 12
      %v1079 = vpop.permute.xlu0 %1078
      %1080 = vrot.lane.b32.xlu0 %v571, 12
      %v1081 = vpop.permute.xlu0 %1080
      %1082 = vrot.lane.b32.xlu0 %v572, 12
      %v1083 = vpop.permute.xlu0 %1082
      %1084 = vrot.lane.b32.xlu0 %v573, 12
      %v1085 = vpop.permute.xlu0 %1084
      %1086 = vrot.lane.b32.xlu0 %v574, 12
      %v1087 = vpop.permute.xlu0 %1086
      %1152 = vrot.lane.b32.xlu0 %v575, 16
      %v1153 = vpop.permute.xlu0 %1152
      %1154 = vrot.lane.b32.xlu0 %v576, 16
      %v1155 = vpop.permute.xlu0 %1154
      %1156 = vrot.lane.b32.xlu0 %v577, 16
      %v1157 = vpop.permute.xlu0 %1156
      %1158 = vrot.lane.b32.xlu0 %v578, 16
      %v1159 = vpop.permute.xlu0 %1158
      %1160 = vrot.lane.b32.xlu0 %v579, 16
      %v1161 = vpop.permute.xlu0 %1160
      %1162 = vrot.lane.b32.xlu0 %v580, 16
      %v1163 = vpop.permute.xlu0 %1162
      %1164 = vrot.lane.b32.xlu0 %v581, 16
      %v1165 = vpop.permute.xlu0 %1164
      %1166 = vrot.lane.b32.xlu0 %v582, 16
      %v1167 = vpop.permute.xlu0 %1166
      %1168 = vrot.lane.b32.xlu0 %v583, 16
      %v1169 = vpop.permute.xlu0 %1168
      %1170 = vrot.lane.b32.xlu0 %v584, 16
      %v1171 = vpop.permute.xlu0 %1170
      %1172 = vrot.lane.b32.xlu0 %v585, 16
      %v1173 = vpop.permute.xlu0 %1172
      %1174 = vrot.lane.b32.xlu0 %v586, 16
      %v1175 = vpop.permute.xlu0 %1174
      %1176 = vrot.lane.b32.xlu0 %v587, 16
      %v1177 = vpop.permute.xlu0 %1176
      %1178 = vrot.lane.b32.xlu0 %v588, 16
      %v1179 = vpop.permute.xlu0 %1178
      %1180 = vrot.lane.b32.xlu0 %v589, 16
      %v1181 = vpop.permute.xlu0 %1180
      %1182 = vrot.lane.b32.xlu0 %v590, 16
      %v1183 = vpop.permute.xlu0 %1182
      %1184 = vrot.lane.b32.xlu0 %v591, 16
      %v1185 = vpop.permute.xlu0 %1184
      %1186 = vrot.lane.b32.xlu0 %v592, 16
      %v1187 = vpop.permute.xlu0 %1186
      %1188 = vrot.lane.b32.xlu0 %v593, 16
      %v1189 = vpop.permute.xlu0 %1188
      %1190 = vrot.lane.b32.xlu0 %v594, 16
      %v1191 = vpop.permute.xlu0 %1190
      %1192 = vrot.lane.b32.xlu0 %v595, 16
      %v1193 = vpop.permute.xlu0 %1192
      %1194 = vrot.lane.b32.xlu0 %v596, 16
      %v1195 = vpop.permute.xlu0 %1194
      %1196 = vrot.lane.b32.xlu0 %v597, 16
      %v1197 = vpop.permute.xlu0 %1196
      %1198 = vrot.lane.b32.xlu0 %v598, 16
      %v1199 = vpop.permute.xlu0 %1198
      %1200 = vrot.lane.b32.xlu0 %v599, 16
      %v1201 = vpop.permute.xlu0 %1200
      %1202 = vrot.lane.b32.xlu0 %v600, 16
      %v1203 = vpop.permute.xlu0 %1202
      %1204 = vrot.lane.b32.xlu0 %v601, 16
      %v1205 = vpop.permute.xlu0 %1204
      %1206 = vrot.lane.b32.xlu0 %v602, 16
      %v1207 = vpop.permute.xlu0 %1206
      %1208 = vrot.lane.b32.xlu0 %v603, 16
      %v1209 = vpop.permute.xlu0 %1208
      %1210 = vrot.lane.b32.xlu0 %v604, 16
      %v1211 = vpop.permute.xlu0 %1210
      %1212 = vrot.lane.b32.xlu0 %v605, 16
      %v1213 = vpop.permute.xlu0 %1212
      %1214 = vrot.lane.b32.xlu0 %v606, 16
      %v1215 = vpop.permute.xlu0 %1214
      %1280 = vrot.lane.b32.xlu0 %v607, 20
      %v1281 = vpop.permute.xlu0 %1280
      %1282 = vrot.lane.b32.xlu0 %v608, 20
      %v1283 = vpop.permute.xlu0 %1282
      %1284 = vrot.lane.b32.xlu0 %v609, 20
      %v1285 = vpop.permute.xlu0 %1284
      %1286 = vrot.lane.b32.xlu0 %v610, 20
      %v1287 = vpop.permute.xlu0 %1286
      %1288 = vrot.lane.b32.xlu0 %v611, 20
      %v1289 = vpop.permute.xlu0 %1288
      %1290 = vrot.lane.b32.xlu0 %v612, 20
      %v1291 = vpop.permute.xlu0 %1290
      %1292 = vrot.lane.b32.xlu0 %v613, 20
      %v1293 = vpop.permute.xlu0 %1292
      %1294 = vrot.lane.b32.xlu0 %v614, 20
      %v1295 = vpop.permute.xlu0 %1294
      %1296 = vrot.lane.b32.xlu0 %v615, 20
      %v1297 = vpop.permute.xlu0 %1296
      %1298 = vrot.lane.b32.xlu0 %v616, 20
      %v1299 = vpop.permute.xlu0 %1298
      %1300 = vrot.lane.b32.xlu0 %v617, 20
      %v1301 = vpop.permute.xlu0 %1300
      %1302 = vrot.lane.b32.xlu0 %v618, 20
      %v1303 = vpop.permute.xlu0 %1302
      %1304 = vrot.lane.b32.xlu0 %v619, 20
      %v1305 = vpop.permute.xlu0 %1304
      %1306 = vrot.lane.b32.xlu0 %v620, 20
      %v1307 = vpop.permute.xlu0 %1306
      %1308 = vrot.lane.b32.xlu0 %v621, 20
      %v1309 = vpop.permute.xlu0 %1308
      %1310 = vrot.lane.b32.xlu0 %v622, 20
      %v1311 = vpop.permute.xlu0 %1310
      %1312 = vrot.lane.b32.xlu0 %v623, 20
      %v1313 = vpop.permute.xlu0 %1312
      %1314 = vrot.lane.b32.xlu0 %v624, 20
      %v1315 = vpop.permute.xlu0 %1314
      %1316 = vrot.lane.b32.xlu0 %v625, 20
      %v1317 = vpop.permute.xlu0 %1316
      %1318 = vrot.lane.b32.xlu0 %v626, 20
      %v1319 = vpop.permute.xlu0 %1318
      %1320 = vrot.lane.b32.xlu0 %v627, 20
      %v1321 = vpop.permute.xlu0 %1320
      %1322 = vrot.lane.b32.xlu0 %v628, 20
      %v1323 = vpop.permute.xlu0 %1322
      %1324 = vrot.lane.b32.xlu0 %v629, 20
      %v1325 = vpop.permute.xlu0 %1324
      %1326 = vrot.lane.b32.xlu0 %v630, 20
      %v1327 = vpop.permute.xlu0 %1326
      %1328 = vrot.lane.b32.xlu0 %v631, 20
      %v1329 = vpop.permute.xlu0 %1328
      %1330 = vrot.lane.b32.xlu0 %v632, 20
      %v1331 = vpop.permute.xlu0 %1330
      %1332 = vrot.lane.b32.xlu0 %v633, 20
      %v1333 = vpop.permute.xlu0 %1332
      %1334 = vrot.lane.b32.xlu0 %v634, 20
      %v1335 = vpop.permute.xlu0 %1334
      %1336 = vrot.lane.b32.xlu0 %v635, 20
      %v1337 = vpop.permute.xlu0 %1336
      %1338 = vrot.lane.b32.xlu0 %v636, 20
      %v1339 = vpop.permute.xlu0 %1338
      %1340 = vrot.lane.b32.xlu0 %v637, 20
      %v1341 = vpop.permute.xlu0 %1340
      %1342 = vrot.lane.b32.xlu0 %v638, 20
      %v1343 = vpop.permute.xlu0 %1342
      %1408 = vrot.lane.b32.xlu0 %v640, 24
      %v1409 = vpop.permute.xlu0 %1408
      %1410 = vrot.lane.b32.xlu0 %v641, 24
      %v1411 = vpop.permute.xlu0 %1410
      %1412 = vrot.lane.b32.xlu0 %v642, 24
      %v1413 = vpop.permute.xlu0 %1412
      %1414 = vrot.lane.b32.xlu0 %v643, 24
      %v1415 = vpop.permute.xlu0 %1414
      %1416 = vrot.lane.b32.xlu0 %v644, 24
      %v1417 = vpop.permute.xlu0 %1416
      %1418 = vrot.lane.b32.xlu0 %v645, 24
      %v1419 = vpop.permute.xlu0 %1418
      %1420 = vrot.lane.b32.xlu0 %v646, 24
      %v1421 = vpop.permute.xlu0 %1420
      %1422 = vrot.lane.b32.xlu0 %v647, 24
      %v1423 = vpop.permute.xlu0 %1422
      %1424 = vrot.lane.b32.xlu0 %v648, 24
      %v1425 = vpop.permute.xlu0 %1424
      %1426 = vrot.lane.b32.xlu0 %v649, 24
      %v1427 = vpop.permute.xlu0 %1426
      %1428 = vrot.lane.b32.xlu0 %v650, 24
      %v1429 = vpop.permute.xlu0 %1428
      %1430 = vrot.lane.b32.xlu0 %v651, 24
      %v1431 = vpop.permute.xlu0 %1430
      %1432 = vrot.lane.b32.xlu0 %v652, 24
      %v1433 = vpop.permute.xlu0 %1432
      %1434 = vrot.lane.b32.xlu0 %v653, 24
      %v1435 = vpop.permute.xlu0 %1434
      %1436 = vrot.lane.b32.xlu0 %v654, 24
      %v1437 = vpop.permute.xlu0 %1436
      %1438 = vrot.lane.b32.xlu0 %v655, 24
      %v1439 = vpop.permute.xlu0 %1438
      %1440 = vrot.lane.b32.xlu0 %v656, 24
      %v1441 = vpop.permute.xlu0 %1440
      %1442 = vrot.lane.b32.xlu0 %v657, 24
      %v1443 = vpop.permute.xlu0 %1442
      %1444 = vrot.lane.b32.xlu0 %v658, 24
      %v1445 = vpop.permute.xlu0 %1444
      %1446 = vrot.lane.b32.xlu0 %v659, 24
      %v1447 = vpop.permute.xlu0 %1446
      %1448 = vrot.lane.b32.xlu0 %v660, 24
      %v1449 = vpop.permute.xlu0 %1448
      %1450 = vrot.lane.b32.xlu0 %v661, 24
      %v1451 = vpop.permute.xlu0 %1450
      %1452 = vrot.lane.b32.xlu0 %v662, 24
      %v1453 = vpop.permute.xlu0 %1452
      %1454 = vrot.lane.b32.xlu0 %v663, 24
      %v1455 = vpop.permute.xlu0 %1454
      %1456 = vrot.lane.b32.xlu0 %v664, 24
      %v1457 = vpop.permute.xlu0 %1456
      %1458 = vrot.lane.b32.xlu0 %v665, 24
      %v1459 = vpop.permute.xlu0 %1458
      %1460 = vrot.lane.b32.xlu0 %v666, 24
      %v1461 = vpop.permute.xlu0 %1460
      %1462 = vrot.lane.b32.xlu0 %v667, 24
      %v1463 = vpop.permute.xlu0 %1462
      %1464 = vrot.lane.b32.xlu0 %v668, 24
      %v1465 = vpop.permute.xlu0 %1464
      %1466 = vrot.lane.b32.xlu0 %v669, 24
      %v1467 = vpop.permute.xlu0 %1466
      %1468 = vrot.lane.b32.xlu0 %v670, 24
      %v1469 = vpop.permute.xlu0 %1468
      %1470 = vrot.lane.b32.xlu0 %v671, 24
      %v1471 = vpop.permute.xlu0 %1470
      %1536 = vrot.lane.b32.xlu0 %v672, 28
      %v1537 = vpop.permute.xlu0 %1536
      %1538 = vrot.lane.b32.xlu0 %v673, 28
      %v1539 = vpop.permute.xlu0 %1538
      %1540 = vrot.lane.b32.xlu0 %v674, 28
      %v1541 = vpop.permute.xlu0 %1540
      %1542 = vrot.lane.b32.xlu0 %v675, 28
      %v1543 = vpop.permute.xlu0 %1542
      %1544 = vrot.lane.b32.xlu0 %v676, 28
      %v1545 = vpop.permute.xlu0 %1544
      %1546 = vrot.lane.b32.xlu0 %v677, 28
      %v1547 = vpop.permute.xlu0 %1546
      %1548 = vrot.lane.b32.xlu0 %v678, 28
      %v1549 = vpop.permute.xlu0 %1548
      %1550 = vrot.lane.b32.xlu0 %v679, 28
      %v1551 = vpop.permute.xlu0 %1550
      %1552 = vrot.lane.b32.xlu0 %v680, 28
      %v1553 = vpop.permute.xlu0 %1552
      %1554 = vrot.lane.b32.xlu0 %v681, 28
      %v1555 = vpop.permute.xlu0 %1554
      %1556 = vrot.lane.b32.xlu0 %v682, 28
      %v1557 = vpop.permute.xlu0 %1556
      %1558 = vrot.lane.b32.xlu0 %v683, 28
      %v1559 = vpop.permute.xlu0 %1558
      %1560 = vrot.lane.b32.xlu0 %v684, 28
      %v1561 = vpop.permute.xlu0 %1560
      %1562 = vrot.lane.b32.xlu0 %v685, 28
      %v1563 = vpop.permute.xlu0 %1562
      %1564 = vrot.lane.b32.xlu0 %v686, 28
      %v1565 = vpop.permute.xlu0 %1564
      %1566 = vrot.lane.b32.xlu0 %v687, 28
      %v1567 = vpop.permute.xlu0 %1566
      %1568 = vrot.lane.b32.xlu0 %v688, 28
      %v1569 = vpop.permute.xlu0 %1568
      %1570 = vrot.lane.b32.xlu0 %v689, 28
      %v1571 = vpop.permute.xlu0 %1570
      %1572 = vrot.lane.b32.xlu0 %v690, 28
      %v1573 = vpop.permute.xlu0 %1572
      %1574 = vrot.lane.b32.xlu0 %v691, 28
      %v1575 = vpop.permute.xlu0 %1574
      %1576 = vrot.lane.b32.xlu0 %v692, 28
      %v1577 = vpop.permute.xlu0 %1576
      %1578 = vrot.lane.b32.xlu0 %v693, 28
      %v1579 = vpop.permute.xlu0 %1578
      %1580 = vrot.lane.b32.xlu0 %v694, 28
      %v1581 = vpop.permute.xlu0 %1580
      %1582 = vrot.lane.b32.xlu0 %v695, 28
      %v1583 = vpop.permute.xlu0 %1582
      %1584 = vrot.lane.b32.xlu0 %v696, 28
      %v1585 = vpop.permute.xlu0 %1584
      %1586 = vrot.lane.b32.xlu0 %v697, 28
      %v1587 = vpop.permute.xlu0 %1586
      %1588 = vrot.lane.b32.xlu0 %v698, 28
      %v1589 = vpop.permute.xlu0 %1588
      %1590 = vrot.lane.b32.xlu0 %v699, 28
      %v1591 = vpop.permute.xlu0 %1590
      %1592 = vrot.lane.b32.xlu0 %v700, 28
      %v1593 = vpop.permute.xlu0 %1592
      %1594 = vrot.lane.b32.xlu0 %v701, 28
      %v1595 = vpop.permute.xlu0 %1594
      %1596 = vrot.lane.b32.xlu0 %v702, 28
      %v1597 = vpop.permute.xlu0 %1596
      %1598 = vrot.lane.b32.xlu0 %v703, 28
      %v1599 = vpop.permute.xlu0 %1598
      %1664 = vrot.lane.b32.xlu0 %v704, 32
      %v1665 = vpop.permute.xlu0 %1664
      %1666 = vrot.lane.b32.xlu0 %v705, 32
      %v1667 = vpop.permute.xlu0 %1666
      %1668 = vrot.lane.b32.xlu0 %v706, 32
      %v1669 = vpop.permute.xlu0 %1668
      %1670 = vrot.lane.b32.xlu0 %v707, 32
      %v1671 = vpop.permute.xlu0 %1670
      %1672 = vrot.lane.b32.xlu0 %v708, 32
      %v1673 = vpop.permute.xlu0 %1672
      %1674 = vrot.lane.b32.xlu0 %v709, 32
      %v1675 = vpop.permute.xlu0 %1674
      %1676 = vrot.lane.b32.xlu0 %v710, 32
      %v1677 = vpop.permute.xlu0 %1676
      %1678 = vrot.lane.b32.xlu0 %v711, 32
      %v1679 = vpop.permute.xlu0 %1678
      %1680 = vrot.lane.b32.xlu0 %v712, 32
      %v1681 = vpop.permute.xlu0 %1680
      %1682 = vrot.lane.b32.xlu0 %v713, 32
      %v1683 = vpop.permute.xlu0 %1682
      %1684 = vrot.lane.b32.xlu0 %v714, 32
      %v1685 = vpop.permute.xlu0 %1684
      %1686 = vrot.lane.b32.xlu0 %v715, 32
      %v1687 = vpop.permute.xlu0 %1686
      %1688 = vrot.lane.b32.xlu0 %v716, 32
      %v1689 = vpop.permute.xlu0 %1688
      %1690 = vrot.lane.b32.xlu0 %v717, 32
      %v1691 = vpop.permute.xlu0 %1690
      %1692 = vrot.lane.b32.xlu0 %v718, 32
      %v1693 = vpop.permute.xlu0 %1692
      %1694 = vrot.lane.b32.xlu0 %v719, 32
      %v1695 = vpop.permute.xlu0 %1694
      %1696 = vrot.lane.b32.xlu0 %v720, 32
      %v1697 = vpop.permute.xlu0 %1696
      %1698 = vrot.lane.b32.xlu0 %v721, 32
      %v1699 = vpop.permute.xlu0 %1698
      %1700 = vrot.lane.b32.xlu0 %v722, 32
      %v1701 = vpop.permute.xlu0 %1700
      %1702 = vrot.lane.b32.xlu0 %v723, 32
      %v1703 = vpop.permute.xlu0 %1702
      %1704 = vrot.lane.b32.xlu0 %v724, 32
      %v1705 = vpop.permute.xlu0 %1704
      %1706 = vrot.lane.b32.xlu0 %v725, 32
      %v1707 = vpop.permute.xlu0 %1706
      %1708 = vrot.lane.b32.xlu0 %v726, 32
      %v1709 = vpop.permute.xlu0 %1708
      %1710 = vrot.lane.b32.xlu0 %v727, 32
      %v1711 = vpop.permute.xlu0 %1710
      %1712 = vrot.lane.b32.xlu0 %v728, 32
      %v1713 = vpop.permute.xlu0 %1712
      %1714 = vrot.lane.b32.xlu0 %v729, 32
      %v1715 = vpop.permute.xlu0 %1714
      %1716 = vrot.lane.b32.xlu0 %v730, 32
      %v1717 = vpop.permute.xlu0 %1716
      %1718 = vrot.lane.b32.xlu0 %v731, 32
      %v1719 = vpop.permute.xlu0 %1718
      %1720 = vrot.lane.b32.xlu0 %v732, 32
      %v1721 = vpop.permute.xlu0 %1720
      %1722 = vrot.lane.b32.xlu0 %v733, 32
      %v1723 = vpop.permute.xlu0 %1722
      %1724 = vrot.lane.b32.xlu0 %v734, 32
      %v1725 = vpop.permute.xlu0 %1724
      %1726 = vrot.lane.b32.xlu0 %v735, 32
      %v1727 = vpop.permute.xlu0 %1726
      %v1760 = vsel %vm368, %v447, %v769
      %v1761 = vsel %vm368, %v448, %v771
      %v1762 = vsel %vm368, %v449, %v773
      %v1763 = vsel %vm368, %v450, %v775
      %v1764 = vsel %vm368, %v451, %v777
      %v1765 = vsel %vm368, %v452, %v779
      %v1766 = vsel %vm368, %v453, %v781
      %v1767 = vsel %vm368, %v454, %v783
      %v1768 = vsel %vm368, %v455, %v785
      %v1769 = vsel %vm368, %v456, %v787
      %v1770 = vsel %vm368, %v457, %v789
      %v1771 = vsel %vm368, %v458, %v791
      %v1772 = vsel %vm368, %v459, %v793
      %v1773 = vsel %vm368, %v460, %v795
      %v1774 = vsel %vm368, %v461, %v797
      %v1775 = vsel %vm368, %v462, %v799
      %v1776 = vsel %vm368, %v463, %v801
      %v1777 = vsel %vm368, %v464, %v803
      %v1778 = vsel %vm368, %v465, %v805
      %v1779 = vsel %vm368, %v466, %v807
      %v1780 = vsel %vm368, %v467, %v809
      %v1781 = vsel %vm368, %v468, %v811
      %v1782 = vsel %vm368, %v469, %v813
      %v1783 = vsel %vm368, %v470, %v815
      %v1784 = vsel %vm368, %v471, %v817
      %v1785 = vsel %vm368, %v472, %v819
      %v1786 = vsel %vm368, %v473, %v821
      %v1787 = vsel %vm368, %v474, %v823
      %v1788 = vsel %vm368, %v475, %v825
      %v1789 = vsel %vm368, %v476, %v827
      %v1790 = vsel %vm368, %v477, %v829
      %v1791 = vsel %vm368, %v478, %v831
      %vm1792 = vcmask 64512
      %v1793 = vsel %vm1792, %v1760, %v897
      %v1794 = vsel %vm1792, %v1761, %v899
      %v1795 = vsel %vm1792, %v1762, %v901
      %v1796 = vsel %vm1792, %v1763, %v903
      %v1797 = vsel %vm1792, %v1764, %v905
      %v1798 = vsel %vm1792, %v1765, %v907
      %v1799 = vsel %vm1792, %v1766, %v909
      %v1800 = vsel %vm1792, %v1767, %v911
      %v1801 = vsel %vm1792, %v1768, %v913
      %v1802 = vsel %vm1792, %v1769, %v915
      %v1803 = vsel %vm1792, %v1770, %v917
      %v1804 = vsel %vm1792, %v1771, %v919
      %v1805 = vsel %vm1792, %v1772, %v921
      %v1806 = vsel %vm1792, %v1773, %v923
      %v1807 = vsel %vm1792, %v1774, %v925
      %v1808 = vsel %vm1792, %v1775, %v927
      %v1809 = vsel %vm1792, %v1776, %v929
      %v1810 = vsel %vm1792, %v1777, %v931
      %v1811 = vsel %vm1792, %v1778, %v933
      %v1812 = vsel %vm1792, %v1779, %v935
      %v1813 = vsel %vm1792, %v1780, %v937
      %v1814 = vsel %vm1792, %v1781, %v939
      %v1815 = vsel %vm1792, %v1782, %v941
      %v1816 = vsel %vm1792, %v1783, %v943
      %v1817 = vsel %vm1792, %v1784, %v945
      %v1818 = vsel %vm1792, %v1785, %v947
      %v1819 = vsel %vm1792, %v1786, %v949
      %v1820 = vsel %vm1792, %v1787, %v951
      %v1821 = vsel %vm1792, %v1788, %v953
      %v1822 = vsel %vm1792, %v1789, %v955
      %v1823 = vsel %vm1792, %v1790, %v957
      %v1824 = vsel %vm1792, %v1791, %v959
      %vm1825 = vcmask 97280
      %v1826 = vsel %vm1825, %v1793, %v1025
      %v1827 = vsel %vm1825, %v1794, %v1027
      %v1828 = vsel %vm1825, %v1795, %v1029
      %v1829 = vsel %vm1825, %v1796, %v1031
      %v1830 = vsel %vm1825, %v1797, %v1033
      %v1831 = vsel %vm1825, %v1798, %v1035
      %v1832 = vsel %vm1825, %v1799, %v1037
      %v1833 = vsel %vm1825, %v1800, %v1039
      %v1834 = vsel %vm1825, %v1801, %v1041
      %v1835 = vsel %vm1825, %v1802, %v1043
      %v1836 = vsel %vm1825, %v1803, %v1045
      %v1837 = vsel %vm1825, %v1804, %v1047
      %v1838 = vsel %vm1825, %v1805, %v1049
      %v1839 = vsel %vm1825, %v1806, %v1051
      %v1840 = vsel %vm1825, %v1807, %v1053
      %v1841 = vsel %vm1825, %v1808, %v1055
      %v1842 = vsel %vm1825, %v1809, %v1057
      %v1843 = vsel %vm1825, %v1810, %v1059
      %v1844 = vsel %vm1825, %v1811, %v1061
      %v1845 = vsel %vm1825, %v1812, %v1063
      %v1846 = vsel %vm1825, %v1813, %v1065
      %v1847 = vsel %vm1825, %v1814, %v1067
      %v1848 = vsel %vm1825, %v1815, %v1069
      %v1849 = vsel %vm1825, %v1816, %v1071
      %v1850 = vsel %vm1825, %v1817, %v1073
      %v1851 = vsel %vm1825, %v1818, %v1075
      %v1852 = vsel %vm1825, %v1819, %v1077
      %v1853 = vsel %vm1825, %v1820, %v1079
      %v1854 = vsel %vm1825, %v1821, %v1081
      %v1855 = vsel %vm1825, %v1822, %v1083
      %v1856 = vsel %vm1825, %v1823, %v1085
      %v1857 = vsel %vm1825, %v1824, %v1087
      %vm1858 = vcmask 130048
      %v1859 = vsel %vm1858, %v1826, %v1153
      %v1860 = vsel %vm1858, %v1827, %v1155
      %v1861 = vsel %vm1858, %v1828, %v1157
      %v1862 = vsel %vm1858, %v1829, %v1159
      %v1863 = vsel %vm1858, %v1830, %v1161
      %v1864 = vsel %vm1858, %v1831, %v1163
      %v1865 = vsel %vm1858, %v1832, %v1165
      %v1866 = vsel %vm1858, %v1833, %v1167
      %v1867 = vsel %vm1858, %v1834, %v1169
      %v1868 = vsel %vm1858, %v1835, %v1171
      %v1869 = vsel %vm1858, %v1836, %v1173
      %v1870 = vsel %vm1858, %v1837, %v1175
      %v1871 = vsel %vm1858, %v1838, %v1177
      %v1872 = vsel %vm1858, %v1839, %v1179
      %v1873 = vsel %vm1858, %v1840, %v1181
      %v1874 = vsel %vm1858, %v1841, %v1183
      %v1875 = vsel %vm1858, %v1842, %v1185
      %v1876 = vsel %vm1858, %v1843, %v1187
      %v1877 = vsel %vm1858, %v1844, %v1189
      %v1878 = vsel %vm1858, %v1845, %v1191
      %v1879 = vsel %vm1858, %v1846, %v1193
      %v1880 = vsel %vm1858, %v1847, %v1195
      %v1881 = vsel %vm1858, %v1848, %v1197
      %v1882 = vsel %vm1858, %v1849, %v1199
      %v1883 = vsel %vm1858, %v1850, %v1201
      %v1884 = vsel %vm1858, %v1851, %v1203
      %v1885 = vsel %vm1858, %v1852, %v1205
      %v1886 = vsel %vm1858, %v1853, %v1207
      %v1887 = vsel %vm1858, %v1854, %v1209
      %v1888 = vsel %vm1858, %v1855, %v1211
      %v1889 = vsel %vm1858, %v1856, %v1213
      %v1890 = vsel %vm1858, %v1857, %v1215
      %vm1891 = vcmask 162816
      %v1892 = vsel %vm1891, %v1859, %v1281
      %v1893 = vsel %vm1891, %v1860, %v1283
      %v1894 = vsel %vm1891, %v1861, %v1285
      %v1895 = vsel %vm1891, %v1862, %v1287
      %v1896 = vsel %vm1891, %v1863, %v1289
      %v1897 = vsel %vm1891, %v1864, %v1291
      %v1898 = vsel %vm1891, %v1865, %v1293
      %v1899 = vsel %vm1891, %v1866, %v1295
      %v1900 = vsel %vm1891, %v1867, %v1297
      %v1901 = vsel %vm1891, %v1868, %v1299
      %v1902 = vsel %vm1891, %v1869, %v1301
      %v1903 = vsel %vm1891, %v1870, %v1303
      %v1904 = vsel %vm1891, %v1871, %v1305
      %v1905 = vsel %vm1891, %v1872, %v1307
      %v1906 = vsel %vm1891, %v1873, %v1309
      %v1907 = vsel %vm1891, %v1874, %v1311
      %v1908 = vsel %vm1891, %v1875, %v1313
      %v1909 = vsel %vm1891, %v1876, %v1315
      %v1910 = vsel %vm1891, %v1877, %v1317
      %v1911 = vsel %vm1891, %v1878, %v1319
      %v1912 = vsel %vm1891, %v1879, %v1321
      %v1913 = vsel %vm1891, %v1880, %v1323
      %v1914 = vsel %vm1891, %v1881, %v1325
      %v1915 = vsel %vm1891, %v1882, %v1327
      %v1916 = vsel %vm1891, %v1883, %v1329
      %v1917 = vsel %vm1891, %v1884, %v1331
      %v1918 = vsel %vm1891, %v1885, %v1333
      %v1919 = vsel %vm1891, %v1886, %v1335
      %v1920 = vsel %vm1891, %v1887, %v1337
      %v1921 = vsel %vm1891, %v1888, %v1339
      %v1922 = vsel %vm1891, %v1889, %v1341
      %v1923 = vsel %vm1891, %v1890, %v1343
      %vm1924 = vcmask 195584
      %v1925 = vsel %vm1924, %v1892, %v1409
      %v1926 = vsel %vm1924, %v1893, %v1411
      %v1927 = vsel %vm1924, %v1894, %v1413
      %v1928 = vsel %vm1924, %v1895, %v1415
      %v1929 = vsel %vm1924, %v1896, %v1417
      %v1930 = vsel %vm1924, %v1897, %v1419
      %v1931 = vsel %vm1924, %v1898, %v1421
      %v1932 = vsel %vm1924, %v1899, %v1423
      %v1933 = vsel %vm1924, %v1900, %v1425
      %v1934 = vsel %vm1924, %v1901, %v1427
      %v1935 = vsel %vm1924, %v1902, %v1429
      %v1936 = vsel %vm1924, %v1903, %v1431
      %v1937 = vsel %vm1924, %v1904, %v1433
      %v1938 = vsel %vm1924, %v1905, %v1435
      %v1939 = vsel %vm1924, %v1906, %v1437
      %v1940 = vsel %vm1924, %v1907, %v1439
      %v1941 = vsel %vm1924, %v1908, %v1441
      %v1942 = vsel %vm1924, %v1909, %v1443
      %v1943 = vsel %vm1924, %v1910, %v1445
      %v1944 = vsel %vm1924, %v1911, %v1447
      %v1945 = vsel %vm1924, %v1912, %v1449
      %v1946 = vsel %vm1924, %v1913, %v1451
      %v1947 = vsel %vm1924, %v1914, %v1453
      %v1948 = vsel %vm1924, %v1915, %v1455
      %v1949 = vsel %vm1924, %v1916, %v1457
      %v1950 = vsel %vm1924, %v1917, %v1459
      %v1951 = vsel %vm1924, %v1918, %v1461
      %v1952 = vsel %vm1924, %v1919, %v1463
      %v1953 = vsel %vm1924, %v1920, %v1465
      %v1954 = vsel %vm1924, %v1921, %v1467
      %v1955 = vsel %vm1924, %v1922, %v1469
      %v1956 = vsel %vm1924, %v1923, %v1471
      %vm1957 = vcmask 228352
      %v1958 = vsel %vm1957, %v1925, %v1537
      %v1959 = vsel %vm1957, %v1926, %v1539
      %v1960 = vsel %vm1957, %v1927, %v1541
      %v1961 = vsel %vm1957, %v1928, %v1543
      %v1962 = vsel %vm1957, %v1929, %v1545
      %v1963 = vsel %vm1957, %v1930, %v1547
      %v1964 = vsel %vm1957, %v1931, %v1549
      %v1965 = vsel %vm1957, %v1932, %v1551
      %v1966 = vsel %vm1957, %v1933, %v1553
      %v1967 = vsel %vm1957, %v1934, %v1555
      %v1968 = vsel %vm1957, %v1935, %v1557
      %v1969 = vsel %vm1957, %v1936, %v1559
      %v1970 = vsel %vm1957, %v1937, %v1561
      %v1971 = vsel %vm1957, %v1938, %v1563
      %v1972 = vsel %vm1957, %v1939, %v1565
      %v1973 = vsel %vm1957, %v1940, %v1567
      %v1974 = vsel %vm1957, %v1941, %v1569
      %v1975 = vsel %vm1957, %v1942, %v1571
      %v1976 = vsel %vm1957, %v1943, %v1573
      %v1977 = vsel %vm1957, %v1944, %v1575
      %v1978 = vsel %vm1957, %v1945, %v1577
      %v1979 = vsel %vm1957, %v1946, %v1579
      %v1980 = vsel %vm1957, %v1947, %v1581
      %v1981 = vsel %vm1957, %v1948, %v1583
      %v1982 = vsel %vm1957, %v1949, %v1585
      %v1983 = vsel %vm1957, %v1950, %v1587
      %v1984 = vsel %vm1957, %v1951, %v1589
      %v1985 = vsel %vm1957, %v1952, %v1591
      %v1986 = vsel %vm1957, %v1953, %v1593
      %v1987 = vsel %vm1957, %v1954, %v1595
      %v1988 = vsel %vm1957, %v1955, %v1597
      %v1989 = vsel %vm1957, %v1956, %v1599
      %vm1990 = vcmask 261120
      %v1991 = vsel %vm1990, %v1958, %v1665
      %v1992 = vsel %vm1990, %v1959, %v1667
      %v1993 = vsel %vm1990, %v1960, %v1669
      %v1994 = vsel %vm1990, %v1961, %v1671
      %v1995 = vsel %vm1990, %v1962, %v1673
      %v1996 = vsel %vm1990, %v1963, %v1675
      %v1997 = vsel %vm1990, %v1964, %v1677
      %v1998 = vsel %vm1990, %v1965, %v1679
      %v1999 = vsel %vm1990, %v1966, %v1681
      %v2000 = vsel %vm1990, %v1967, %v1683
      %v2001 = vsel %vm1990, %v1968, %v1685
      %v2002 = vsel %vm1990, %v1969, %v1687
      %v2003 = vsel %vm1990, %v1970, %v1689
      %v2004 = vsel %vm1990, %v1971, %v1691
      %v2005 = vsel %vm1990, %v1972, %v1693
      %v2006 = vsel %vm1990, %v1973, %v1695
      %v2007 = vsel %vm1990, %v1974, %v1697
      %v2008 = vsel %vm1990, %v1975, %v1699
      %v2009 = vsel %vm1990, %v1976, %v1701
      %v2010 = vsel %vm1990, %v1977, %v1703
      %v2011 = vsel %vm1990, %v1978, %v1705
      %v2012 = vsel %vm1990, %v1979, %v1707
      %v2013 = vsel %vm1990, %v1980, %v1709
      %v2014 = vsel %vm1990, %v1981, %v1711
      %v2015 = vsel %vm1990, %v1982, %v1713
      %v2016 = vsel %vm1990, %v1983, %v1715
      %v2017 = vsel %vm1990, %v1984, %v1717
      %v2018 = vsel %vm1990, %v1985, %v1719
      %v2019 = vsel %vm1990, %v1986, %v1721
      %v2020 = vsel %vm1990, %v1987, %v1723
      %v2021 = vsel %vm1990, %v1988, %v1725
      %v2022 = vsel %vm1990, %v1989, %v1727
      %v2023 = vpack.c.bf16 %v1992, %v1991
      %v2024 = vpack.c.bf16 %v1994, %v1993
      %v2025 = vpack.c.bf16 %v1996, %v1995
      %v2026 = vpack.c.bf16 %v1998, %v1997
      %v2027 = vpack.c.bf16 %v2000, %v1999
      %v2028 = vpack.c.bf16 %v2002, %v2001
      %v2029 = vpack.c.bf16 %v2004, %v2003
      %v2030 = vpack.c.bf16 %v2006, %v2005
      %v2031 = vpack.c.bf16 %v2008, %v2007
      %v2032 = vpack.c.bf16 %v2010, %v2009
      %v2033 = vpack.c.bf16 %v2012, %v2011
      %v2034 = vpack.c.bf16 %v2014, %v2013
      %v2035 = vpack.c.bf16 %v2016, %v2015
      %v2036 = vpack.c.bf16 %v2018, %v2017
      %v2037 = vpack.c.bf16 %v2020, %v2019
      %v2038 = vpack.c.bf16 %v2022, %v2021
      %v2039 = vld [vmem:[%s1] sm:$0xf]
      %v2040 = vld [vmem:[%s1 + $0x4] sm:$0xf]
      %v2041 = vld [vmem:[%s1 + $0x8] sm:$0xf]
      %v2042 = vld [vmem:[%s1 + $0xc] sm:$0xf]
      %v2043 = vld [vmem:[%s1 + $0x10] sm:$0x3]
      %v2044 = vld [vmem:[%s2] sm:$0x1]
      %v2046 = vlaneseq
      %v2047 = vshrl.u32 %v2046, 7
      %v2048 = vsub.s32 0, %v2047
      %v2049 = vrot.slane %v2044, %v2048
      %v2056 = vunpack.c.l.b16 %v2039
      %v2057 = vunpack.c.l.b16 %v2040
      %v2058 = vunpack.c.l.b16 %v2041
      %v2059 = vunpack.c.l.b16 %v2042
      %v2060 = vunpack.c.l.b16 %v2043
      %v2061 = vpack.c.b16 %v2057, %v2056
      %v2062 = vpack.c.b16 %v2059, %v2058
      %v2063 = vpack.c.b16 %v2060, %v2060
      %vm2066 = vcmask 293888
      %v2068 = vsel %vm2066, %v2023, 0
      %v2071 = vsel %vm2066, %v2024, 0
      %v2074 = vsel %vm2066, %v2025, 0
      %v2077 = vsel %vm2066, %v2026, 0
      %v2080 = vsel %vm2066, %v2027, 0
      %v2083 = vsel %vm2066, %v2028, 0
      %v2086 = vsel %vm2066, %v2029, 0
      %v2089 = vsel %vm2066, %v2030, 0
      %v2092 = vsel %vm2066, %v2031, 0
      %v2095 = vsel %vm2066, %v2032, 0
      %v2098 = vsel %vm2066, %v2033, 0
      %v2101 = vsel %vm2066, %v2034, 0
      %v2104 = vsel %vm2066, %v2035, 0
      %v2107 = vsel %vm2066, %v2036, 0
      %v2110 = vsel %vm2066, %v2037, 0
      %v2113 = vsel %vm2066, %v2038, 0
      %vm2115 = vcmask 1041408
      %v2117 = vsel %vm2115, %v2063, 0
      %2119 = vmatprep.subr.bf16.mxu0 0
      %2120 = vmatpush1.bf16.msra.mxu0 %v2061
      %2121 = vmatprep.subr.bf16.mxu0 0
      %2122 = vmatpush1.bf16.msra.mxu0 %v2062
      %2123 = vmatprep.subr.bf16.mxu0 0
      %2124 = vmatpush1.bf16.msra.mxu0 %v2117
      %2125 = vmatprep.subr.bf16.mxu0 0
      %2126 = vmatpush1.bf16.msra.mxu0 0
      %2127 = vmatprep.subr.bf16.mxu0 0
      %2128 = vmatpush1.bf16.msra.mxu0 0
      %2129 = vmatprep.subr.bf16.mxu0 0
      %2130 = vmatpush1.bf16.msra.mxu0 0
      %2131 = vmatprep.subr.bf16.mxu0 0
      %2132 = vmatpush1.bf16.msra.mxu0 0
      %2133 = vmatprep.subr.bf16.mxu0 0
      %2134 = vmatpush1.bf16.msra.mxu0 0
      %2135 = vmatprep.subr.bf16.mxu0 0
      %2136 = vmatpush1.bf16.msra.mxu0 0
      %2137 = vmatprep.subr.bf16.mxu0 0
      %2138 = vmatpush1.bf16.msra.mxu0 0
      %2139 = vmatprep.subr.bf16.mxu0 0
      %2140 = vmatpush1.bf16.msra.mxu0 0
      %2141 = vmatprep.subr.bf16.mxu0 0
      %2142 = vmatpush1.bf16.msra.mxu0 0
      %2143 = vmatprep.subr.bf16.mxu0 0
      %2144 = vmatpush1.bf16.msra.mxu0 0
      %2145 = vmatprep.subr.bf16.mxu0 0
      %2146 = vmatpush1.bf16.msra.mxu0 0
      %2147 = vmatprep.subr.bf16.mxu0 0
      %2148 = vmatpush1.bf16.msra.mxu0 0
      %2149 = vmatprep.subr.bf16.mxu0 0
      %2150 = vmatpush1.bf16.msra.mxu0 0
      %2151 = vmatprep.mubr.bf16.mxu0 0
      %2152 = vmatmul.mubr.bf16.gmra.mrb[0].mxu0 %v2068
      %v2153 = vpop.f32.mrb[0].mxu0
      %v2154 = vadd.f32 %v2049, %v2153
      %v2155 = vpop.f32.mrb[0].mxu0
      %v2156 = vpop.f32.mrb[0].mxu0
      %v2157 = vadd.f32 %v2049, %v2156
      %v2158 = vpop.f32.mrb[0].mxu0
      %2159 = vmatprep.mubr.bf16.mxu0 0
      %2160 = vmatmul.mubr.bf16.gmra.mrb[0].mxu0 %v2071
      %v2161 = vpop.f32.mrb[0].mxu0
      %v2162 = vadd.f32 %v2049, %v2161
      %v2163 = vpop.f32.mrb[0].mxu0
      %v2164 = vpop.f32.mrb[0].mxu0
      %v2165 = vadd.f32 %v2049, %v2164
      %v2166 = vpop.f32.mrb[0].mxu0
      %2167 = vmatprep.mubr.bf16.mxu0 0
      %2168 = vmatmul.mubr.bf16.gmra.mrb[0].mxu0 %v2074
      %v2169 = vpop.f32.mrb[0].mxu0
      %v2170 = vadd.f32 %v2049, %v2169
      %v2171 = vpop.f32.mrb[0].mxu0
      %v2172 = vpop.f32.mrb[0].mxu0
      %v2173 = vadd.f32 %v2049, %v2172
      %v2174 = vpop.f32.mrb[0].mxu0
      %2175 = vmatprep.mubr.bf16.mxu0 0
      %2176 = vmatmul.mubr.bf16.gmra.mrb[0].mxu0 %v2077
      %v2177 = vpop.f32.mrb[0].mxu0
      %v2178 = vadd.f32 %v2049, %v2177
      %v2179 = vpop.f32.mrb[0].mxu0
      %v2180 = vpop.f32.mrb[0].mxu0
      %v2181 = vadd.f32 %v2049, %v2180
      %v2182 = vpop.f32.mrb[0].mxu0
      %2183 = vmatprep.mubr.bf16.mxu0 0
      %2184 = vmatmul.mubr.bf16.gmra.mrb[0].mxu0 %v2080
      %v2185 = vpop.f32.mrb[0].mxu0
      %v2186 = vadd.f32 %v2049, %v2185
      %v2187 = vpop.f32.mrb[0].mxu0
      %v2188 = vpop.f32.mrb[0].mxu0
      %v2189 = vadd.f32 %v2049, %v2188
      %v2190 = vpop.f32.mrb[0].mxu0
      %2191 = vmatprep.mubr.bf16.mxu0 0
      %2192 = vmatmul.mubr.bf16.gmra.mrb[0].mxu0 %v2083
      %v2193 = vpop.f32.mrb[0].mxu0
      %v2194 = vadd.f32 %v2049, %v2193
      %v2195 = vpop.f32.mrb[0].mxu0
      %v2196 = vpop.f32.mrb[0].mxu0
      %v2197 = vadd.f32 %v2049, %v2196
      %v2198 = vpop.f32.mrb[0].mxu0
      %2199 = vmatprep.mubr.bf16.mxu0 0
      %2200 = vmatmul.mubr.bf16.gmra.mrb[0].mxu0 %v2086
      %v2201 = vpop.f32.mrb[0].mxu0
      %v2202 = vadd.f32 %v2049, %v2201
      %v2203 = vpop.f32.mrb[0].mxu0
      %v2204 = vpop.f32.mrb[0].mxu0
      %v2205 = vadd.f32 %v2049, %v2204
      %v2206 = vpop.f32.mrb[0].mxu0
      %2207 = vmatprep.mubr.bf16.mxu0 0
      %2208 = vmatmul.mubr.bf16.gmra.mrb[0].mxu0 %v2089
      %v2209 = vpop.f32.mrb[0].mxu0
      %v2210 = vadd.f32 %v2049, %v2209
      %v2211 = vpop.f32.mrb[0].mxu0
      %v2212 = vpop.f32.mrb[0].mxu0
      %v2213 = vadd.f32 %v2049, %v2212
      %v2214 = vpop.f32.mrb[0].mxu0
      %2215 = vmatprep.mubr.bf16.mxu0 0
      %2216 = vmatmul.mubr.bf16.gmra.mrb[0].mxu0 %v2092
      %v2217 = vpop.f32.mrb[0].mxu0
      %v2218 = vadd.f32 %v2049, %v2217
      %v2219 = vpop.f32.mrb[0].mxu0
      %v2220 = vpop.f32.mrb[0].mxu0
      %v2221 = vadd.f32 %v2049, %v2220
      %v2222 = vpop.f32.mrb[0].mxu0
      %2223 = vmatprep.mubr.bf16.mxu0 0
      %2224 = vmatmul.mubr.bf16.gmra.mrb[0].mxu0 %v2095
      %v2225 = vpop.f32.mrb[0].mxu0
      %v2226 = vadd.f32 %v2049, %v2225
      %v2227 = vpop.f32.mrb[0].mxu0
      %v2228 = vpop.f32.mrb[0].mxu0
      %v2229 = vadd.f32 %v2049, %v2228
      %v2230 = vpop.f32.mrb[0].mxu0
      %2231 = vmatprep.mubr.bf16.mxu0 0
      %2232 = vmatmul.mubr.bf16.gmra.mrb[0].mxu0 %v2098
      %v2233 = vpop.f32.mrb[0].mxu0
      %v2234 = vadd.f32 %v2049, %v2233
      %v2235 = vpop.f32.mrb[0].mxu0
      %v2236 = vpop.f32.mrb[0].mxu0
      %v2237 = vadd.f32 %v2049, %v2236
      %v2238 = vpop.f32.mrb[0].mxu0
      %2239 = vmatprep.mubr.bf16.mxu0 0
      %2240 = vmatmul.mubr.bf16.gmra.mrb[0].mxu0 %v2101
      %v2241 = vpop.f32.mrb[0].mxu0
      %v2242 = vadd.f32 %v2049, %v2241
      %v2243 = vpop.f32.mrb[0].mxu0
      %v2244 = vpop.f32.mrb[0].mxu0
      %v2245 = vadd.f32 %v2049, %v2244
      %v2246 = vpop.f32.mrb[0].mxu0
      %2247 = vmatprep.mubr.bf16.mxu0 0
      %2248 = vmatmul.mubr.bf16.gmra.mrb[0].mxu0 %v2104
      %v2249 = vpop.f32.mrb[0].mxu0
      %v2250 = vadd.f32 %v2049, %v2249
      %v2251 = vpop.f32.mrb[0].mxu0
      %v2252 = vpop.f32.mrb[0].mxu0
      %v2253 = vadd.f32 %v2049, %v2252
      %v2254 = vpop.f32.mrb[0].mxu0
      %2255 = vmatprep.mubr.bf16.mxu0 0
      %2256 = vmatmul.mubr.bf16.gmra.mrb[0].mxu0 %v2107
      %v2257 = vpop.f32.mrb[0].mxu0
      %v2258 = vadd.f32 %v2049, %v2257
      %v2259 = vpop.f32.mrb[0].mxu0
      %v2260 = vpop.f32.mrb[0].mxu0
      %v2261 = vadd.f32 %v2049, %v2260
      %v2262 = vpop.f32.mrb[0].mxu0
      %2263 = vmatprep.mubr.bf16.mxu0 0
      %2264 = vmatmul.mubr.bf16.gmra.mrb[0].mxu0 %v2110
      %v2265 = vpop.f32.mrb[0].mxu0
      %v2266 = vadd.f32 %v2049, %v2265
      %v2267 = vpop.f32.mrb[0].mxu0
      %v2268 = vpop.f32.mrb[0].mxu0
      %v2269 = vadd.f32 %v2049, %v2268
      %v2270 = vpop.f32.mrb[0].mxu0
      %2271 = vmatprep.mubr.bf16.mxu0 0
      %2272 = vmatmul.mubr.bf16.gmra.mrb[0].mxu0 %v2113
      %v2273 = vpop.f32.mrb[0].mxu0
      %v2274 = vadd.f32 %v2049, %v2273
      %v2275 = vpop.f32.mrb[0].mxu0
      %v2276 = vpop.f32.mrb[0].mxu0
      %v2277 = vadd.f32 %v2049, %v2276
      %v2278 = vpop.f32.mrb[0].mxu0
      %2279 = vdwg.mxu0
      %vm2280 = vcmp.ge.f32.partialorder %v2154, 0.0
      %vm2281 = vcmp.ge.f32.partialorder %v2157, 0.0
      %vm2282 = vcmp.ge.f32.partialorder %v2162, 0.0
      %vm2283 = vcmp.ge.f32.partialorder %v2165, 0.0
      %vm2284 = vcmp.ge.f32.partialorder %v2170, 0.0
      %vm2285 = vcmp.ge.f32.partialorder %v2173, 0.0
      %vm2286 = vcmp.ge.f32.partialorder %v2178, 0.0
      %vm2287 = vcmp.ge.f32.partialorder %v2181, 0.0
      %vm2288 = vcmp.ge.f32.partialorder %v2186, 0.0
      %vm2289 = vcmp.ge.f32.partialorder %v2189, 0.0
      %vm2290 = vcmp.ge.f32.partialorder %v2194, 0.0
      %vm2291 = vcmp.ge.f32.partialorder %v2197, 0.0
      %vm2292 = vcmp.ge.f32.partialorder %v2202, 0.0
      %vm2293 = vcmp.ge.f32.partialorder %v2205, 0.0
      %vm2294 = vcmp.ge.f32.partialorder %v2210, 0.0
      %vm2295 = vcmp.ge.f32.partialorder %v2213, 0.0
      %vm2296 = vcmp.ge.f32.partialorder %v2218, 0.0
      %vm2297 = vcmp.ge.f32.partialorder %v2221, 0.0
      %vm2298 = vcmp.ge.f32.partialorder %v2226, 0.0
      %vm2299 = vcmp.ge.f32.partialorder %v2229, 0.0
      %vm2300 = vcmp.ge.f32.partialorder %v2234, 0.0
      %vm2301 = vcmp.ge.f32.partialorder %v2237, 0.0
      %vm2302 = vcmp.ge.f32.partialorder %v2242, 0.0
      %vm2303 = vcmp.ge.f32.partialorder %v2245, 0.0
      %vm2304 = vcmp.ge.f32.partialorder %v2250, 0.0
      %vm2305 = vcmp.ge.f32.partialorder %v2253, 0.0
      %vm2306 = vcmp.ge.f32.partialorder %v2258, 0.0
      %vm2307 = vcmp.ge.f32.partialorder %v2261, 0.0
      %vm2308 = vcmp.ge.f32.partialorder %v2266, 0.0
      %vm2309 = vcmp.ge.f32.partialorder %v2269, 0.0
      %vm2310 = vcmp.ge.f32.partialorder %v2274, 0.0
      %vm2311 = vcmp.ge.f32.partialorder %v2277, 0.0
      %v2312 = vmul.f32 %v2154, 0.01
      %v2313 = vmul.f32 %v2157, 0.01
      %v2314 = vmul.f32 %v2162, 0.01
      %v2315 = vmul.f32 %v2165, 0.01
      %v2316 = vmul.f32 %v2170, 0.01
      %v2317 = vmul.f32 %v2173, 0.01
      %v2318 = vmul.f32 %v2178, 0.01
      %v2319 = vmul.f32 %v2181, 0.01
      %v2320 = vmul.f32 %v2186, 0.01
      %v2321 = vmul.f32 %v2189, 0.01
      %v2322 = vmul.f32 %v2194, 0.01
      %v2323 = vmul.f32 %v2197, 0.01
      %v2324 = vmul.f32 %v2202, 0.01
      %v2325 = vmul.f32 %v2205, 0.01
      %v2326 = vmul.f32 %v2210, 0.01
      %v2327 = vmul.f32 %v2213, 0.01
      %v2328 = vmul.f32 %v2218, 0.01
      %v2329 = vmul.f32 %v2221, 0.01
      %v2330 = vmul.f32 %v2226, 0.01
      %v2331 = vmul.f32 %v2229, 0.01
      %v2332 = vmul.f32 %v2234, 0.01
      %v2333 = vmul.f32 %v2237, 0.01
      %v2334 = vmul.f32 %v2242, 0.01
      %v2335 = vmul.f32 %v2245, 0.01
      %v2336 = vmul.f32 %v2250, 0.01
      %v2337 = vmul.f32 %v2253, 0.01
      %v2338 = vmul.f32 %v2258, 0.01
      %v2339 = vmul.f32 %v2261, 0.01
      %v2340 = vmul.f32 %v2266, 0.01
      %v2341 = vmul.f32 %v2269, 0.01
      %v2342 = vmul.f32 %v2274, 0.01
      %v2343 = vmul.f32 %v2277, 0.01
      %v2344 = vsel %vm2280, %v2154, %v2312
      %v2345 = vsel %vm2281, %v2157, %v2313
      %v2346 = vsel %vm2282, %v2162, %v2314
      %v2347 = vsel %vm2283, %v2165, %v2315
      %v2348 = vsel %vm2284, %v2170, %v2316
      %v2349 = vsel %vm2285, %v2173, %v2317
      %v2350 = vsel %vm2286, %v2178, %v2318
      %v2351 = vsel %vm2287, %v2181, %v2319
      %v2352 = vsel %vm2288, %v2186, %v2320
      %v2353 = vsel %vm2289, %v2189, %v2321
      %v2354 = vsel %vm2290, %v2194, %v2322
      %v2355 = vsel %vm2291, %v2197, %v2323
      %v2356 = vsel %vm2292, %v2202, %v2324
      %v2357 = vsel %vm2293, %v2205, %v2325
      %v2358 = vsel %vm2294, %v2210, %v2326
      %v2359 = vsel %vm2295, %v2213, %v2327
      %v2360 = vsel %vm2296, %v2218, %v2328
      %v2361 = vsel %vm2297, %v2221, %v2329
      %v2362 = vsel %vm2298, %v2226, %v2330
      %v2363 = vsel %vm2299, %v2229, %v2331
      %v2364 = vsel %vm2300, %v2234, %v2332
      %v2365 = vsel %vm2301, %v2237, %v2333
      %v2366 = vsel %vm2302, %v2242, %v2334
      %v2367 = vsel %vm2303, %v2245, %v2335
      %v2368 = vsel %vm2304, %v2250, %v2336
      %v2369 = vsel %vm2305, %v2253, %v2337
      %v2370 = vsel %vm2306, %v2258, %v2338
      %v2371 = vsel %vm2307, %v2261, %v2339
      %v2372 = vsel %vm2308, %v2266, %v2340
      %v2373 = vsel %vm2309, %v2269, %v2341
      %v2374 = vsel %vm2310, %v2274, %v2342
      %v2375 = vsel %vm2311, %v2277, %v2343
      %2376 = vst.msk [vmem:[#allocation3] sm:$0xff] %vm1792, 0.0
      %2377 = vst.msk [vmem:[#allocation3 + $0x8] sm:$0xff] %vm1792, 0.0
      %vm2378 = vcmask 58368
      %2379 = vst.msk [vmem:[#allocation3 + $0x10] sm:$0x3] %vm2378, 0.0
      %s2380 = scalar_lea.vmem [#allocation3], 408
      %2381 = vst.msk [vmem:[%s2380] sm:$0xff] %vm1792, 0.0
      %2382 = vst.msk [vmem:[%s2380 + $0x8] sm:$0xff] %vm1792, 0.0
      %2383 = vst.msk [vmem:[%s2380 + $0x10] sm:$0x3] %vm2378, 0.0
      %vm2384 = vcmask 57344
      %2385 = vst.msk [vmem:[#allocation3] sm:$0x1] %vm2384, 0.0
      %2386 = vst.msk [vmem:[#allocation3 + $0x18] sm:$0x1] %vm2384, 0.0
      %2387 = vst.msk [vmem:[#allocation3 + $0x30] sm:$0x1] %vm2384, 0.0
      %2388 = vst.msk [vmem:[#allocation3 + $0x48] sm:$0x1] %vm2384, 0.0
      %2389 = vst.msk [vmem:[#allocation3 + $0x60] sm:$0x1] %vm2384, 0.0
      %2390 = vst.msk [vmem:[#allocation3 + $0x78] sm:$0x1] %vm2384, 0.0
      %2391 = vst.msk [vmem:[#allocation3 + $0x90] sm:$0x1] %vm2384, 0.0
      %2392 = vst.msk [vmem:[#allocation3 + $0xa8] sm:$0x1] %vm2384, 0.0
      %2393 = vst.msk [vmem:[#allocation3 + $0xc0] sm:$0x1] %vm2384, 0.0
      %2394 = vst.msk [vmem:[#allocation3 + $0xd8] sm:$0x1] %vm2384, 0.0
      %2395 = vst.msk [vmem:[#allocation3 + $0xf0] sm:$0x1] %vm2384, 0.0
      %2396 = vst.msk [vmem:[#allocation3 + $0x108] sm:$0x1] %vm2384, 0.0
      %2397 = vst.msk [vmem:[#allocation3 + $0x120] sm:$0x1] %vm2384, 0.0
      %2398 = vst.msk [vmem:[#allocation3 + $0x138] sm:$0x1] %vm2384, 0.0
      %2399 = vst.msk [vmem:[#allocation3 + $0x150] sm:$0x1] %vm2384, 0.0
      %2400 = vst.msk [vmem:[#allocation3 + $0x168] sm:$0x1] %vm2384, 0.0
      %2401 = vst.msk [vmem:[#allocation3 + $0x180] sm:$0x1] %vm2384, 0.0
      %2402 = vst.msk [vmem:[#allocation3 + $0x198] sm:$0x1] %vm2384, 0.0
      %2403 = vst.msk [vmem:[#allocation3 + $0x11] sm:$0x1] %vm2384, 0.0
      %2404 = vst.msk [vmem:[#allocation3 + $0x29] sm:$0x1] %vm2384, 0.0
      %2405 = vst.msk [vmem:[#allocation3 + $0x41] sm:$0x1] %vm2384, 0.0
      %2406 = vst.msk [vmem:[#allocation3 + $0x59] sm:$0x1] %vm2384, 0.0
      %2407 = vst.msk [vmem:[#allocation3 + $0x71] sm:$0x1] %vm2384, 0.0
      %2408 = vst.msk [vmem:[#allocation3 + $0x89] sm:$0x1] %vm2384, 0.0
      %2409 = vst.msk [vmem:[#allocation3 + $0xa1] sm:$0x1] %vm2384, 0.0
      %2410 = vst.msk [vmem:[#allocation3 + $0xb9] sm:$0x1] %vm2384, 0.0
      %2411 = vst.msk [vmem:[#allocation3 + $0xd1] sm:$0x1] %vm2384, 0.0
      %2412 = vst.msk [vmem:[#allocation3 + $0xe9] sm:$0x1] %vm2384, 0.0
      %2413 = vst.msk [vmem:[#allocation3 + $0x101] sm:$0x1] %vm2384, 0.0
      %2414 = vst.msk [vmem:[#allocation3 + $0x119] sm:$0x1] %vm2384, 0.0
      %2415 = vst.msk [vmem:[#allocation3 + $0x131] sm:$0x1] %vm2384, 0.0
      %2416 = vst.msk [vmem:[#allocation3 + $0x149] sm:$0x1] %vm2384, 0.0
      %2417 = vst.msk [vmem:[#allocation3 + $0x161] sm:$0x1] %vm2384, 0.0
      %2418 = vst.msk [vmem:[#allocation3 + $0x179] sm:$0x1] %vm2384, 0.0
      %2419 = vst.msk [vmem:[#allocation3 + $0x191] sm:$0x1] %vm2384, 0.0
      %2420 = vst.msk [vmem:[#allocation3 + $0x1a9] sm:$0x1] %vm2384, 0.0
      %s2421 = scalar_lea.vmem [#allocation3], 24
      %2422 = vst.msk [vmem:[%s2421 + $0x1] sm:$0xff] %vm1792, %v2344
      %2423 = vst.msk [vmem:[%s2421 + $0x9] sm:$0xff] %vm1792, %v2345
      %2424 = vst.msk [vmem:[%s2421 + $0x19] sm:$0xff] %vm1792, %v2346
      %2425 = vst.msk [vmem:[%s2421 + $0x21] sm:$0xff] %vm1792, %v2347
      %2426 = vst.msk [vmem:[%s2421 + $0x31] sm:$0xff] %vm1792, %v2348
      %2427 = vst.msk [vmem:[%s2421 + $0x39] sm:$0xff] %vm1792, %v2349
      %2428 = vst.msk [vmem:[%s2421 + $0x49] sm:$0xff] %vm1792, %v2350
      %2429 = vst.msk [vmem:[%s2421 + $0x51] sm:$0xff] %vm1792, %v2351
      %2430 = vst.msk [vmem:[%s2421 + $0x61] sm:$0xff] %vm1792, %v2352
      %2431 = vst.msk [vmem:[%s2421 + $0x69] sm:$0xff] %vm1792, %v2353
      %2432 = vst.msk [vmem:[%s2421 + $0x79] sm:$0xff] %vm1792, %v2354
      %2433 = vst.msk [vmem:[%s2421 + $0x81] sm:$0xff] %vm1792, %v2355
      %2434 = vst.msk [vmem:[%s2421 + $0x91] sm:$0xff] %vm1792, %v2356
      %2435 = vst.msk [vmem:[%s2421 + $0x99] sm:$0xff] %vm1792, %v2357
      %2436 = vst.msk [vmem:[%s2421 + $0xa9] sm:$0xff] %vm1792, %v2358
      %2437 = vst.msk [vmem:[%s2421 + $0xb1] sm:$0xff] %vm1792, %v2359
      %2438 = vst.msk [vmem:[%s2421 + $0xc1] sm:$0xff] %vm1792, %v2360
      %2439 = vst.msk [vmem:[%s2421 + $0xc9] sm:$0xff] %vm1792, %v2361
      %2440 = vst.msk [vmem:[%s2421 + $0xd9] sm:$0xff] %vm1792, %v2362
      %2441 = vst.msk [vmem:[%s2421 + $0xe1] sm:$0xff] %vm1792, %v2363
      %2442 = vst.msk [vmem:[%s2421 + $0xf1] sm:$0xff] %vm1792, %v2364
      %2443 = vst.msk [vmem:[%s2421 + $0xf9] sm:$0xff] %vm1792, %v2365
      %2444 = vst.msk [vmem:[%s2421 + $0x109] sm:$0xff] %vm1792, %v2366
      %2445 = vst.msk [vmem:[%s2421 + $0x111] sm:$0xff] %vm1792, %v2367
      %2446 = vst.msk [vmem:[%s2421 + $0x121] sm:$0xff] %vm1792, %v2368
      %2447 = vst.msk [vmem:[%s2421 + $0x129] sm:$0xff] %vm1792, %v2369
      %2448 = vst.msk [vmem:[%s2421 + $0x139] sm:$0xff] %vm1792, %v2370
      %2449 = vst.msk [vmem:[%s2421 + $0x141] sm:$0xff] %vm1792, %v2371
      %2450 = vst.msk [vmem:[%s2421 + $0x151] sm:$0xff] %vm1792, %v2372
      %2451 = vst.msk [vmem:[%s2421 + $0x159] sm:$0xff] %vm1792, %v2373
      %2452 = vst.msk [vmem:[%s2421 + $0x169] sm:$0xff] %vm1792, %v2374
      %2453 = vst.msk [vmem:[%s2421 + $0x171] sm:$0xff] %vm1792, %v2375
      %v2454 = vld [vmem:[#allocation3] ss:$2 sm:$0xff]
      %s2455 = scalar_lea.vmem [#allocation3], 48
      %v2456 = vld [vmem:[%s2455] ss:$2 sm:$0xff]
      %s2457 = scalar_lea.vmem [#allocation3], 96
      %v2458 = vld [vmem:[%s2457] ss:$2 sm:$0xff]
      %s2459 = scalar_lea.vmem [#allocation3], 144
      %v2460 = vld [vmem:[%s2459] ss:$2 sm:$0xff]
      %s2461 = scalar_lea.vmem [#allocation3], 192
      %v2462 = vld [vmem:[%s2461] ss:$2 sm:$0xff]
      %s2463 = scalar_lea.vmem [#allocation3], 240
      %v2464 = vld [vmem:[%s2463] ss:$2 sm:$0xff]
      %s2465 = scalar_lea.vmem [#allocation3], 288
      %v2466 = vld [vmem:[%s2465] ss:$2 sm:$0xff]
      %s2467 = scalar_lea.vmem [#allocation3], 336
      %v2468 = vld [vmem:[%s2467] ss:$2 sm:$0xff]
      %s2469 = scalar_lea.vmem [#allocation3], 1
      %v2470 = vld [vmem:[%s2469] ss:$2 sm:$0xff]
      %s2471 = scalar_lea.vmem [#allocation3], 49
      %v2472 = vld [vmem:[%s2471] ss:$2 sm:$0xff]
      %s2473 = scalar_lea.vmem [#allocation3], 97
      %v2474 = vld [vmem:[%s2473] ss:$2 sm:$0xff]
      %s2475 = scalar_lea.vmem [#allocation3], 145
      %v2476 = vld [vmem:[%s2475] ss:$2 sm:$0xff]
      %s2477 = scalar_lea.vmem [#allocation3], 193
      %v2478 = vld [vmem:[%s2477] ss:$2 sm:$0xff]
      %s2479 = scalar_lea.vmem [#allocation3], 241
      %v2480 = vld [vmem:[%s2479] ss:$2 sm:$0xff]
      %s2481 = scalar_lea.vmem [#allocation3], 289
      %v2482 = vld [vmem:[%s2481] ss:$2 sm:$0xff]
      %s2483 = scalar_lea.vmem [#allocation3], 337
      %v2484 = vld [vmem:[%s2483] ss:$2 sm:$0xff]
      %s2485 = scalar_lea.vmem [#allocation3], 2
      %v2486 = vld [vmem:[%s2485] ss:$2 sm:$0xff]
      %s2487 = scalar_lea.vmem [#allocation3], 50
      %v2488 = vld [vmem:[%s2487] ss:$2 sm:$0xff]
      %s2489 = scalar_lea.vmem [#allocation3], 98
      %v2490 = vld [vmem:[%s2489] ss:$2 sm:$0xff]
      %s2491 = scalar_lea.vmem [#allocation3], 146
      %v2492 = vld [vmem:[%s2491] ss:$2 sm:$0xff]
      %s2493 = scalar_lea.vmem [#allocation3], 194
      %v2494 = vld [vmem:[%s2493] ss:$2 sm:$0xff]
      %s2495 = scalar_lea.vmem [#allocation3], 242
      %v2496 = vld [vmem:[%s2495] ss:$2 sm:$0xff]
      %s2497 = scalar_lea.vmem [#allocation3], 290
      %v2498 = vld [vmem:[%s2497] ss:$2 sm:$0xff]
      %s2499 = scalar_lea.vmem [#allocation3], 338
      %v2500 = vld [vmem:[%s2499] ss:$2 sm:$0xff]
      %v2501 = vld [vmem:[%s2421] ss:$2 sm:$0xff]
      %s2502 = scalar_lea.vmem %s2421, 48 [#allocation3]
      %v2503 = vld [vmem:[%s2502] ss:$2 sm:$0xff]
      %s2504 = scalar_lea.vmem %s2421, 96 [#allocation3]
      %v2505 = vld [vmem:[%s2504] ss:$2 sm:$0xff]
      %s2506 = scalar_lea.vmem %s2421, 144 [#allocation3]
      %v2507 = vld [vmem:[%s2506] ss:$2 sm:$0xff]
      %s2508 = scalar_lea.vmem %s2421, 192 [#allocation3]
      %v2509 = vld [vmem:[%s2508] ss:$2 sm:$0xff]
      %s2510 = scalar_lea.vmem %s2421, 240 [#allocation3]
      %v2511 = vld [vmem:[%s2510] ss:$2 sm:$0xff]
      %s2512 = scalar_lea.vmem %s2421, 288 [#allocation3]
      %v2513 = vld [vmem:[%s2512] ss:$2 sm:$0xff]
      %s2514 = scalar_lea.vmem %s2421, 336 [#allocation3]
      %v2515 = vld [vmem:[%s2514] ss:$2 sm:$0xff]
      %s2516 = scalar_lea.vmem %s2421, 1 [#allocation3]
      %v2517 = vld [vmem:[%s2516] ss:$2 sm:$0xff]
      %s2518 = scalar_lea.vmem %s2421, 49 [#allocation3]
      %v2519 = vld [vmem:[%s2518] ss:$2 sm:$0xff]
      %s2520 = scalar_lea.vmem %s2421, 97 [#allocation3]
      %v2521 = vld [vmem:[%s2520] ss:$2 sm:$0xff]
      %s2522 = scalar_lea.vmem %s2421, 145 [#allocation3]
      %v2523 = vld [vmem:[%s2522] ss:$2 sm:$0xff]
      %s2524 = scalar_lea.vmem %s2421, 193 [#allocation3]
      %v2525 = vld [vmem:[%s2524] ss:$2 sm:$0xff]
      %s2526 = scalar_lea.vmem %s2421, 241 [#allocation3]
      %v2527 = vld [vmem:[%s2526] ss:$2 sm:$0xff]
      %s2528 = scalar_lea.vmem %s2421, 289 [#allocation3]
      %v2529 = vld [vmem:[%s2528] ss:$2 sm:$0xff]
      %s2530 = scalar_lea.vmem %s2421, 337 [#allocation3]
      %v2531 = vld [vmem:[%s2530] ss:$2 sm:$0xff]
      %s2532 = scalar_lea.vmem %s2421, 2 [#allocation3]
      %v2533 = vld [vmem:[%s2532] ss:$2 sm:$0xff]
      %s2534 = scalar_lea.vmem %s2421, 50 [#allocation3]
      %v2535 = vld [vmem:[%s2534] ss:$2 sm:$0xff]
      %s2536 = scalar_lea.vmem %s2421, 98 [#allocation3]
      %v2537 = vld [vmem:[%s2536] ss:$2 sm:$0xff]
      %s2538 = scalar_lea.vmem %s2421, 146 [#allocation3]
      %v2539 = vld [vmem:[%s2538] ss:$2 sm:$0xff]
      %s2540 = scalar_lea.vmem %s2421, 194 [#allocation3]
      %v2541 = vld [vmem:[%s2540] ss:$2 sm:$0xff]
      %s2542 = scalar_lea.vmem %s2421, 242 [#allocation3]
      %v2543 = vld [vmem:[%s2542] ss:$2 sm:$0xff]
      %s2544 = scalar_lea.vmem %s2421, 290 [#allocation3]
      %v2545 = vld [vmem:[%s2544] ss:$2 sm:$0xff]
      %s2546 = scalar_lea.vmem %s2421, 338 [#allocation3]
      %v2547 = vld [vmem:[%s2546] ss:$2 sm:$0xff]
      %s2548 = scalar_lea.vmem [#allocation3], 48
      %v2549 = vld [vmem:[%s2548] ss:$2 sm:$0xff]
      %s2550 = scalar_lea.vmem %s2548, 48 [#allocation3]
      %v2551 = vld [vmem:[%s2550] ss:$2 sm:$0xff]
      %s2552 = scalar_lea.vmem %s2548, 96 [#allocation3]
      %v2553 = vld [vmem:[%s2552] ss:$2 sm:$0xff]
      %s2554 = scalar_lea.vmem %s2548, 144 [#allocation3]
      %v2555 = vld [vmem:[%s2554] ss:$2 sm:$0xff]
      %s2556 = scalar_lea.vmem %s2548, 192 [#allocation3]
      %v2557 = vld [vmem:[%s2556] ss:$2 sm:$0xff]
      %s2558 = scalar_lea.vmem %s2548, 240 [#allocation3]
      %v2559 = vld [vmem:[%s2558] ss:$2 sm:$0xff]
      %s2560 = scalar_lea.vmem %s2548, 288 [#allocation3]
      %v2561 = vld [vmem:[%s2560] ss:$2 sm:$0xff]
      %s2562 = scalar_lea.vmem %s2548, 336 [#allocation3]
      %v2563 = vld [vmem:[%s2562] ss:$2 sm:$0xff]
      %s2564 = scalar_lea.vmem %s2548, 1 [#allocation3]
      %v2565 = vld [vmem:[%s2564] ss:$2 sm:$0xff]
      %s2566 = scalar_lea.vmem %s2548, 49 [#allocation3]
      %v2567 = vld [vmem:[%s2566] ss:$2 sm:$0xff]
      %s2568 = scalar_lea.vmem %s2548, 97 [#allocation3]
      %v2569 = vld [vmem:[%s2568] ss:$2 sm:$0xff]
      %s2570 = scalar_lea.vmem %s2548, 145 [#allocation3]
      %v2571 = vld [vmem:[%s2570] ss:$2 sm:$0xff]
      %s2572 = scalar_lea.vmem %s2548, 193 [#allocation3]
      %v2573 = vld [vmem:[%s2572] ss:$2 sm:$0xff]
      %s2574 = scalar_lea.vmem %s2548, 241 [#allocation3]
      %v2575 = vld [vmem:[%s2574] ss:$2 sm:$0xff]
      %s2576 = scalar_lea.vmem %s2548, 289 [#allocation3]
      %v2577 = vld [vmem:[%s2576] ss:$2 sm:$0xff]
      %s2578 = scalar_lea.vmem %s2548, 337 [#allocation3]
      %v2579 = vld [vmem:[%s2578] ss:$2 sm:$0xff]
      %s2580 = scalar_lea.vmem %s2548, 2 [#allocation3]
      %v2581 = vld [vmem:[%s2580] ss:$2 sm:$0xff]
      %s2582 = scalar_lea.vmem %s2548, 50 [#allocation3]
      %v2583 = vld [vmem:[%s2582] ss:$2 sm:$0xff]
      %s2584 = scalar_lea.vmem %s2548, 98 [#allocation3]
      %v2585 = vld [vmem:[%s2584] ss:$2 sm:$0xff]
      %s2586 = scalar_lea.vmem %s2548, 146 [#allocation3]
      %v2587 = vld [vmem:[%s2586] ss:$2 sm:$0xff]
      %s2588 = scalar_lea.vmem %s2548, 194 [#allocation3]
      %v2589 = vld [vmem:[%s2588] ss:$2 sm:$0xff]
      %s2590 = scalar_lea.vmem %s2548, 242 [#allocation3]
      %v2591 = vld [vmem:[%s2590] ss:$2 sm:$0xff]
      %s2592 = scalar_lea.vmem %s2548, 290 [#allocation3]
      %v2593 = vld [vmem:[%s2592] ss:$2 sm:$0xff]
      %s2594 = scalar_lea.vmem %s2548, 338 [#allocation3]
      %v2595 = vld [vmem:[%s2594] ss:$2 sm:$0xff]
      %2604 = vrot.lane.b32.xlu0 %v2470, 8
      %v2605 = vpop.permute.xlu0 %2604
      %2606 = vrot.lane.b32.xlu0 %v2472, 8
      %v2607 = vpop.permute.xlu0 %2606
      %2608 = vrot.lane.b32.xlu0 %v2474, 8
      %v2609 = vpop.permute.xlu0 %2608
      %2610 = vrot.lane.b32.xlu0 %v2476, 8
      %v2611 = vpop.permute.xlu0 %2610
      %2612 = vrot.lane.b32.xlu0 %v2478, 8
      %v2613 = vpop.permute.xlu0 %2612
      %2614 = vrot.lane.b32.xlu0 %v2480, 8
      %v2615 = vpop.permute.xlu0 %2614
      %2616 = vrot.lane.b32.xlu0 %v2482, 8
      %v2617 = vpop.permute.xlu0 %2616
      %2618 = vrot.lane.b32.xlu0 %v2484, 8
      %v2619 = vpop.permute.xlu0 %2618
      %2636 = vrot.lane.b32.xlu0 %v2486, 16
      %v2637 = vpop.permute.xlu0 %2636
      %2638 = vrot.lane.b32.xlu0 %v2488, 16
      %v2639 = vpop.permute.xlu0 %2638
      %2640 = vrot.lane.b32.xlu0 %v2490, 16
      %v2641 = vpop.permute.xlu0 %2640
      %2642 = vrot.lane.b32.xlu0 %v2492, 16
      %v2643 = vpop.permute.xlu0 %2642
      %2644 = vrot.lane.b32.xlu0 %v2494, 16
      %v2645 = vpop.permute.xlu0 %2644
      %2646 = vrot.lane.b32.xlu0 %v2496, 16
      %v2647 = vpop.permute.xlu0 %2646
      %2648 = vrot.lane.b32.xlu0 %v2498, 16
      %v2649 = vpop.permute.xlu0 %2648
      %2650 = vrot.lane.b32.xlu0 %v2500, 16
      %v2651 = vpop.permute.xlu0 %2650
      %2668 = vrot.lane.b32.xlu0 %v2501, 24
      %v2669 = vpop.permute.xlu0 %2668
      %2670 = vrot.lane.b32.xlu0 %v2503, 24
      %v2671 = vpop.permute.xlu0 %2670
      %2672 = vrot.lane.b32.xlu0 %v2505, 24
      %v2673 = vpop.permute.xlu0 %2672
      %2674 = vrot.lane.b32.xlu0 %v2507, 24
      %v2675 = vpop.permute.xlu0 %2674
      %2676 = vrot.lane.b32.xlu0 %v2509, 24
      %v2677 = vpop.permute.xlu0 %2676
      %2678 = vrot.lane.b32.xlu0 %v2511, 24
      %v2679 = vpop.permute.xlu0 %2678
      %2680 = vrot.lane.b32.xlu0 %v2513, 24
      %v2681 = vpop.permute.xlu0 %2680
      %2682 = vrot.lane.b32.xlu0 %v2515, 24
      %v2683 = vpop.permute.xlu0 %2682
      %2700 = vrot.lane.b32.xlu0 %v2517, 32
      %v2701 = vpop.permute.xlu0 %2700
      %2702 = vrot.lane.b32.xlu0 %v2519, 32
      %v2703 = vpop.permute.xlu0 %2702
      %2704 = vrot.lane.b32.xlu0 %v2521, 32
      %v2705 = vpop.permute.xlu0 %2704
      %2706 = vrot.lane.b32.xlu0 %v2523, 32
      %v2707 = vpop.permute.xlu0 %2706
      %2708 = vrot.lane.b32.xlu0 %v2525, 32
      %v2709 = vpop.permute.xlu0 %2708
      %2710 = vrot.lane.b32.xlu0 %v2527, 32
      %v2711 = vpop.permute.xlu0 %2710
      %2712 = vrot.lane.b32.xlu0 %v2529, 32
      %v2713 = vpop.permute.xlu0 %2712
      %2714 = vrot.lane.b32.xlu0 %v2531, 32
      %v2715 = vpop.permute.xlu0 %2714
      %2732 = vrot.lane.b32.xlu0 %v2533, 40
      %v2733 = vpop.permute.xlu0 %2732
      %2734 = vrot.lane.b32.xlu0 %v2535, 40
      %v2735 = vpop.permute.xlu0 %2734
      %2736 = vrot.lane.b32.xlu0 %v2537, 40
      %v2737 = vpop.permute.xlu0 %2736
      %2738 = vrot.lane.b32.xlu0 %v2539, 40
      %v2739 = vpop.permute.xlu0 %2738
      %2740 = vrot.lane.b32.xlu0 %v2541, 40
      %v2741 = vpop.permute.xlu0 %2740
      %2742 = vrot.lane.b32.xlu0 %v2543, 40
      %v2743 = vpop.permute.xlu0 %2742
      %2744 = vrot.lane.b32.xlu0 %v2545, 40
      %v2745 = vpop.permute.xlu0 %2744
      %2746 = vrot.lane.b32.xlu0 %v2547, 40
      %v2747 = vpop.permute.xlu0 %2746
      %2764 = vrot.lane.b32.xlu0 %v2549, 48
      %v2765 = vpop.permute.xlu0 %2764
      %2766 = vrot.lane.b32.xlu0 %v2551, 48
      %v2767 = vpop.permute.xlu0 %2766
      %2768 = vrot.lane.b32.xlu0 %v2553, 48
      %v2769 = vpop.permute.xlu0 %2768
      %2770 = vrot.lane.b32.xlu0 %v2555, 48
      %v2771 = vpop.permute.xlu0 %2770
      %2772 = vrot.lane.b32.xlu0 %v2557, 48
      %v2773 = vpop.permute.xlu0 %2772
      %2774 = vrot.lane.b32.xlu0 %v2559, 48
      %v2775 = vpop.permute.xlu0 %2774
      %2776 = vrot.lane.b32.xlu0 %v2561, 48
      %v2777 = vpop.permute.xlu0 %2776
      %2778 = vrot.lane.b32.xlu0 %v2563, 48
      %v2779 = vpop.permute.xlu0 %2778
      %2796 = vrot.lane.b32.xlu0 %v2565, 56
      %v2797 = vpop.permute.xlu0 %2796
      %2798 = vrot.lane.b32.xlu0 %v2567, 56
      %v2799 = vpop.permute.xlu0 %2798
      %2800 = vrot.lane.b32.xlu0 %v2569, 56
      %v2801 = vpop.permute.xlu0 %2800
      %2802 = vrot.lane.b32.xlu0 %v2571, 56
      %v2803 = vpop.permute.xlu0 %2802
      %2804 = vrot.lane.b32.xlu0 %v2573, 56
      %v2805 = vpop.permute.xlu0 %2804
      %2806 = vrot.lane.b32.xlu0 %v2575, 56
      %v2807 = vpop.permute.xlu0 %2806
      %2808 = vrot.lane.b32.xlu0 %v2577, 56
      %v2809 = vpop.permute.xlu0 %2808
      %2810 = vrot.lane.b32.xlu0 %v2579, 56
      %v2811 = vpop.permute.xlu0 %2810
      %2828 = vrot.lane.b32.xlu0 %v2581, 64
      %v2829 = vpop.permute.xlu0 %2828
      %2830 = vrot.lane.b32.xlu0 %v2583, 64
      %v2831 = vpop.permute.xlu0 %2830
      %2832 = vrot.lane.b32.xlu0 %v2585, 64
      %v2833 = vpop.permute.xlu0 %2832
      %2834 = vrot.lane.b32.xlu0 %v2587, 64
      %v2835 = vpop.permute.xlu0 %2834
      %2836 = vrot.lane.b32.xlu0 %v2589, 64
      %v2837 = vpop.permute.xlu0 %2836
      %2838 = vrot.lane.b32.xlu0 %v2591, 64
      %v2839 = vpop.permute.xlu0 %2838
      %2840 = vrot.lane.b32.xlu0 %v2593, 64
      %v2841 = vpop.permute.xlu0 %2840
      %2842 = vrot.lane.b32.xlu0 %v2595, 64
      %v2843 = vpop.permute.xlu0 %2842
      %v2852 = vsel %vm1792, %v2454, %v2605
      %v2853 = vsel %vm1792, %v2456, %v2607
      %v2854 = vsel %vm1792, %v2458, %v2609
      %v2855 = vsel %vm1792, %v2460, %v2611
      %v2856 = vsel %vm1792, %v2462, %v2613
      %v2857 = vsel %vm1792, %v2464, %v2615
      %v2858 = vsel %vm1792, %v2466, %v2617
      %v2859 = vsel %vm1792, %v2468, %v2619
      %v2860 = vsel %vm1858, %v2852, %v2637
      %v2861 = vsel %vm1858, %v2853, %v2639
      %v2862 = vsel %vm1858, %v2854, %v2641
      %v2863 = vsel %vm1858, %v2855, %v2643
      %v2864 = vsel %vm1858, %v2856, %v2645
      %v2865 = vsel %vm1858, %v2857, %v2647
      %v2866 = vsel %vm1858, %v2858, %v2649
      %v2867 = vsel %vm1858, %v2859, %v2651
      %v2868 = vsel %vm1924, %v2860, %v2669
      %v2869 = vsel %vm1924, %v2861, %v2671
      %v2870 = vsel %vm1924, %v2862, %v2673
      %v2871 = vsel %vm1924, %v2863, %v2675
      %v2872 = vsel %vm1924, %v2864, %v2677
      %v2873 = vsel %vm1924, %v2865, %v2679
      %v2874 = vsel %vm1924, %v2866, %v2681
      %v2875 = vsel %vm1924, %v2867, %v2683
      %v2876 = vsel %vm1990, %v2868, %v2701
      %v2877 = vsel %vm1990, %v2869, %v2703
      %v2878 = vsel %vm1990, %v2870, %v2705
      %v2879 = vsel %vm1990, %v2871, %v2707
      %v2880 = vsel %vm1990, %v2872, %v2709
      %v2881 = vsel %vm1990, %v2873, %v2711
      %v2882 = vsel %vm1990, %v2874, %v2713
      %v2883 = vsel %vm1990, %v2875, %v2715
      %vm2884 = vcmask 326656
      %v2885 = vsel %vm2884, %v2876, %v2733
      %v2886 = vsel %vm2884, %v2877, %v2735
      %v2887 = vsel %vm2884, %v2878, %v2737
      %v2888 = vsel %vm2884, %v2879, %v2739
      %v2889 = vsel %vm2884, %v2880, %v2741
      %v2890 = vsel %vm2884, %v2881, %v2743
      %v2891 = vsel %vm2884, %v2882, %v2745
      %v2892 = vsel %vm2884, %v2883, %v2747
      %vm2893 = vcmask 392192
      %v2894 = vsel %vm2893, %v2885, %v2765
      %v2895 = vsel %vm2893, %v2886, %v2767
      %v2896 = vsel %vm2893, %v2887, %v2769
      %v2897 = vsel %vm2893, %v2888, %v2771
      %v2898 = vsel %vm2893, %v2889, %v2773
      %v2899 = vsel %vm2893, %v2890, %v2775
      %v2900 = vsel %vm2893, %v2891, %v2777
      %v2901 = vsel %vm2893, %v2892, %v2779
      %vm2902 = vcmask 457728
      %v2903 = vsel %vm2902, %v2894, %v2797
      %v2904 = vsel %vm2902, %v2895, %v2799
      %v2905 = vsel %vm2902, %v2896, %v2801
      %v2906 = vsel %vm2902, %v2897, %v2803
      %v2907 = vsel %vm2902, %v2898, %v2805
      %v2908 = vsel %vm2902, %v2899, %v2807
      %v2909 = vsel %vm2902, %v2900, %v2809
      %v2910 = vsel %vm2902, %v2901, %v2811
      %vm2911 = vcmask 523264
      %v2912 = vsel %vm2911, %v2903, %v2829
      %v2913 = vsel %vm2911, %v2904, %v2831
      %v2914 = vsel %vm2911, %v2905, %v2833
      %v2915 = vsel %vm2911, %v2906, %v2835
      %v2916 = vsel %vm2911, %v2907, %v2837
      %v2917 = vsel %vm2911, %v2908, %v2839
      %v2918 = vsel %vm2911, %v2909, %v2841
      %v2919 = vsel %vm2911, %v2910, %v2843
      %v2920 = vpack.c.bf16 %v2913, %v2912
      %v2921 = vpack.c.bf16 %v2915, %v2914
      %v2922 = vpack.c.bf16 %v2917, %v2916
      %v2923 = vpack.c.bf16 %v2919, %v2918
      %v2924 = vld [vmem:[%s3] sm:$0xf]
      %v2925 = vld [vmem:[%s3 + $0x4] sm:$0xf]
      %v2926 = vld [vmem:[%s3 + $0x8] sm:$0xf]
      %v2927 = vld [vmem:[%s3 + $0xc] sm:$0xf]
      %v2928 = vld [vmem:[%s3 + $0x10] sm:$0xf]
      %v2929 = vld [vmem:[%s3 + $0x14] sm:$0xf]
      %v2930 = vld [vmem:[%s3 + $0x18] sm:$0xf]
      %v2931 = vld [vmem:[%s3 + $0x1c] sm:$0xf]
      %v2932 = vld [vmem:[%s3 + $0x20] sm:$0xf]
      %v2933 = vld [vmem:[%s4] sm:$0x1]
      %v2935 = vlaneseq
      %v2936 = vshrl.u32 %v2935, 7
      %v2937 = vsub.s32 0, %v2936
      %v2938 = vrot.slane %v2933, %v2937
      %v2949 = vunpack.c.l.b16 %v2924
      %v2950 = vunpack.c.l.b16 %v2925
      %v2951 = vunpack.c.l.b16 %v2926
      %v2952 = vunpack.c.l.b16 %v2927
      %v2953 = vunpack.c.l.b16 %v2928
      %v2954 = vunpack.c.l.b16 %v2929
      %v2955 = vunpack.c.l.b16 %v2930
      %v2956 = vunpack.c.l.b16 %v2931
      %v2957 = vunpack.c.l.b16 %v2932
      %v2958 = vpack.c.b16 %v2950, %v2949
      %v2959 = vpack.c.b16 %v2952, %v2951
      %v2960 = vpack.c.b16 %v2954, %v2953
      %v2961 = vpack.c.b16 %v2956, %v2955
      %v2962 = vpack.c.b16 %v2957, %v2957
      %vm2967 = vcmask 588800
      %v2969 = vsel %vm2967, %v2920, 0
      %v2972 = vsel %vm2967, %v2921, 0
      %v2975 = vsel %vm2967, %v2922, 0
      %v2978 = vsel %vm2967, %v2923, 0
      %vm2980 = vcmask 1043456
      %v2982 = vsel %vm2980, %v2962, 0
      %2984 = vmatprep.subr.bf16.mxu0 0
      %2985 = vmatpush1.bf16.msra.mxu0 %v2958
      %2986 = vmatprep.subr.bf16.mxu0 0
      %2987 = vmatpush1.bf16.msra.mxu0 %v2959
      %2988 = vmatprep.subr.bf16.mxu0 0
      %2989 = vmatpush1.bf16.msra.mxu0 %v2960
      %2990 = vmatprep.subr.bf16.mxu0 0
      %2991 = vmatpush1.bf16.msra.mxu0 %v2961
      %2992 = vmatprep.subr.bf16.mxu0 0
      %2993 = vmatpush1.bf16.msra.mxu0 %v2982
      %2994 = vmatprep.subr.bf16.mxu0 0
      %2995 = vmatpush1.bf16.msra.mxu0 0
      %2996 = vmatprep.subr.bf16.mxu0 0
      %2997 = vmatpush1.bf16.msra.mxu0 0
      %2998 = vmatprep.subr.bf16.mxu0 0
      %2999 = vmatpush1.bf16.msra.mxu0 0
      %3000 = vmatprep.subr.bf16.mxu0 0
      %3001 = vmatpush1.bf16.msra.mxu0 0
      %3002 = vmatprep.subr.bf16.mxu0 0
      %3003 = vmatpush1.bf16.msra.mxu0 0
      %3004 = vmatprep.subr.bf16.mxu0 0
      %3005 = vmatpush1.bf16.msra.mxu0 0
      %3006 = vmatprep.subr.bf16.mxu0 0
      %3007 = vmatpush1.bf16.msra.mxu0 0
      %3008 = vmatprep.subr.bf16.mxu0 0
      %3009 = vmatpush1.bf16.msra.mxu0 0
      %3010 = vmatprep.subr.bf16.mxu0 0
      %3011 = vmatpush1.bf16.msra.mxu0 0
      %3012 = vmatprep.subr.bf16.mxu0 0
      %3013 = vmatpush1.bf16.msra.mxu0 0
      %3014 = vmatprep.subr.bf16.mxu0 0
      %3015 = vmatpush1.bf16.msra.mxu0 0
      %3016 = vmatprep.mubr.bf16.mxu0 0
      %3017 = vmatmul.mubr.bf16.gmra.mrb[0].mxu0 %v2969
      %v3018 = vpop.f32.mrb[0].mxu0
      %v3019 = vadd.f32 %v2938, %v3018
      %v3020 = vpop.f32.mrb[0].mxu0
      %v3021 = vpop.f32.mrb[0].mxu0
      %v3022 = vadd.f32 %v2938, %v3021
      %v3023 = vpop.f32.mrb[0].mxu0
      %3024 = vmatprep.mubr.bf16.mxu0 0
      %3025 = vmatmul.mubr.bf16.gmra.mrb[0].mxu0 %v2972
      %v3026 = vpop.f32.mrb[0].mxu0
      %v3027 = vadd.f32 %v2938, %v3026
      %v3028 = vpop.f32.mrb[0].mxu0
      %v3029 = vpop.f32.mrb[0].mxu0
      %v3030 = vadd.f32 %v2938, %v3029
      %v3031 = vpop.f32.mrb[0].mxu0
      %3032 = vmatprep.mubr.bf16.mxu0 0
      %3033 = vmatmul.mubr.bf16.gmra.mrb[0].mxu0 %v2975
      %v3034 = vpop.f32.mrb[0].mxu0
      %v3035 = vadd.f32 %v2938, %v3034
      %v3036 = vpop.f32.mrb[0].mxu0
      %v3037 = vpop.f32.mrb[0].mxu0
      %v3038 = vadd.f32 %v2938, %v3037
      %v3039 = vpop.f32.mrb[0].mxu0
      %3040 = vmatprep.mubr.bf16.mxu0 0
      %3041 = vmatmul.mubr.bf16.gmra.mrb[0].mxu0 %v2978
      %v3042 = vpop.f32.mrb[0].mxu0
      %v3043 = vadd.f32 %v2938, %v3042
      %v3044 = vpop.f32.mrb[0].mxu0
      %v3045 = vpop.f32.mrb[0].mxu0
      %v3046 = vadd.f32 %v2938, %v3045
      %v3047 = vpop.f32.mrb[0].mxu0
      %3048 = vdwg.mxu0
      %vm3049 = vcmp.ge.f32.partialorder %v3019, 0.0
      %vm3050 = vcmp.ge.f32.partialorder %v3022, 0.0
      %vm3051 = vcmp.ge.f32.partialorder %v3027, 0.0
      %vm3052 = vcmp.ge.f32.partialorder %v3030, 0.0
      %vm3053 = vcmp.ge.f32.partialorder %v3035, 0.0
      %vm3054 = vcmp.ge.f32.partialorder %v3038, 0.0
      %vm3055 = vcmp.ge.f32.partialorder %v3043, 0.0
      %vm3056 = vcmp.ge.f32.partialorder %v3046, 0.0
      %v3057 = vmul.f32 %v3019, 0.01
      %v3058 = vmul.f32 %v3022, 0.01
      %v3059 = vmul.f32 %v3027, 0.01
      %v3060 = vmul.f32 %v3030, 0.01
      %v3061 = vmul.f32 %v3035, 0.01
      %v3062 = vmul.f32 %v3038, 0.01
      %v3063 = vmul.f32 %v3043, 0.01
      %v3064 = vmul.f32 %v3046, 0.01
      %v3065 = vsel %vm3049, %v3019, %v3057
      %v3066 = vsel %vm3050, %v3022, %v3058
      %v3067 = vsel %vm3051, %v3027, %v3059
      %v3068 = vsel %vm3052, %v3030, %v3060
      %v3069 = vsel %vm3053, %v3035, %v3061
      %v3070 = vsel %vm3054, %v3038, %v3062
      %v3071 = vsel %vm3055, %v3043, %v3063
      %v3072 = vsel %vm3056, %v3046, %v3064
      %3073 = vst.msk [vmem:[#allocation4] sm:$0xff] %vm1792, 0.0
      %3074 = vst.msk [vmem:[#allocation4 + $0x8] sm:$0x3] %vm2378, 0.0
      %s3075 = scalar_lea.vmem [#allocation4], 144
      %3076 = vst.msk [vmem:[%s3075] sm:$0xff] %vm1792, 0.0
      %3077 = vst.msk [vmem:[%s3075 + $0x8] sm:$0x3] %vm2378, 0.0
      %3078 = vst.msk [vmem:[#allocation4] sm:$0x1] %vm2384, 0.0
      %3079 = vst.msk [vmem:[#allocation4 + $0x10] sm:$0x1] %vm2384, 0.0
      %3080 = vst.msk [vmem:[#allocation4 + $0x20] sm:$0x1] %vm2384, 0.0
      %3081 = vst.msk [vmem:[#allocation4 + $0x30] sm:$0x1] %vm2384, 0.0
      %3082 = vst.msk [vmem:[#allocation4 + $0x40] sm:$0x1] %vm2384, 0.0
      %3083 = vst.msk [vmem:[#allocation4 + $0x50] sm:$0x1] %vm2384, 0.0
      %3084 = vst.msk [vmem:[#allocation4 + $0x60] sm:$0x1] %vm2384, 0.0
      %3085 = vst.msk [vmem:[#allocation4 + $0x70] sm:$0x1] %vm2384, 0.0
      %3086 = vst.msk [vmem:[#allocation4 + $0x80] sm:$0x1] %vm2384, 0.0
      %3087 = vst.msk [vmem:[#allocation4 + $0x90] sm:$0x1] %vm2384, 0.0
      %3088 = vst.msk [vmem:[#allocation4 + $0x9] sm:$0x1] %vm2384, 0.0
      %3089 = vst.msk [vmem:[#allocation4 + $0x19] sm:$0x1] %vm2384, 0.0
      %3090 = vst.msk [vmem:[#allocation4 + $0x29] sm:$0x1] %vm2384, 0.0
      %3091 = vst.msk [vmem:[#allocation4 + $0x39] sm:$0x1] %vm2384, 0.0
      %3092 = vst.msk [vmem:[#allocation4 + $0x49] sm:$0x1] %vm2384, 0.0
      %3093 = vst.msk [vmem:[#allocation4 + $0x59] sm:$0x1] %vm2384, 0.0
      %3094 = vst.msk [vmem:[#allocation4 + $0x69] sm:$0x1] %vm2384, 0.0
      %3095 = vst.msk [vmem:[#allocation4 + $0x79] sm:$0x1] %vm2384, 0.0
      %3096 = vst.msk [vmem:[#allocation4 + $0x89] sm:$0x1] %vm2384, 0.0
      %3097 = vst.msk [vmem:[#allocation4 + $0x99] sm:$0x1] %vm2384, 0.0
      %s3098 = scalar_lea.vmem [#allocation4], 16
      %3099 = vst.msk [vmem:[%s3098 + $0x1] sm:$0xff] %vm1792, %v3065
      %3100 = vst.msk [vmem:[%s3098 + $0x11] sm:$0xff] %vm1792, %v3066
      %3101 = vst.msk [vmem:[%s3098 + $0x21] sm:$0xff] %vm1792, %v3067
      %3102 = vst.msk [vmem:[%s3098 + $0x31] sm:$0xff] %vm1792, %v3068
      %3103 = vst.msk [vmem:[%s3098 + $0x41] sm:$0xff] %vm1792, %v3069
      %3104 = vst.msk [vmem:[%s3098 + $0x51] sm:$0xff] %vm1792, %v3070
      %3105 = vst.msk [vmem:[%s3098 + $0x61] sm:$0xff] %vm1792, %v3071
      %3106 = vst.msk [vmem:[%s3098 + $0x71] sm:$0xff] %vm1792, %v3072
      %v3107 = vld [vmem:[#allocation4] ss:$2 sm:$0xf]
      %s3108 = scalar_lea.vmem [#allocation4], 32
      %v3109 = vld [vmem:[%s3108] ss:$2 sm:$0xf]
      %s3110 = scalar_lea.vmem [#allocation4], 64
      %v3111 = vld [vmem:[%s3110] ss:$2 sm:$0xf]
      %s3112 = scalar_lea.vmem [#allocation4], 96
      %v3113 = vld [vmem:[%s3112] ss:$2 sm:$0xf]
      %s3114 = scalar_lea.vmem [#allocation4], 1
      %v3115 = vld [vmem:[%s3114] ss:$2 sm:$0xf]
      %s3116 = scalar_lea.vmem [#allocation4], 33
      %v3117 = vld [vmem:[%s3116] ss:$2 sm:$0xf]
      %s3118 = scalar_lea.vmem [#allocation4], 65
      %v3119 = vld [vmem:[%s3118] ss:$2 sm:$0xf]
      %s3120 = scalar_lea.vmem [#allocation4], 97
      %v3121 = vld [vmem:[%s3120] ss:$2 sm:$0xf]
      %s3122 = scalar_lea.vmem [#allocation4], 2
      %v3123 = vld [vmem:[%s3122] ss:$2 sm:$0xf]
      %s3124 = scalar_lea.vmem [#allocation4], 34
      %v3125 = vld [vmem:[%s3124] ss:$2 sm:$0xf]
      %s3126 = scalar_lea.vmem [#allocation4], 66
      %v3127 = vld [vmem:[%s3126] ss:$2 sm:$0xf]
      %s3128 = scalar_lea.vmem [#allocation4], 98
      %v3129 = vld [vmem:[%s3128] ss:$2 sm:$0xf]
      %v3130 = vld [vmem:[%s3098] ss:$2 sm:$0xf]
      %s3131 = scalar_lea.vmem %s3098, 32 [#allocation4]
      %v3132 = vld [vmem:[%s3131] ss:$2 sm:$0xf]
      %s3133 = scalar_lea.vmem %s3098, 64 [#allocation4]
      %v3134 = vld [vmem:[%s3133] ss:$2 sm:$0xf]
      %s3135 = scalar_lea.vmem %s3098, 96 [#allocation4]
      %v3136 = vld [vmem:[%s3135] ss:$2 sm:$0xf]
      %s3137 = scalar_lea.vmem %s3098, 1 [#allocation4]
      %v3138 = vld [vmem:[%s3137] ss:$2 sm:$0xf]
      %s3139 = scalar_lea.vmem %s3098, 33 [#allocation4]
      %v3140 = vld [vmem:[%s3139] ss:$2 sm:$0xf]
      %s3141 = scalar_lea.vmem %s3098, 65 [#allocation4]
      %v3142 = vld [vmem:[%s3141] ss:$2 sm:$0xf]
      %s3143 = scalar_lea.vmem %s3098, 97 [#allocation4]
      %v3144 = vld [vmem:[%s3143] ss:$2 sm:$0xf]
      %s3145 = scalar_lea.vmem %s3098, 2 [#allocation4]
      %v3146 = vld [vmem:[%s3145] ss:$2 sm:$0xf]
      %s3147 = scalar_lea.vmem %s3098, 34 [#allocation4]
      %v3148 = vld [vmem:[%s3147] ss:$2 sm:$0xf]
      %s3149 = scalar_lea.vmem %s3098, 66 [#allocation4]
      %v3150 = vld [vmem:[%s3149] ss:$2 sm:$0xf]
      %s3151 = scalar_lea.vmem %s3098, 98 [#allocation4]
      %v3152 = vld [vmem:[%s3151] ss:$2 sm:$0xf]
      %s3153 = scalar_lea.vmem [#allocation4], 32
      %v3154 = vld [vmem:[%s3153] ss:$2 sm:$0xf]
      %s3155 = scalar_lea.vmem %s3153, 32 [#allocation4]
      %v3156 = vld [vmem:[%s3155] ss:$2 sm:$0xf]
      %s3157 = scalar_lea.vmem %s3153, 64 [#allocation4]
      %v3158 = vld [vmem:[%s3157] ss:$2 sm:$0xf]
      %s3159 = scalar_lea.vmem %s3153, 96 [#allocation4]
      %v3160 = vld [vmem:[%s3159] ss:$2 sm:$0xf]
      %s3161 = scalar_lea.vmem %s3153, 1 [#allocation4]
      %v3162 = vld [vmem:[%s3161] ss:$2 sm:$0xf]
      %s3163 = scalar_lea.vmem %s3153, 33 [#allocation4]
      %v3164 = vld [vmem:[%s3163] ss:$2 sm:$0xf]
      %s3165 = scalar_lea.vmem %s3153, 65 [#allocation4]
      %v3166 = vld [vmem:[%s3165] ss:$2 sm:$0xf]
      %s3167 = scalar_lea.vmem %s3153, 97 [#allocation4]
      %v3168 = vld [vmem:[%s3167] ss:$2 sm:$0xf]
      %s3169 = scalar_lea.vmem %s3153, 2 [#allocation4]
      %v3170 = vld [vmem:[%s3169] ss:$2 sm:$0xf]
      %s3171 = scalar_lea.vmem %s3153, 34 [#allocation4]
      %v3172 = vld [vmem:[%s3171] ss:$2 sm:$0xf]
      %s3173 = scalar_lea.vmem %s3153, 66 [#allocation4]
      %v3174 = vld [vmem:[%s3173] ss:$2 sm:$0xf]
      %s3175 = scalar_lea.vmem %s3153, 98 [#allocation4]
      %v3176 = vld [vmem:[%s3175] ss:$2 sm:$0xf]
      %3181 = vrot.lane.b32.xlu0 %v3115, 8
      %v3182 = vpop.permute.xlu0 %3181
      %3183 = vrot.lane.b32.xlu0 %v3117, 8
      %v3184 = vpop.permute.xlu0 %3183
      %3185 = vrot.lane.b32.xlu0 %v3119, 8
      %v3186 = vpop.permute.xlu0 %3185
      %3187 = vrot.lane.b32.xlu0 %v3121, 8
      %v3188 = vpop.permute.xlu0 %3187
      %3197 = vrot.lane.b32.xlu0 %v3123, 16
      %v3198 = vpop.permute.xlu0 %3197
      %3199 = vrot.lane.b32.xlu0 %v3125, 16
      %v3200 = vpop.permute.xlu0 %3199
      %3201 = vrot.lane.b32.xlu0 %v3127, 16
      %v3202 = vpop.permute.xlu0 %3201
      %3203 = vrot.lane.b32.xlu0 %v3129, 16
      %v3204 = vpop.permute.xlu0 %3203
      %3213 = vrot.lane.b32.xlu0 %v3130, 24
      %v3214 = vpop.permute.xlu0 %3213
      %3215 = vrot.lane.b32.xlu0 %v3132, 24
      %v3216 = vpop.permute.xlu0 %3215
      %3217 = vrot.lane.b32.xlu0 %v3134, 24
      %v3218 = vpop.permute.xlu0 %3217
      %3219 = vrot.lane.b32.xlu0 %v3136, 24
      %v3220 = vpop.permute.xlu0 %3219
      %3229 = vrot.lane.b32.xlu0 %v3138, 32
      %v3230 = vpop.permute.xlu0 %3229
      %3231 = vrot.lane.b32.xlu0 %v3140, 32
      %v3232 = vpop.permute.xlu0 %3231
      %3233 = vrot.lane.b32.xlu0 %v3142, 32
      %v3234 = vpop.permute.xlu0 %3233
      %3235 = vrot.lane.b32.xlu0 %v3144, 32
      %v3236 = vpop.permute.xlu0 %3235
      %3245 = vrot.lane.b32.xlu0 %v3146, 40
      %v3246 = vpop.permute.xlu0 %3245
      %3247 = vrot.lane.b32.xlu0 %v3148, 40
      %v3248 = vpop.permute.xlu0 %3247
      %3249 = vrot.lane.b32.xlu0 %v3150, 40
      %v3250 = vpop.permute.xlu0 %3249
      %3251 = vrot.lane.b32.xlu0 %v3152, 40
      %v3252 = vpop.permute.xlu0 %3251
      %3261 = vrot.lane.b32.xlu0 %v3154, 48
      %v3262 = vpop.permute.xlu0 %3261
      %3263 = vrot.lane.b32.xlu0 %v3156, 48
      %v3264 = vpop.permute.xlu0 %3263
      %3265 = vrot.lane.b32.xlu0 %v3158, 48
      %v3266 = vpop.permute.xlu0 %3265
      %3267 = vrot.lane.b32.xlu0 %v3160, 48
      %v3268 = vpop.permute.xlu0 %3267
      %3277 = vrot.lane.b32.xlu0 %v3162, 56
      %v3278 = vpop.permute.xlu0 %3277
      %3279 = vrot.lane.b32.xlu0 %v3164, 56
      %v3280 = vpop.permute.xlu0 %3279
      %3281 = vrot.lane.b32.xlu0 %v3166, 56
      %v3282 = vpop.permute.xlu0 %3281
      %3283 = vrot.lane.b32.xlu0 %v3168, 56
      %v3284 = vpop.permute.xlu0 %3283
      %3293 = vrot.lane.b32.xlu0 %v3170, 64
      %v3294 = vpop.permute.xlu0 %3293
      %3295 = vrot.lane.b32.xlu0 %v3172, 64
      %v3296 = vpop.permute.xlu0 %3295
      %3297 = vrot.lane.b32.xlu0 %v3174, 64
      %v3298 = vpop.permute.xlu0 %3297
      %3299 = vrot.lane.b32.xlu0 %v3176, 64
      %v3300 = vpop.permute.xlu0 %3299
      %v3305 = vsel %vm1792, %v3107, %v3182
      %v3306 = vsel %vm1792, %v3109, %v3184
      %v3307 = vsel %vm1792, %v3111, %v3186
      %v3308 = vsel %vm1792, %v3113, %v3188
      %v3309 = vsel %vm1858, %v3305, %v3198
      %v3310 = vsel %vm1858, %v3306, %v3200
      %v3311 = vsel %vm1858, %v3307, %v3202
      %v3312 = vsel %vm1858, %v3308, %v3204
      %v3313 = vsel %vm1924, %v3309, %v3214
      %v3314 = vsel %vm1924, %v3310, %v3216
      %v3315 = vsel %vm1924, %v3311, %v3218
      %v3316 = vsel %vm1924, %v3312, %v3220
      %v3317 = vsel %vm1990, %v3313, %v3230
      %v3318 = vsel %vm1990, %v3314, %v3232
      %v3319 = vsel %vm1990, %v3315, %v3234
      %v3320 = vsel %vm1990, %v3316, %v3236
      %v3321 = vsel %vm2884, %v3317, %v3246
      %v3322 = vsel %vm2884, %v3318, %v3248
      %v3323 = vsel %vm2884, %v3319, %v3250
      %v3324 = vsel %vm2884, %v3320, %v3252
      %v3325 = vsel %vm2893, %v3321, %v3262
      %v3326 = vsel %vm2893, %v3322, %v3264
      %v3327 = vsel %vm2893, %v3323, %v3266
      %v3328 = vsel %vm2893, %v3324, %v3268
      %v3329 = vsel %vm2902, %v3325, %v3278
      %v3330 = vsel %vm2902, %v3326, %v3280
      %v3331 = vsel %vm2902, %v3327, %v3282
      %v3332 = vsel %vm2902, %v3328, %v3284
      %v3333 = vsel %vm2911, %v3329, %v3294
      %v3334 = vsel %vm2911, %v3330, %v3296
      %v3335 = vsel %vm2911, %v3331, %v3298
      %v3336 = vsel %vm2911, %v3332, %v3300
      %v3341 = vcombine.low %v3333, %v3334
      %v3342 = vcombine.low %v3335, %v3336
      %v3345 = vpack.c.bf16 %v3342, %v3341
      %v3346 = vld [vmem:[%s5] sm:$0xf]
      %v3347 = vld [vmem:[%s5 + $0x4] sm:$0xf]
      %v3348 = vld [vmem:[%s5 + $0x8] sm:$0xf]
      %v3349 = vld [vmem:[%s5 + $0xc] sm:$0xf]
      %v3350 = vld [vmem:[%s5 + $0x10] sm:$0xf]
      %v3351 = vld [vmem:[%s5 + $0x14] sm:$0xf]
      %v3352 = vld [vmem:[%s5 + $0x18] sm:$0xf]
      %v3353 = vld [vmem:[%s5 + $0x1c] sm:$0xf]
      %v3354 = vld [vmem:[%s5 + $0x20] sm:$0xf]
      %v3355 = vld [vmem:[%s6] sm:$0x1]
      %v3357 = vlaneseq
      %v3358 = vshrl.u32 %v3357, 7
      %v3359 = vsub.s32 0, %v3358
      %v3360 = vrot.slane %v3355, %v3359
      %v3371 = vunpack.c.l.b16 %v3346
      %v3372 = vunpack.c.l.b16 %v3347
      %v3373 = vunpack.c.l.b16 %v3348
      %v3374 = vunpack.c.l.b16 %v3349
      %v3375 = vunpack.c.l.b16 %v3350
      %v3376 = vunpack.c.l.b16 %v3351
      %v3377 = vunpack.c.l.b16 %v3352
      %v3378 = vunpack.c.l.b16 %v3353
      %v3379 = vunpack.c.l.b16 %v3354
      %v3380 = vpack.c.b16 %v3372, %v3371
      %v3381 = vpack.c.b16 %v3374, %v3373
      %v3382 = vpack.c.b16 %v3376, %v3375
      %v3383 = vpack.c.b16 %v3378, %v3377
      %v3384 = vpack.c.b16 %v3379, %v3379
      %v3390 = vsel %vm2967, %v3345, 0
      %v3393 = vsel %vm2980, %v3384, 0
      %3395 = vmatprep.subr.bf16.mxu0 0
      %3396 = vmatpush1.bf16.msra.mxu0 %v3380
      %3397 = vmatprep.subr.bf16.mxu0 0
      %3398 = vmatpush1.bf16.msra.mxu0 %v3381
      %3399 = vmatprep.subr.bf16.mxu0 0
      %3400 = vmatpush1.bf16.msra.mxu0 %v3382
      %3401 = vmatprep.subr.bf16.mxu0 0
      %3402 = vmatpush1.bf16.msra.mxu0 %v3383
      %3403 = vmatprep.subr.bf16.mxu0 0
      %3404 = vmatpush1.bf16.msra.mxu0 %v3393
      %3405 = vmatprep.subr.bf16.mxu0 0
      %3406 = vmatpush1.bf16.msra.mxu0 0
      %3407 = vmatprep.subr.bf16.mxu0 0
      %3408 = vmatpush1.bf16.msra.mxu0 0
      %3409 = vmatprep.subr.bf16.mxu0 0
      %3410 = vmatpush1.bf16.msra.mxu0 0
      %3411 = vmatprep.subr.bf16.mxu0 0
      %3412 = vmatpush1.bf16.msra.mxu0 0
      %3413 = vmatprep.subr.bf16.mxu0 0
      %3414 = vmatpush1.bf16.msra.mxu0 0
      %3415 = vmatprep.subr.bf16.mxu0 0
      %3416 = vmatpush1.bf16.msra.mxu0 0
      %3417 = vmatprep.subr.bf16.mxu0 0
      %3418 = vmatpush1.bf16.msra.mxu0 0
      %3419 = vmatprep.subr.bf16.mxu0 0
      %3420 = vmatpush1.bf16.msra.mxu0 0
      %3421 = vmatprep.subr.bf16.mxu0 0
      %3422 = vmatpush1.bf16.msra.mxu0 0
      %3423 = vmatprep.subr.bf16.mxu0 0
      %3424 = vmatpush1.bf16.msra.mxu0 0
      %3425 = vmatprep.subr.bf16.mxu0 0
      %3426 = vmatpush1.bf16.msra.mxu0 0
      %3427 = vmatprep.mubr.bf16.mxu0 0
      %3428 = vmatmul.mubr.bf16.gmra.mrb[0].mxu0 %v3390
      %v3429 = vpop.f32.mrb[0].mxu0
      %v3430 = vadd.f32 %v3360, %v3429
      %v3431 = vpop.f32.mrb[0].mxu0
      %v3432 = vpop.f32.mrb[0].mxu0
      %v3433 = vadd.f32 %v3360, %v3432
      %v3434 = vpop.f32.mrb[0].mxu0
      %3435 = vdwg.mxu0
      %vm3436 = vcmp.ge.f32.partialorder %v3430, 0.0
      %vm3437 = vcmp.ge.f32.partialorder %v3433, 0.0
      %v3438 = vmul.f32 %v3430, 0.01
      %v3439 = vmul.f32 %v3433, 0.01
      %v3440 = vsel %vm3436, %v3430, %v3438
      %v3441 = vsel %vm3437, %v3433, %v3439
      %v3444 = vcombine.high %v3440, %v3440
      %v3445 = vcombine.high %v3441, %v3441
      %vm3448 = vcmask 62464
      %3449 = vst.msk [vmem:[#allocation5] sm:$0x3f] %vm3448, 0.0
      %s3450 = scalar_lea.vmem [#allocation5], 40
      %3451 = vst.msk [vmem:[%s3450] sm:$0x3f] %vm3448, 0.0
      %3452 = vst.msk [vmem:[#allocation5] sm:$0x1] %vm2384, 0.0
      %3453 = vst.msk [vmem:[#allocation5 + $0x8] sm:$0x1] %vm2384, 0.0
      %3454 = vst.msk [vmem:[#allocation5 + $0x10] sm:$0x1] %vm2384, 0.0
      %3455 = vst.msk [vmem:[#allocation5 + $0x18] sm:$0x1] %vm2384, 0.0
      %3456 = vst.msk [vmem:[#allocation5 + $0x20] sm:$0x1] %vm2384, 0.0
      %3457 = vst.msk [vmem:[#allocation5 + $0x28] sm:$0x1] %vm2384, 0.0
      %3458 = vst.msk [vmem:[#allocation5 + $0x5] sm:$0x1] %vm2384, 0.0
      %3459 = vst.msk [vmem:[#allocation5 + $0xd] sm:$0x1] %vm2384, 0.0
      %3460 = vst.msk [vmem:[#allocation5 + $0x15] sm:$0x1] %vm2384, 0.0
      %3461 = vst.msk [vmem:[#allocation5 + $0x1d] sm:$0x1] %vm2384, 0.0
      %3462 = vst.msk [vmem:[#allocation5 + $0x25] sm:$0x1] %vm2384, 0.0
      %3463 = vst.msk [vmem:[#allocation5 + $0x2d] sm:$0x1] %vm2384, 0.0
      %s3464 = scalar_lea.vmem [#allocation5], 8
      %vm3465 = vcmask 60416
      %3466 = vst.msk [vmem:[%s3464 + $0x1] sm:$0xf] %vm3465, %v3440
      %3467 = vst.msk [vmem:[%s3464 + $0x9] sm:$0xf] %vm3465, %v3444
      %3468 = vst.msk [vmem:[%s3464 + $0x11] sm:$0xf] %vm3465, %v3441
      %3469 = vst.msk [vmem:[%s3464 + $0x19] sm:$0xf] %vm3465, %v3445
      %v3470 = vld [vmem:[#allocation5] sm:$0xf]
      %v3471 = vld [vmem:[#allocation5 + $0x8] sm:$0xf]
      %v3472 = vld [vmem:[#allocation5 + $0x10] sm:$0xf]
      %v3473 = vld [vmem:[#allocation5 + $0x18] sm:$0xf]
      %v3474 = vld [vmem:[#allocation5 + $0x1] sm:$0xf]
      %v3475 = vld [vmem:[#allocation5 + $0x9] sm:$0xf]
      %v3476 = vld [vmem:[#allocation5 + $0x11] sm:$0xf]
      %v3477 = vld [vmem:[#allocation5 + $0x19] sm:$0xf]
      %v3478 = vld [vmem:[#allocation5 + $0x2] sm:$0xf]
      %v3479 = vld [vmem:[#allocation5 + $0xa] sm:$0xf]
      %v3480 = vld [vmem:[#allocation5 + $0x12] sm:$0xf]
      %v3481 = vld [vmem:[#allocation5 + $0x1a] sm:$0xf]
      %v3482 = vld [vmem:[%s3464] sm:$0xf]
      %v3483 = vld [vmem:[%s3464 + $0x8] sm:$0xf]
      %v3484 = vld [vmem:[%s3464 + $0x10] sm:$0xf]
      %v3485 = vld [vmem:[%s3464 + $0x18] sm:$0xf]
      %v3486 = vld [vmem:[%s3464 + $0x1] sm:$0xf]
      %v3487 = vld [vmem:[%s3464 + $0x9] sm:$0xf]
      %v3488 = vld [vmem:[%s3464 + $0x11] sm:$0xf]
      %v3489 = vld [vmem:[%s3464 + $0x19] sm:$0xf]
      %v3490 = vld [vmem:[%s3464 + $0x2] sm:$0xf]
      %v3491 = vld [vmem:[%s3464 + $0xa] sm:$0xf]
      %v3492 = vld [vmem:[%s3464 + $0x12] sm:$0xf]
      %v3493 = vld [vmem:[%s3464 + $0x1a] sm:$0xf]
      %s3494 = scalar_lea.vmem [#allocation5], 16
      %v3495 = vld [vmem:[%s3494] sm:$0xf]
      %v3496 = vld [vmem:[%s3494 + $0x8] sm:$0xf]
      %v3497 = vld [vmem:[%s3494 + $0x10] sm:$0xf]
      %v3498 = vld [vmem:[%s3494 + $0x18] sm:$0xf]
      %v3499 = vld [vmem:[%s3494 + $0x1] sm:$0xf]
      %v3500 = vld [vmem:[%s3494 + $0x9] sm:$0xf]
      %v3501 = vld [vmem:[%s3494 + $0x11] sm:$0xf]
      %v3502 = vld [vmem:[%s3494 + $0x19] sm:$0xf]
      %v3503 = vld [vmem:[%s3494 + $0x2] sm:$0xf]
      %v3504 = vld [vmem:[%s3494 + $0xa] sm:$0xf]
      %v3505 = vld [vmem:[%s3494 + $0x12] sm:$0xf]
      %v3506 = vld [vmem:[%s3494 + $0x1a] sm:$0xf]
      %3511 = vrot.lane.b32.xlu0 %v3474, 8
      %v3512 = vpop.permute.xlu0 %3511
      %3513 = vrot.lane.b32.xlu0 %v3475, 8
      %v3514 = vpop.permute.xlu0 %3513
      %3515 = vrot.lane.b32.xlu0 %v3476, 8
      %v3516 = vpop.permute.xlu0 %3515
      %3517 = vrot.lane.b32.xlu0 %v3477, 8
      %v3518 = vpop.permute.xlu0 %3517
      %3527 = vrot.lane.b32.xlu0 %v3478, 16
      %v3528 = vpop.permute.xlu0 %3527
      %3529 = vrot.lane.b32.xlu0 %v3479, 16
      %v3530 = vpop.permute.xlu0 %3529
      %3531 = vrot.lane.b32.xlu0 %v3480, 16
      %v3532 = vpop.permute.xlu0 %3531
      %3533 = vrot.lane.b32.xlu0 %v3481, 16
      %v3534 = vpop.permute.xlu0 %3533
      %3543 = vrot.lane.b32.xlu0 %v3482, 24
      %v3544 = vpop.permute.xlu0 %3543
      %3545 = vrot.lane.b32.xlu0 %v3483, 24
      %v3546 = vpop.permute.xlu0 %3545
      %3547 = vrot.lane.b32.xlu0 %v3484, 24
      %v3548 = vpop.permute.xlu0 %3547
      %3549 = vrot.lane.b32.xlu0 %v3485, 24
      %v3550 = vpop.permute.xlu0 %3549
      %3559 = vrot.lane.b32.xlu0 %v3486, 32
      %v3560 = vpop.permute.xlu0 %3559
      %3561 = vrot.lane.b32.xlu0 %v3487, 32
      %v3562 = vpop.permute.xlu0 %3561
      %3563 = vrot.lane.b32.xlu0 %v3488, 32
      %v3564 = vpop.permute.xlu0 %3563
      %3565 = vrot.lane.b32.xlu0 %v3489, 32
      %v3566 = vpop.permute.xlu0 %3565
      %3575 = vrot.lane.b32.xlu0 %v3490, 40
      %v3576 = vpop.permute.xlu0 %3575
      %3577 = vrot.lane.b32.xlu0 %v3491, 40
      %v3578 = vpop.permute.xlu0 %3577
      %3579 = vrot.lane.b32.xlu0 %v3492, 40
      %v3580 = vpop.permute.xlu0 %3579
      %3581 = vrot.lane.b32.xlu0 %v3493, 40
      %v3582 = vpop.permute.xlu0 %3581
      %3591 = vrot.lane.b32.xlu0 %v3495, 48
      %v3592 = vpop.permute.xlu0 %3591
      %3593 = vrot.lane.b32.xlu0 %v3496, 48
      %v3594 = vpop.permute.xlu0 %3593
      %3595 = vrot.lane.b32.xlu0 %v3497, 48
      %v3596 = vpop.permute.xlu0 %3595
      %3597 = vrot.lane.b32.xlu0 %v3498, 48
      %v3598 = vpop.permute.xlu0 %3597
      %3607 = vrot.lane.b32.xlu0 %v3499, 56
      %v3608 = vpop.permute.xlu0 %3607
      %3609 = vrot.lane.b32.xlu0 %v3500, 56
      %v3610 = vpop.permute.xlu0 %3609
      %3611 = vrot.lane.b32.xlu0 %v3501, 56
      %v3612 = vpop.permute.xlu0 %3611
      %3613 = vrot.lane.b32.xlu0 %v3502, 56
      %v3614 = vpop.permute.xlu0 %3613
      %3623 = vrot.lane.b32.xlu0 %v3503, 64
      %v3624 = vpop.permute.xlu0 %3623
      %3625 = vrot.lane.b32.xlu0 %v3504, 64
      %v3626 = vpop.permute.xlu0 %3625
      %3627 = vrot.lane.b32.xlu0 %v3505, 64
      %v3628 = vpop.permute.xlu0 %3627
      %3629 = vrot.lane.b32.xlu0 %v3506, 64
      %v3630 = vpop.permute.xlu0 %3629
      %v3635 = vsel %vm1792, %v3470, %v3512
      %v3636 = vsel %vm1792, %v3471, %v3514
      %v3637 = vsel %vm1792, %v3472, %v3516
      %v3638 = vsel %vm1792, %v3473, %v3518
      %v3639 = vsel %vm1858, %v3635, %v3528
      %v3640 = vsel %vm1858, %v3636, %v3530
      %v3641 = vsel %vm1858, %v3637, %v3532
      %v3642 = vsel %vm1858, %v3638, %v3534
      %v3643 = vsel %vm1924, %v3639, %v3544
      %v3644 = vsel %vm1924, %v3640, %v3546
      %v3645 = vsel %vm1924, %v3641, %v3548
      %v3646 = vsel %vm1924, %v3642, %v3550
      %v3647 = vsel %vm1990, %v3643, %v3560
      %v3648 = vsel %vm1990, %v3644, %v3562
      %v3649 = vsel %vm1990, %v3645, %v3564
      %v3650 = vsel %vm1990, %v3646, %v3566
      %v3651 = vsel %vm2884, %v3647, %v3576
      %v3652 = vsel %vm2884, %v3648, %v3578
      %v3653 = vsel %vm2884, %v3649, %v3580
      %v3654 = vsel %vm2884, %v3650, %v3582
      %v3655 = vsel %vm2893, %v3651, %v3592
      %v3656 = vsel %vm2893, %v3652, %v3594
      %v3657 = vsel %vm2893, %v3653, %v3596
      %v3658 = vsel %vm2893, %v3654, %v3598
      %v3659 = vsel %vm2902, %v3655, %v3608
      %v3660 = vsel %vm2902, %v3656, %v3610
      %v3661 = vsel %vm2902, %v3657, %v3612
      %v3662 = vsel %vm2902, %v3658, %v3614
      %v3663 = vsel %vm2911, %v3659, %v3624
      %v3664 = vsel %vm2911, %v3660, %v3626
      %v3665 = vsel %vm2911, %v3661, %v3628
      %v3666 = vsel %vm2911, %v3662, %v3630
      %v3671 = vcombine.low %v3663, %v3664
      %v3672 = vcombine.low %v3665, %v3666
      %v3675 = vpack.c.bf16 %v3672, %v3671
      %v3676 = vld [vmem:[%s7] sm:$0xf]
      %v3677 = vld [vmem:[%s7 + $0x4] sm:$0xf]
      %v3678 = vld [vmem:[%s7 + $0x8] sm:$0xf]
      %v3679 = vld [vmem:[%s7 + $0xc] sm:$0xf]
      %v3680 = vld [vmem:[%s7 + $0x10] sm:$0xf]
      %v3681 = vld [vmem:[%s7 + $0x14] sm:$0xf]
      %v3682 = vld [vmem:[%s7 + $0x18] sm:$0xf]
      %v3683 = vld [vmem:[%s7 + $0x1c] sm:$0xf]
      %v3684 = vld [vmem:[%s7 + $0x20] sm:$0xf]
      %v3685 = vld [vmem:[#allocation6] sm:$0x1]
      %v3687 = vlaneseq
      %v3688 = vshrl.u32 %v3687, 7
      %v3689 = vsub.s32 0, %v3688
      %v3690 = vrot.slane %v3685, %v3689
      %v3701 = vunpack.c.l.b16 %v3676
      %v3702 = vunpack.c.l.b16 %v3677
      %v3703 = vunpack.c.l.b16 %v3678
      %v3704 = vunpack.c.l.b16 %v3679
      %v3705 = vunpack.c.l.b16 %v3680
      %v3706 = vunpack.c.l.b16 %v3681
      %v3707 = vunpack.c.l.b16 %v3682
      %v3708 = vunpack.c.l.b16 %v3683
      %v3709 = vunpack.c.l.b16 %v3684
      %v3710 = vpack.c.b16 %v3702, %v3701
      %v3711 = vpack.c.b16 %v3704, %v3703
      %v3712 = vpack.c.b16 %v3706, %v3705
      %v3713 = vpack.c.b16 %v3708, %v3707
      %v3714 = vpack.c.b16 %v3709, %v3709
      %v3720 = vsel %vm2967, %v3675, 0
      %v3723 = vsel %vm2980, %v3714, 0
      %3725 = vmatprep.subr.bf16.mxu0 0
      %3726 = vmatpush1.bf16.msra.mxu0 %v3710
      %3727 = vmatprep.subr.bf16.mxu0 0
      %3728 = vmatpush1.bf16.msra.mxu0 %v3711
      %3729 = vmatprep.subr.bf16.mxu0 0
      %3730 = vmatpush1.bf16.msra.mxu0 %v3712
      %3731 = vmatprep.subr.bf16.mxu0 0
      %3732 = vmatpush1.bf16.msra.mxu0 %v3713
      %3733 = vmatprep.subr.bf16.mxu0 0
      %3734 = vmatpush1.bf16.msra.mxu0 %v3723
      %3735 = vmatprep.subr.bf16.mxu0 0
      %3736 = vmatpush1.bf16.msra.mxu0 0
      %3737 = vmatprep.subr.bf16.mxu0 0
      %3738 = vmatpush1.bf16.msra.mxu0 0
      %3739 = vmatprep.subr.bf16.mxu0 0
      %3740 = vmatpush1.bf16.msra.mxu0 0
      %3741 = vmatprep.subr.bf16.mxu0 0
      %3742 = vmatpush1.bf16.msra.mxu0 0
      %3743 = vmatprep.subr.bf16.mxu0 0
      %3744 = vmatpush1.bf16.msra.mxu0 0
      %3745 = vmatprep.subr.bf16.mxu0 0
      %3746 = vmatpush1.bf16.msra.mxu0 0
      %3747 = vmatprep.subr.bf16.mxu0 0
      %3748 = vmatpush1.bf16.msra.mxu0 0
      %3749 = vmatprep.subr.bf16.mxu0 0
      %3750 = vmatpush1.bf16.msra.mxu0 0
      %3751 = vmatprep.subr.bf16.mxu0 0
      %3752 = vmatpush1.bf16.msra.mxu0 0
      %3753 = vmatprep.subr.bf16.mxu0 0
      %3754 = vmatpush1.bf16.msra.mxu0 0
      %3755 = vmatprep.subr.bf16.mxu0 0
      %3756 = vmatpush1.bf16.msra.mxu0 0
      %3757 = vmatprep.mubr.bf16.mxu0 0
      %3758 = vmatmul.mubr.bf16.gmra.mrb[0].mxu0 %v3720
      %v3759 = vpop.f32.mrb[0].mxu0
      %v3760 = vadd.f32 %v3690, %v3759
      %v3761 = vpop.f32.mrb[0].mxu0
      %v3762 = vpop.f32.mrb[0].mxu0
      %v3763 = vadd.f32 %v3690, %v3762
      %v3764 = vpop.f32.mrb[0].mxu0
      %3765 = vdwg.mxu0
      %vm3766 = vcmask 7168
      %3767 = vst.msk [vmem:[%s334] sm:$0xff] %vm3766, %v3760
      %3768 = vst.msk [vmem:[%s334 + $0x8] sm:$0xff] %vm3766, %v3763
      %p3769 = scmp.lt.s32.totalorder %s22, 1
      %s3770 = scalar_select %p3769, %s22, 1
      %s3771 = smul.addr %s3770, 2
      %s3772 = smul.addr %s3771, 8
      %s3773 = scalar_lea.vmem %s9, %s3772
      // Predicated region
      $region57: #{tpu_custom_call.1} parent=55 // pred_check
        %p3774 = pneg %p234
      $region58: #{tpu_custom_call.1} parent=55 // pred_check_branch
        %3776 = sbr.rel (%p3774) target = $region60
      $region59: #{tpu_custom_call.1} parent=55 // pred_region
        _
      $region60: #{tpu_custom_call.1} parent=55 // pred_fallthru
        _
    $region56: #{tpu_custom_call.1} parent=5 // pred_fallthru
      _
    %p3777 = scmp.le.s32.totalorder 2, %s17
    // Predicated region
    $region61: #{tpu_custom_call.1} parent=5 // pred_check
      %p3778 = pneg %p3777
    $region62: #{tpu_custom_call.1} parent=5 // pred_check_branch
      %3780 = sbr.rel (%p3778) target = $region64
    $region63: #{tpu_custom_call.1} parent=5 // pred_region
      %s3781 = ssub.s32 %s17, 2
      // Predicated region
      $region65: #{tpu_custom_call.1} parent=63 // pred_check
        %p3782 = pneg %p240
      $region66: #{tpu_custom_call.1} parent=63 // pred_check_branch
        %3784 = sbr.rel (%p3782) target = $region68
      $region67: #{tpu_custom_call.1} parent=63 // pred_region
        %p3785 = scmp.lt.s32.totalorder %s23, 1
        %s3786 = scalar_select %p3785, %s23, 1
        %s3787 = smul.addr %s3786, 2
        %s3788 = smul.addr %s3787, 8
        %s3789 = scalar_lea.vmem %s9, %s3788
      $region68: #{tpu_custom_call.1} parent=63 // pred_fallthru
        _
    $region64: #{tpu_custom_call.1} parent=5 // pred_fallthru
      _
  $region6: #{tpu_custom_call.1} parent=0 // loop_footer
    %s21 = sadd.s32 1, %s17
  $region7: #{tpu_custom_call.1} parent=0 // loop_footer_branch
    %16 = sbr.rel target = $region3
  $region8: #{tpu_custom_call.1} parent=0 // loop_exit
    _

</llo_original>
